<compile_context>
chip_gen: v6e
topology: v6e:2x2x1
jax: 0.10.0
libtpu: 0.0.40
codegen_flags: <defaults>
</compile_context>

<pallas_src>
import functools
import math

import jax
import jax.numpy as jnp
from jax.experimental import pallas as pl
from jax.experimental.pallas import tpu as pltpu

EPS = 1e-5   # nn.LayerNorm default eps
TAU = 1.0    # temperature of the syntactic-distance gate


# ---------------------------------------------------------------------------
# in-kernel helpers
# ---------------------------------------------------------------------------
def _layer_norm(x, w, b):
    mu = jnp.mean(x, axis=-1, keepdims=True)
    var = jnp.mean((x - mu) ** 2, axis=-1, keepdims=True)
    return (x - mu) * jax.lax.rsqrt(var + EPS) * w + b


# ---------------------------------------------------------------------------
# fused ResidualGatedAttentionBlock kernel
#   grid = (B, L // TQ); per batch element (qi == 0):
#     - syntactic distance d[t] = tanh(b + sum_k <w[k], x[t-(K-1)+k]>)  (causal)
#     - fused QKV projection, split per head into bf16 VMEM scratch
#   per query tile:
#     - gate[i,j] = softmax_j(-|d_i - d_j| / tau)
#     - gated multi-head attention + residual + GELU MLP
# ---------------------------------------------------------------------------
_KERNEL_CACHE = {}


def _make_block_kernel(num_heads, emit_aux):
    H = num_heads

    def kernel(*refs):
        (x_ref, cw_ref, cb_ref, ln1w_ref, ln1b_ref, wqkv_ref, bqkv_ref,
         wo3_ref, bo_ref, ln2w_ref, ln2b_ref, w1_ref, b1_ref, w2_ref,
         b2_ref) = refs[:15]
        if emit_aux:
            y_ref, attnw_ref, dist_ref = refs[15:18]
            q_s, k_s, v_s, dcol_s, drow_s = refs[18:]
        else:
            (y_ref,) = refs[15:16]
            q_s, k_s, v_s, dcol_s, drow_s = refs[16:]

        L, E = x_ref.shape
        TQ = y_ref.shape[0]
        Dh = E // H
        scale = 1.0 / math.sqrt(Dh)
        qi = pl.program_id(1)
        q0 = pl.multiple_of(qi * TQ, TQ)

        # ---- once per batch element: distances + fused QKV projection -------
        @pl.when(qi == 0)
        def _():
            x_full = x_ref[...].astype(jnp.float32)                        # (L, E)

            # causal conv over the sequence (zero left padding):
            #   d[t] = b + sum_k <w[k], x[t-(K-1)+k]>
            w_conv = cw_ref[...].astype(jnp.float32)                        # (K, E)
            K = w_conv.shape[0]
            Yt = jax.lax.dot_general(w_conv, x_full, (((1,), (1,)), ((), ())),
                                     preferred_element_type=jnp.float32)   # (K, L)
            d_row = Yt[K - 1:K, :]                                          # tap shift 0
            for k in range(K - 1):
                s = (K - 1) - k
                d_row = d_row + jnp.concatenate(
                    [jnp.zeros((1, s), jnp.float32), Yt[k:k + 1, :L - s]], axis=1)
            dist_row = jnp.tanh(d_row + cb_ref[0])                          # (1, L)
            drow_s[...] = dist_row
            # (1,L) -> (L,1) "transpose" via diagonal selection.  Kept: it only
            # costs O(L^2) VPU work once per (batch, layer), which is ~E x cheaper
            # than the attention matmuls, and it lowers unconditionally (no
            # degenerate 2-D transpose / unaligned sublane concat needed).
            rows = jax.lax.broadcasted_iota(jnp.int32, (L, L), 0)
            cols = jax.lax.broadcasted_iota(jnp.int32, (L, L), 1)
            dcol_s[...] = jnp.sum(jnp.where(rows == cols, dist_row, 0.0),
                                  axis=1, keepdims=True)                    # (L, 1)

            # fused QKV projection (bf16 MXU, f32 accumulation), per-head split.
            xn = _layer_norm(x_full, ln1w_ref[...], ln1b_ref[...])
            qkv = jnp.dot(xn.astype(jnp.bfloat16), wqkv_ref[...],
                          preferred_element_type=jnp.float32) + bqkv_ref[...]   # (L, 3E)
            for h in range(H):
                q_s[h] = (qkv[:, h * Dh:(h + 1) * Dh] * scale).astype(jnp.bfloat16)
                k_s[h] = qkv[:, E + h * Dh:E + (h + 1) * Dh].astype(jnp.bfloat16)
                v_s[h] = qkv[:, 2 * E + h * Dh:2 * E + (h + 1) * Dh].astype(jnp.bfloat16)

        # ---- per query tile --------------------------------------------------
        x_q = x_ref[pl.ds(q0, TQ), :].astype(jnp.float32)                   # (TQ, E)

        # distance-similarity gate rows (row-max logit is 0, no max-subtraction)
        d_q = dcol_s[pl.ds(q0, TQ), :]                                      # (TQ, 1)
        ge = jnp.exp(-jnp.abs(d_q - drow_s[...]) * (1.0 / TAU))             # (TQ, L)
        gate = ge * pl.reciprocal(jnp.sum(ge, axis=-1, keepdims=True), approx=True)

        # head-batched attention (scale already folded into q_s)
        qh = q_s[:, pl.ds(q0, TQ), :]                                       # (H, TQ, Dh)
        scores = jnp.einsum('hqd,hkd->hqk', qh, k_s[...],
                            preferred_element_type=jnp.float32)             # (H, TQ, L)
        m = jnp.max(scores, axis=-1, keepdims=True)
        e = jnp.exp(scores - m)
        p = e * pl.reciprocal(jnp.sum(e, axis=-1, keepdims=True), approx=True)
        p = p * gate[None, :, :]              # Tree-Transformer-style post-softmax gate
        ctx = jnp.einsum('hqk,hkd->hqd', p.astype(jnp.bfloat16), v_s[...],
                         preferred_element_type=jnp.float32)                # (H, TQ, Dh)

        # output projection: sum_h ctx[h] @ Wo[h*Dh:(h+1)*Dh, :]
        attn = jnp.zeros((TQ, E), jnp.float32)
        for h in range(H):
            attn = attn + jnp.dot(ctx[h].astype(jnp.bfloat16), wo3_ref[h],
                                  preferred_element_type=jnp.float32)
        xr = x_q + attn + bo_ref[...]

        # MLP (GELU uses tanh approximation; PyTorch default GELU is erf — tiny delta)
        xn2 = _layer_norm(xr, ln2w_ref[...], ln2b_ref[...])
        h1 = jax.nn.gelu(jnp.dot(xn2.astype(jnp.bfloat16), w1_ref[...],
                                 preferred_element_type=jnp.float32) + b1_ref[...],
                         approximate=True)
        y = xr + jnp.dot(h1.astype(jnp.bfloat16), w2_ref[...],
                         preferred_element_type=jnp.float32) + b2_ref[...]
        y_ref[...] = y.astype(y_ref.dtype)

        if emit_aux:
            attnw_ref[...] = jnp.mean(p, axis=0).astype(attnw_ref.dtype)    # head average

            @pl.when(qi == 0)
            def _():
                # same value for every query tile; output block stays resident
                # across the qi axis, so write it once.
                dist_ref[...] = drow_s[...]

    return kernel


def _get_kernel(num_heads, emit_aux):
    key = (num_heads, emit_aux)
    if key not in _KERNEL_CACHE:
        _KERNEL_CACHE[key] = _make_block_kernel(num_heads, emit_aux)
    return _KERNEL_CACHE[key]


def _pick_tq(L):
    if L % 8 != 0:
        return L
    for cand in (256, 128, 64, 32, 16, 8):
        if cand <= L and L % cand == 0:
            return cand
    return L


def gated_attention_block(x, blk, num_heads, *, tq=None, emit_aux=False):
    B, L, E = x.shape
    H = num_heads
    Dh = E // H
    if tq is None:
        tq = _pick_tq(L)
    assert L % tq == 0 and (tq % 8 == 0 or tq == L)
    nq = L // tq

    bf16 = jnp.bfloat16
    weights = [blk["conv_w"],
               blk["conv_b"].reshape((1,)),                 # scalar bias -> SMEM
               blk["ln1_w"], blk["ln1_b"],
               blk["wqkv"].astype(bf16), blk["bqkv"],
               blk["wo"].reshape(H, Dh, E).astype(bf16), blk["bo"],
               blk["ln2_w"], blk["ln2_b"],
               blk["w1"].astype(bf16), blk["b1"],
               blk["w2"].astype(bf16), blk["b2"]]

    def full_spec(arr):
        nd = arr.ndim
        return pl.BlockSpec(arr.shape, lambda b, q, _nd=nd: (0,) * _nd)

    in_specs = [pl.BlockSpec((None, L, E), lambda b, q: (b, 0, 0))]
    for i, w in enumerate(weights):
        if i == 1:
            in_specs.append(pl.BlockSpec(memory_space=pltpu.MemorySpace.SMEM))
        else:
            in_specs.append(full_spec(w))

    y_shape = jax.ShapeDtypeStruct((B, L, E), x.dtype)
    y_spec = pl.BlockSpec((None, tq, E), lambda b, q: (b, q, 0))
    if emit_aux:
        out_shape = (y_shape,
                     jax.ShapeDtypeStruct((B, L, L), jnp.float32),
                     jax.ShapeDtypeStruct((B, 1, L), jnp.float32))   # lane-dense dist
        out_specs = (y_spec,
                     pl.BlockSpec((None, tq, L), lambda b, q: (b, q, 0)),
                     pl.BlockSpec((None, 1, L), lambda b, q: (b, 0, 0)))
    else:
        out_shape = y_shape
        out_specs = y_spec

    scratch_shapes = [pltpu.VMEM((H, L, Dh), jnp.bfloat16),   # Q (pre-scaled)
                      pltpu.VMEM((H, L, Dh), jnp.bfloat16),   # K
                      pltpu.VMEM((H, L, Dh), jnp.bfloat16),   # V
                      pltpu.VMEM((L, 1), jnp.float32),        # distance (column form)
                      pltpu.VMEM((1, L), jnp.float32)]        # distance (row form)

    return pl.pallas_call(
        _get_kernel(num_heads, emit_aux),
        out_shape=out_shape,
        grid=(B, nq),
        in_specs=in_specs,
        out_specs=out_specs,
        scratch_shapes=scratch_shapes,
        compiler_params=pltpu.CompilerParams(
            dimension_semantics=("parallel", "arbitrary"),
            # above the 32 MiB default, safely under every chip's physical VMEM;
            # raise further on v5e/v6e for large E/L configurations.
            vmem_limit_bytes=48 * 1024 * 1024),
    )(x, *weights)


# ---------------------------------------------------------------------------
# SyntacticTransformer forward
# ---------------------------------------------------------------------------
def syntactic_transformer_forward(x, params, num_heads, *,
                                  attention_mask=None, attention_gate=None,
                                  batch_first=True, tq=None):
    if attention_mask is not None:
        # TODO(synk): additive attention mask is not wired into the fused Pallas kernel.
        raise NotImplementedError("attention_mask not supported in this Pallas port")
    if attention_gate is not None:
        # TODO(synk): external layer-0 attention_gate override is not wired into the fused kernel.
        raise NotImplementedError("attention_gate not supported in this Pallas port")

    if not batch_first:
        x = jnp.transpose(x, (1, 0, 2))

    # The reference assigns the induction head's output to a misspelled local
    # (`atention_gate`), so it never reaches the blocks; its distance output is
    # immediately overwritten by the blocks' distances.  Evaluating it would be
    # pure dead compute, so it is skipped.

    n_layers = len(params["blocks"])
    attn_weight = None
    dist_row = None
    for i, blk in enumerate(params["blocks"]):
        if i == n_layers - 1:
            x, attn_weight, dist_row = gated_attention_block(
                x, blk, num_heads, tq=tq, emit_aux=True)
        else:
            x = gated_attention_block(x, blk, num_heads, tq=tq, emit_aux=False)

    distance = jnp.transpose(dist_row, (0, 2, 1))   # (B, L, 1), reference layout

    if not batch_first:
        x = jnp.transpose(x, (1, 0, 2))
    return x, attn_weight, distance


# ---------------------------------------------------------------------------
# deterministic synthetic parameters
# ---------------------------------------------------------------------------
def init_params(key, embed_dim, num_heads, num_layers, kernel_size=3, mlp_ratio=4):
    E, K = embed_dim, kernel_size

    def normal(k, shape, scale=0.02):
        return scale * jax.random.normal(k, shape, jnp.float32)

    keys = jax.random.split(key, num_layers + 1)
    # kept for structural parity with the module; unused by the forward (see note).
    induction = {"conv_w": normal(keys[0], (K, E)),
                 "conv_b": jnp.zeros((1,), jnp.float32)}

    blocks = []
    for li in range(num_layers):
        ks = jax.random.split(keys[li + 1], 7)
        blocks.append({
            "conv_w": normal(ks[0], (K, E)),
            "conv_b": jnp.zeros((1,), jnp.float32),
            "ln1_w": jnp.ones((1, E), jnp.float32),
            "ln1_b": jnp.zeros((1, E), jnp.float32),
            # fused QKV == concat([wq, wk, wv], axis=1)
            "wqkv": normal(ks[1], (E, 3 * E)),
            "bqkv": jnp.zeros((1, 3 * E), jnp.float32),
            "wo": normal(ks[4], (E, E)), "bo": jnp.zeros((1, E), jnp.float32),
            "ln2_w": jnp.ones((1, E), jnp.float32),
            "ln2_b": jnp.zeros((1, E), jnp.float32),
            "w1": normal(ks[5], (E, mlp_ratio * E)),
            "b1": jnp.zeros((1, mlp_ratio * E), jnp.float32),
            "w2": normal(ks[6], (mlp_ratio * E, E)),
            "b2": jnp.zeros((1, E), jnp.float32),
        })
    return {"induction": induction, "blocks": blocks}


if __name__ == "__main__":
    B, L, E, H, NUM_LAYERS = 2, 16, 32, 4, 2

    key = jax.random.PRNGKey(0)
    kx, kp = jax.random.split(key)
    x = jax.random.normal(kx, (B, L, E), jnp.float32)
    params = init_params(kp, E, H, NUM_LAYERS)

    # jit the full forward so the wrapper-side weight casts/reshapes fuse with the
    # pallas_calls instead of running as separate per-layer XLA ops each call.
    forward = jax.jit(functools.partial(syntactic_transformer_forward,
                                        num_heads=H, tq=8))
    y, attn_w, dist = forward(x, params)
    jax.block_until_ready((y, attn_w, dist))

    assert y.shape == (B, L, E)
    assert attn_w.shape == (B, L, L)
    assert dist.shape == (B, L, 1)
    assert bool(jnp.all(jnp.isfinite(y)))
    assert bool(jnp.all(jnp.isfinite(attn_w)))
    assert bool(jnp.all(jnp.isfinite(dist)))
    print("KERNEL_OK")
</pallas_src>

<mosaic_0001>
module attributes {stable_mosaic.version = 11 : i64} {
  func.func @kernel(%arg0: i32, %arg1: i32, %arg2: memref<1x16x32xf32, #tpu.memory_space<vmem>>, %arg3: memref<3x32xf32, #tpu.memory_space<vmem>>, %arg4: memref<1xf32, #tpu.memory_space<smem>>, %arg5: memref<1x32xf32, #tpu.memory_space<vmem>>, %arg6: memref<1x32xf32, #tpu.memory_space<vmem>>, %arg7: memref<32x96xbf16, #tpu.memory_space<vmem>>, %arg8: memref<1x96xf32, #tpu.memory_space<vmem>>, %arg9: memref<4x8x32xbf16, #tpu.memory_space<vmem>>, %arg10: memref<1x32xf32, #tpu.memory_space<vmem>>, %arg11: memref<1x32xf32, #tpu.memory_space<vmem>>, %arg12: memref<1x32xf32, #tpu.memory_space<vmem>>, %arg13: memref<32x128xbf16, #tpu.memory_space<vmem>>, %arg14: memref<1x128xf32, #tpu.memory_space<vmem>>, %arg15: memref<128x32xbf16, #tpu.memory_space<vmem>>, %arg16: memref<1x32xf32, #tpu.memory_space<vmem>>, %arg17: memref<1x8x32xf32, #tpu.memory_space<vmem>>, %arg18: memref<4x16x8xbf16, #tpu.memory_space<vmem>>, %arg19: memref<4x16x8xbf16, #tpu.memory_space<vmem>>, %arg20: memref<4x16x8xbf16, #tpu.memory_space<vmem>>, %arg21: memref<16x1xf32, #tpu.memory_space<vmem>>, %arg22: memref<1x16xf32, #tpu.memory_space<vmem>>) attributes {dimension_semantics = [#tpu.dimension_semantics<parallel>, #tpu.dimension_semantics<arbitrary>], iteration_bounds = array<i64: 2, 2>, scalar_prefetch = 0 : i64, scratch_operands = 5 : i64, tpu.core_type = #tpu.core_type<tc>, window_params = [{transform_indices = @transform_0, window_bounds = array<i64: 1, 16, 32>}, {pipeline_mode = #tpu.pipeline_mode<synchronous>, transform_indices = @transform_1, window_bounds = array<i64: 3, 32>}, {transform_indices = @transform_2, window_bounds = array<i64: 1>}, {pipeline_mode = #tpu.pipeline_mode<synchronous>, transform_indices = @transform_3, window_bounds = array<i64: 1, 32>}, {pipeline_mode = #tpu.pipeline_mode<synchronous>, transform_indices = @transform_4, window_bounds = array<i64: 1, 32>}, {pipeline_mode = #tpu.pipeline_mode<synchronous>, transform_indices = @transform_5, window_bounds = array<i64: 32, 96>}, {pipeline_mode = #tpu.pipeline_mode<synchronous>, transform_indices = @transform_6, window_bounds = array<i64: 1, 96>}, {pipeline_mode = #tpu.pipeline_mode<synchronous>, transform_indices = @transform_7, window_bounds = array<i64: 4, 8, 32>}, {pipeline_mode = #tpu.pipeline_mode<synchronous>, transform_indices = @transform_8, window_bounds = array<i64: 1, 32>}, {pipeline_mode = #tpu.pipeline_mode<synchronous>, transform_indices = @transform_9, window_bounds = array<i64: 1, 32>}, {pipeline_mode = #tpu.pipeline_mode<synchronous>, transform_indices = @transform_10, window_bounds = array<i64: 1, 32>}, {pipeline_mode = #tpu.pipeline_mode<synchronous>, transform_indices = @transform_11, window_bounds = array<i64: 32, 128>}, {pipeline_mode = #tpu.pipeline_mode<synchronous>, transform_indices = @transform_12, window_bounds = array<i64: 1, 128>}, {pipeline_mode = #tpu.pipeline_mode<synchronous>, transform_indices = @transform_13, window_bounds = array<i64: 128, 32>}, {pipeline_mode = #tpu.pipeline_mode<synchronous>, transform_indices = @transform_14, window_bounds = array<i64: 1, 32>}, {transform_indices = @transform_15, window_bounds = array<i64: 1, 8, 32>}]} {
    %c8_i32 = arith.constant 8 : i32
    %0 = arith.muli %arg1, %c8_i32 : i32
    %1 = tpu.assume_multiple %0, 8 : i32
    %c0_i32 = arith.constant 0 : i32
    %2 = arith.cmpi eq, %arg1, %c0_i32 : i32
    %3 = arith.extui %2 : i1 to i32
    %c0_i32_0 = arith.constant 0 : i32
    %4 = arith.cmpi ne, %3, %c0_i32_0 : i32
    scf.if %4 {
      %c0_61 = arith.constant 0 : index
      %c0_62 = arith.constant 0 : index
      %c0_63 = arith.constant 0 : index
      %131 = vector.load %arg2[%c0_61, %c0_62, %c0_63] : memref<1x16x32xf32, #tpu.memory_space<vmem>>, vector<1x16x32xf32>
      %132 = vector.shape_cast %131 : vector<1x16x32xf32> to vector<16x32xf32>
      %c0_64 = arith.constant 0 : index
      %c0_65 = arith.constant 0 : index
      %133 = vector.load %arg3[%c0_64, %c0_65] : memref<3x32xf32, #tpu.memory_space<vmem>>, vector<3x32xf32>
      %cst_66 = arith.constant dense<0.000000e+00> : vector<3x16xf32>
      %134 = tpu.matmul %133, %132, %cst_66 {dimension_numbers = #tpu.dot_dimension_numbers<[1], [1], [0], [0], [0, 0, 1, 0], [], []>} : vector<3x32xf32>, vector<16x32xf32>, vector<3x16xf32> -> vector<3x16xf32>
      %135 = vector.extract_strided_slice %134 {offsets = [2, 0], sizes = [1, 16], strides = [1, 1]} : vector<3x16xf32> to vector<1x16xf32>
      %cst_67 = arith.constant 0.000000e+00 : f32
      %136 = vector.broadcast %cst_67 : f32 to vector<1x2xf32>
      %137 = vector.extract_strided_slice %134 {offsets = [0, 0], sizes = [1, 14], strides = [1, 1]} : vector<3x16xf32> to vector<1x14xf32>
      %138 = tpu.concatenate %136, %137 in 1 : vector<1x2xf32>, vector<1x14xf32> -> vector<1x16xf32>
      %139 = arith.addf %135, %138 : vector<1x16xf32>
      %cst_68 = arith.constant 0.000000e+00 : f32
      %140 = vector.broadcast %cst_68 : f32 to vector<1x1xf32>
      %141 = vector.extract_strided_slice %134 {offsets = [1, 0], sizes = [1, 15], strides = [1, 1]} : vector<3x16xf32> to vector<1x15xf32>
      %142 = tpu.concatenate %140, %141 in 1 : vector<1x1xf32>, vector<1x15xf32> -> vector<1x16xf32>
      %143 = arith.addf %139, %142 : vector<1x16xf32>
      %c0_69 = arith.constant 0 : index
      %144 = memref.load %arg4[%c0_69] : memref<1xf32, #tpu.memory_space<smem>>
      %145 = vector.broadcast %144 : f32 to vector<1x16xf32>
      %146 = arith.addf %143, %145 : vector<1x16xf32>
      %147 = math.tanh %146 : vector<1x16xf32>
      %c0_70 = arith.constant 0 : index
      %c0_71 = arith.constant 0 : index
      %148 = vector.load %arg22[%c0_70, %c0_71] : memref<1x16xf32, #tpu.memory_space<vmem>>, vector<1x16xf32>
      tpu.vector_store %arg22[%c0_70, %c0_71], %147 {strides = array<i32>} : memref<1x16xf32, #tpu.memory_space<vmem>>, vector<1x16xf32>,
      %149 = tpu.iota {dimensions = array<i32: 0>} : vector<16x16xi32>
      %150 = tpu.iota {dimensions = array<i32: 1>} : vector<16x16xi32>
      %151 = arith.cmpi eq, %149, %150 : vector<16x16xi32>
      %cst_72 = arith.constant 0.000000e+00 : f32
      %152 = vector.shape_cast %147 : vector<1x16xf32> to vector<1x16xf32>
      %153 = vector.broadcast %152 : vector<1x16xf32> to vector<16x16xf32>
      %154 = vector.broadcast %cst_72 : f32 to vector<16x16xf32>
      %155 = arith.select %151, %153, %154 : vector<16x16xi1>, vector<16x16xf32>
      %cst_73 = arith.constant dense<0.000000e+00> : vector<16xf32>
      %156 = vector.multi_reduction <add>, %155, %cst_73 [1] : vector<16x16xf32> to vector<16xf32>
      %157 = vector.shape_cast %156 : vector<16xf32> to vector<16x1xf32>
      %c0_74 = arith.constant 0 : index
      %c0_75 = arith.constant 0 : index
      %158 = vector.load %arg21[%c0_74, %c0_75] : memref<16x1xf32, #tpu.memory_space<vmem>>, vector<16x1xf32>
      tpu.vector_store %arg21[%c0_74, %c0_75], %157 {strides = array<i32>} : memref<16x1xf32, #tpu.memory_space<vmem>>, vector<16x1xf32>,
      %c0_76 = arith.constant 0 : index
      %c0_77 = arith.constant 0 : index
      %159 = vector.load %arg5[%c0_76, %c0_77] : memref<1x32xf32, #tpu.memory_space<vmem>>, vector<1x32xf32>
      %c0_78 = arith.constant 0 : index
      %c0_79 = arith.constant 0 : index
      %160 = vector.load %arg6[%c0_78, %c0_79] : memref<1x32xf32, #tpu.memory_space<vmem>>, vector<1x32xf32>
      %cst_80 = arith.constant dense<0.000000e+00> : vector<16xf32>
      %161 = vector.multi_reduction <add>, %132, %cst_80 [1] : vector<16x32xf32> to vector<16xf32>
      %162 = vector.shape_cast %161 : vector<16xf32> to vector<16x1xf32>
      %cst_81 = arith.constant 3.200000e+01 : f32
      %163 = vector.broadcast %cst_81 : f32 to vector<16x1xf32>
      %164 = arith.divf %162, %163 : vector<16x1xf32>
      %165 = vector.broadcast %164 : vector<16x1xf32> to vector<16x32xf32>
      %166 = arith.subf %132, %165 : vector<16x32xf32>
      %167 = arith.mulf %166, %166 : vector<16x32xf32>
      %cst_82 = arith.constant dense<0.000000e+00> : vector<16xf32>
      %168 = vector.multi_reduction <add>, %167, %cst_82 [1] : vector<16x32xf32> to vector<16xf32>
      %169 = vector.shape_cast %168 : vector<16xf32> to vector<16x1xf32>
      %cst_83 = arith.constant 3.200000e+01 : f32
      %170 = vector.broadcast %cst_83 : f32 to vector<16x1xf32>
      %171 = arith.divf %169, %170 : vector<16x1xf32>
      %172 = vector.broadcast %164 : vector<16x1xf32> to vector<16x32xf32>
      %173 = arith.subf %132, %172 : vector<16x32xf32>
      %cst_84 = arith.constant 9.99999974E-6 : f32
      %174 = vector.broadcast %cst_84 : f32 to vector<16x1xf32>
      %175 = arith.addf %171, %174 : vector<16x1xf32>
      %176 = math.rsqrt %175 : vector<16x1xf32>
      %177 = vector.broadcast %176 : vector<16x1xf32> to vector<16x32xf32>
      %178 = arith.mulf %173, %177 : vector<16x32xf32>
      %179 = vector.broadcast %159 : vector<1x32xf32> to vector<16x32xf32>
      %180 = arith.mulf %178, %179 : vector<16x32xf32>
      %181 = vector.broadcast %160 : vector<1x32xf32> to vector<16x32xf32>
      %182 = arith.addf %180, %181 : vector<16x32xf32>
      %183 = arith.truncf %182 : vector<16x32xf32> to vector<16x32xbf16>
      %c0_85 = arith.constant 0 : index
      %c0_86 = arith.constant 0 : index
      %184 = vector.load %arg7[%c0_85, %c0_86] : memref<32x96xbf16, #tpu.memory_space<vmem>>, vector<32x96xbf16>
      %cst_87 = arith.constant dense<0.000000e+00> : vector<16x96xf32>
      %185 = tpu.matmul %183, %184, %cst_87 {dimension_numbers = #tpu.dot_dimension_numbers<[1], [0], [0], [1], [0, 0, 1, 1], [], []>} : vector<16x32xbf16>, vector<32x96xbf16>, vector<16x96xf32> -> vector<16x96xf32>
      %c0_88 = arith.constant 0 : index
      %c0_89 = arith.constant 0 : index
      %186 = vector.load %arg8[%c0_88, %c0_89] : memref<1x96xf32, #tpu.memory_space<vmem>>, vector<1x96xf32>
      %187 = vector.broadcast %186 : vector<1x96xf32> to vector<16x96xf32>
      %188 = arith.addf %185, %187 : vector<16x96xf32>
      %189 = vector.extract_strided_slice %188 {offsets = [0, 0], sizes = [16, 8], strides = [1, 1]} : vector<16x96xf32> to vector<16x8xf32>
      %cst_90 = arith.constant 0.353553385 : f32
      %190 = vector.broadcast %cst_90 : f32 to vector<16x8xf32>
      %191 = arith.mulf %189, %190 : vector<16x8xf32>
      %192 = arith.truncf %191 : vector<16x8xf32> to vector<16x8xbf16>
      %c0_91 = arith.constant 0 : index
      %c0_92 = arith.constant 0 : index
      %c0_93 = arith.constant 0 : index
      %193 = vector.load %arg18[%c0_91, %c0_92, %c0_93] : memref<4x16x8xbf16, #tpu.memory_space<vmem>>, vector<1x16x8xbf16>
      %194 = vector.shape_cast %193 : vector<1x16x8xbf16> to vector<16x8xbf16>
      %195 = vector.shape_cast %192 : vector<16x8xbf16> to vector<1x16x8xbf16>
      tpu.vector_store %arg18[%c0_91, %c0_92, %c0_93], %195 {strides = array<i32>} : memref<4x16x8xbf16, #tpu.memory_space<vmem>>, vector<1x16x8xbf16>,
      %196 = vector.extract_strided_slice %188 {offsets = [0, 32], sizes = [16, 8], strides = [1, 1]} : vector<16x96xf32> to vector<16x8xf32>
      %197 = arith.truncf %196 : vector<16x8xf32> to vector<16x8xbf16>
      %c0_94 = arith.constant 0 : index
      %c0_95 = arith.constant 0 : index
      %c0_96 = arith.constant 0 : index
      %198 = vector.load %arg19[%c0_94, %c0_95, %c0_96] : memref<4x16x8xbf16, #tpu.memory_space<vmem>>, vector<1x16x8xbf16>
      %199 = vector.shape_cast %198 : vector<1x16x8xbf16> to vector<16x8xbf16>
      %200 = vector.shape_cast %197 : vector<16x8xbf16> to vector<1x16x8xbf16>
      tpu.vector_store %arg19[%c0_94, %c0_95, %c0_96], %200 {strides = array<i32>} : memref<4x16x8xbf16, #tpu.memory_space<vmem>>, vector<1x16x8xbf16>,
      %201 = vector.extract_strided_slice %188 {offsets = [0, 64], sizes = [16, 8], strides = [1, 1]} : vector<16x96xf32> to vector<16x8xf32>
      %202 = arith.truncf %201 : vector<16x8xf32> to vector<16x8xbf16>
      %c0_97 = arith.constant 0 : index
      %c0_98 = arith.constant 0 : index
      %c0_99 = arith.constant 0 : index
      %203 = vector.load %arg20[%c0_97, %c0_98, %c0_99] : memref<4x16x8xbf16, #tpu.memory_space<vmem>>, vector<1x16x8xbf16>
      %204 = vector.shape_cast %203 : vector<1x16x8xbf16> to vector<16x8xbf16>
      %205 = vector.shape_cast %202 : vector<16x8xbf16> to vector<1x16x8xbf16>
      tpu.vector_store %arg20[%c0_97, %c0_98, %c0_99], %205 {strides = array<i32>} : memref<4x16x8xbf16, #tpu.memory_space<vmem>>, vector<1x16x8xbf16>,
      %206 = vector.extract_strided_slice %188 {offsets = [0, 8], sizes = [16, 8], strides = [1, 1]} : vector<16x96xf32> to vector<16x8xf32>
      %cst_100 = arith.constant 0.353553385 : f32
      %207 = vector.broadcast %cst_100 : f32 to vector<16x8xf32>
      %208 = arith.mulf %206, %207 : vector<16x8xf32>
      %209 = arith.truncf %208 : vector<16x8xf32> to vector<16x8xbf16>
      %c1_101 = arith.constant 1 : index
      %c0_102 = arith.constant 0 : index
      %c0_103 = arith.constant 0 : index
      %210 = vector.load %arg18[%c1_101, %c0_102, %c0_103] : memref<4x16x8xbf16, #tpu.memory_space<vmem>>, vector<1x16x8xbf16>
      %211 = vector.shape_cast %210 : vector<1x16x8xbf16> to vector<16x8xbf16>
      %212 = vector.shape_cast %209 : vector<16x8xbf16> to vector<1x16x8xbf16>
      tpu.vector_store %arg18[%c1_101, %c0_102, %c0_103], %212 {strides = array<i32>} : memref<4x16x8xbf16, #tpu.memory_space<vmem>>, vector<1x16x8xbf16>,
      %213 = vector.extract_strided_slice %188 {offsets = [0, 40], sizes = [16, 8], strides = [1, 1]} : vector<16x96xf32> to vector<16x8xf32>
      %214 = arith.truncf %213 : vector<16x8xf32> to vector<16x8xbf16>
      %c1_104 = arith.constant 1 : index
      %c0_105 = arith.constant 0 : index
      %c0_106 = arith.constant 0 : index
      %215 = vector.load %arg19[%c1_104, %c0_105, %c0_106] : memref<4x16x8xbf16, #tpu.memory_space<vmem>>, vector<1x16x8xbf16>
      %216 = vector.shape_cast %215 : vector<1x16x8xbf16> to vector<16x8xbf16>
      %217 = vector.shape_cast %214 : vector<16x8xbf16> to vector<1x16x8xbf16>
      tpu.vector_store %arg19[%c1_104, %c0_105, %c0_106], %217 {strides = array<i32>} : memref<4x16x8xbf16, #tpu.memory_space<vmem>>, vector<1x16x8xbf16>,
      %218 = vector.extract_strided_slice %188 {offsets = [0, 72], sizes = [16, 8], strides = [1, 1]} : vector<16x96xf32> to vector<16x8xf32>
      %219 = arith.truncf %218 : vector<16x8xf32> to vector<16x8xbf16>
      %c1_107 = arith.constant 1 : index
      %c0_108 = arith.constant 0 : index
      %c0_109 = arith.constant 0 : index
      %220 = vector.load %arg20[%c1_107, %c0_108, %c0_109] : memref<4x16x8xbf16, #tpu.memory_space<vmem>>, vector<1x16x8xbf16>
      %221 = vector.shape_cast %220 : vector<1x16x8xbf16> to vector<16x8xbf16>
      %222 = vector.shape_cast %219 : vector<16x8xbf16> to vector<1x16x8xbf16>
      tpu.vector_store %arg20[%c1_107, %c0_108, %c0_109], %222 {strides = array<i32>} : memref<4x16x8xbf16, #tpu.memory_space<vmem>>, vector<1x16x8xbf16>,
      %223 = vector.extract_strided_slice %188 {offsets = [0, 16], sizes = [16, 8], strides = [1, 1]} : vector<16x96xf32> to vector<16x8xf32>
      %cst_110 = arith.constant 0.353553385 : f32
      %224 = vector.broadcast %cst_110 : f32 to vector<16x8xf32>
      %225 = arith.mulf %223, %224 : vector<16x8xf32>
      %226 = arith.truncf %225 : vector<16x8xf32> to vector<16x8xbf16>
      %c2_111 = arith.constant 2 : index
      %c0_112 = arith.constant 0 : index
      %c0_113 = arith.constant 0 : index
      %227 = vector.load %arg18[%c2_111, %c0_112, %c0_113] : memref<4x16x8xbf16, #tpu.memory_space<vmem>>, vector<1x16x8xbf16>
      %228 = vector.shape_cast %227 : vector<1x16x8xbf16> to vector<16x8xbf16>
      %229 = vector.shape_cast %226 : vector<16x8xbf16> to vector<1x16x8xbf16>
      tpu.vector_store %arg18[%c2_111, %c0_112, %c0_113], %229 {strides = array<i32>} : memref<4x16x8xbf16, #tpu.memory_space<vmem>>, vector<1x16x8xbf16>,
      %230 = vector.extract_strided_slice %188 {offsets = [0, 48], sizes = [16, 8], strides = [1, 1]} : vector<16x96xf32> to vector<16x8xf32>
      %231 = arith.truncf %230 : vector<16x8xf32> to vector<16x8xbf16>
      %c2_114 = arith.constant 2 : index
      %c0_115 = arith.constant 0 : index
      %c0_116 = arith.constant 0 : index
      %232 = vector.load %arg19[%c2_114, %c0_115, %c0_116] : memref<4x16x8xbf16, #tpu.memory_space<vmem>>, vector<1x16x8xbf16>
      %233 = vector.shape_cast %232 : vector<1x16x8xbf16> to vector<16x8xbf16>
      %234 = vector.shape_cast %231 : vector<16x8xbf16> to vector<1x16x8xbf16>
      tpu.vector_store %arg19[%c2_114, %c0_115, %c0_116], %234 {strides = array<i32>} : memref<4x16x8xbf16, #tpu.memory_space<vmem>>, vector<1x16x8xbf16>,
      %235 = vector.extract_strided_slice %188 {offsets = [0, 80], sizes = [16, 8], strides = [1, 1]} : vector<16x96xf32> to vector<16x8xf32>
      %236 = arith.truncf %235 : vector<16x8xf32> to vector<16x8xbf16>
      %c2_117 = arith.constant 2 : index
      %c0_118 = arith.constant 0 : index
      %c0_119 = arith.constant 0 : index
      %237 = vector.load %arg20[%c2_117, %c0_118, %c0_119] : memref<4x16x8xbf16, #tpu.memory_space<vmem>>, vector<1x16x8xbf16>
      %238 = vector.shape_cast %237 : vector<1x16x8xbf16> to vector<16x8xbf16>
      %239 = vector.shape_cast %236 : vector<16x8xbf16> to vector<1x16x8xbf16>
      tpu.vector_store %arg20[%c2_117, %c0_118, %c0_119], %239 {strides = array<i32>} : memref<4x16x8xbf16, #tpu.memory_space<vmem>>, vector<1x16x8xbf16>,
      %240 = vector.extract_strided_slice %188 {offsets = [0, 24], sizes = [16, 8], strides = [1, 1]} : vector<16x96xf32> to vector<16x8xf32>
      %cst_120 = arith.constant 0.353553385 : f32
      %241 = vector.broadcast %cst_120 : f32 to vector<16x8xf32>
      %242 = arith.mulf %240, %241 : vector<16x8xf32>
      %243 = arith.truncf %242 : vector<16x8xf32> to vector<16x8xbf16>
      %c3_121 = arith.constant 3 : index
      %c0_122 = arith.constant 0 : index
      %c0_123 = arith.constant 0 : index
      %244 = vector.load %arg18[%c3_121, %c0_122, %c0_123] : memref<4x16x8xbf16, #tpu.memory_space<vmem>>, vector<1x16x8xbf16>
      %245 = vector.shape_cast %244 : vector<1x16x8xbf16> to vector<16x8xbf16>
      %246 = vector.shape_cast %243 : vector<16x8xbf16> to vector<1x16x8xbf16>
      tpu.vector_store %arg18[%c3_121, %c0_122, %c0_123], %246 {strides = array<i32>} : memref<4x16x8xbf16, #tpu.memory_space<vmem>>, vector<1x16x8xbf16>,
      %247 = vector.extract_strided_slice %188 {offsets = [0, 56], sizes = [16, 8], strides = [1, 1]} : vector<16x96xf32> to vector<16x8xf32>
      %248 = arith.truncf %247 : vector<16x8xf32> to vector<16x8xbf16>
      %c3_124 = arith.constant 3 : index
      %c0_125 = arith.constant 0 : index
      %c0_126 = arith.constant 0 : index
      %249 = vector.load %arg19[%c3_124, %c0_125, %c0_126] : memref<4x16x8xbf16, #tpu.memory_space<vmem>>, vector<1x16x8xbf16>
      %250 = vector.shape_cast %249 : vector<1x16x8xbf16> to vector<16x8xbf16>
      %251 = vector.shape_cast %248 : vector<16x8xbf16> to vector<1x16x8xbf16>
      tpu.vector_store %arg19[%c3_124, %c0_125, %c0_126], %251 {strides = array<i32>} : memref<4x16x8xbf16, #tpu.memory_space<vmem>>, vector<1x16x8xbf16>,
      %252 = vector.extract_strided_slice %188 {offsets = [0, 88], sizes = [16, 8], strides = [1, 1]} : vector<16x96xf32> to vector<16x8xf32>
      %253 = arith.truncf %252 : vector<16x8xf32> to vector<16x8xbf16>
      %c3_127 = arith.constant 3 : index
      %c0_128 = arith.constant 0 : index
      %c0_129 = arith.constant 0 : index
      %254 = vector.load %arg20[%c3_127, %c0_128, %c0_129] : memref<4x16x8xbf16, #tpu.memory_space<vmem>>, vector<1x16x8xbf16>
      %255 = vector.shape_cast %254 : vector<1x16x8xbf16> to vector<16x8xbf16>
      %256 = vector.shape_cast %253 : vector<16x8xbf16> to vector<1x16x8xbf16>
      tpu.vector_store %arg20[%c3_127, %c0_128, %c0_129], %256 {strides = array<i32>} : memref<4x16x8xbf16, #tpu.memory_space<vmem>>, vector<1x16x8xbf16>,
    } else {
    }
    %c0 = arith.constant 0 : index
    %5 = arith.index_cast %1 : i32 to index
    %c0_1 = arith.constant 0 : index
    %6 = vector.load %arg2[%c0, %5, %c0_1] : memref<1x16x32xf32, #tpu.memory_space<vmem>>, vector<1x8x32xf32>
    %7 = vector.shape_cast %6 : vector<1x8x32xf32> to vector<8x32xf32>
    %8 = arith.index_cast %1 : i32 to index
    %c0_2 = arith.constant 0 : index
    %9 = vector.load %arg21[%8, %c0_2] : memref<16x1xf32, #tpu.memory_space<vmem>>, vector<8x1xf32>
    %c0_3 = arith.constant 0 : index
    %c0_4 = arith.constant 0 : index
    %10 = vector.load %arg22[%c0_3, %c0_4] : memref<1x16xf32, #tpu.memory_space<vmem>>, vector<1x16xf32>
    %11 = vector.broadcast %9 : vector<8x1xf32> to vector<8x16xf32>
    %12 = vector.broadcast %10 : vector<1x16xf32> to vector<8x16xf32>
    %13 = arith.subf %11, %12 : vector<8x16xf32>
    %14 = math.absf %13 : vector<8x16xf32>
    %cst = arith.constant 0.000000e+00 : f32
    %15 = vector.broadcast %cst : f32 to vector<8x16xf32>
    %16 = arith.subf %15, %14 : vector<8x16xf32>
    %cst_5 = arith.constant 1.000000e+00 : f32
    %17 = vector.broadcast %cst_5 : f32 to vector<8x16xf32>
    %18 = arith.mulf %16, %17 : vector<8x16xf32>
    %19 = math.exp %18 : vector<8x16xf32>
    %cst_6 = arith.constant dense<0.000000e+00> : vector<8xf32>
    %20 = vector.multi_reduction <add>, %19, %cst_6 [1] : vector<8x16xf32> to vector<8xf32>
    %21 = vector.shape_cast %20 : vector<8xf32> to vector<8x1xf32>
    %22 = tpu.reciprocal %21 {approx = true} : vector<8x1xf32> -> vector<8x1xf32>
    %23 = vector.broadcast %22 : vector<8x1xf32> to vector<8x16xf32>
    %24 = arith.mulf %19, %23 : vector<8x16xf32>
    %c0_7 = arith.constant 0 : index
    %25 = arith.index_cast %1 : i32 to index
    %c0_8 = arith.constant 0 : index
    %26 = vector.load %arg18[%c0_7, %25, %c0_8] : memref<4x16x8xbf16, #tpu.memory_space<vmem>>, vector<4x8x8xbf16>
    %c0_9 = arith.constant 0 : index
    %c0_10 = arith.constant 0 : index
    %c0_11 = arith.constant 0 : index
    %27 = vector.load %arg19[%c0_9, %c0_10, %c0_11] : memref<4x16x8xbf16, #tpu.memory_space<vmem>>, vector<4x16x8xbf16>
    "tpu.trace_start"() <{level = 10 : i32, message = "hqd,hkd->hqk"}> : () -> ()
    %cst_12 = arith.constant dense<0.000000e+00> : vector<4x8x16xf32>
    %28 = tpu.matmul %26, %27, %cst_12 {dimension_numbers = #tpu.dot_dimension_numbers<[2], [2], [1], [1], [0, 0, 0, 1, 1, 1], [0], [0]>} : vector<4x8x8xbf16>, vector<4x16x8xbf16>, vector<4x8x16xf32> -> vector<4x8x16xf32>
    "tpu.trace_stop"() : () -> ()
    %cst_13 = arith.constant dense<0xFF800000> : vector<4x8xf32>
    %29 = vector.multi_reduction <maximumf>, %28, %cst_13 [2] : vector<4x8x16xf32> to vector<4x8xf32>
    %30 = vector.shape_cast %29 : vector<4x8xf32> to vector<4x8x1xf32>
    %31 = vector.broadcast %30 : vector<4x8x1xf32> to vector<4x8x16xf32>
    %32 = arith.subf %28, %31 : vector<4x8x16xf32>
    %33 = math.exp %32 : vector<4x8x16xf32>
    %cst_14 = arith.constant dense<0.000000e+00> : vector<4x8xf32>
    %34 = vector.multi_reduction <add>, %33, %cst_14 [2] : vector<4x8x16xf32> to vector<4x8xf32>
    %35 = vector.shape_cast %34 : vector<4x8xf32> to vector<4x8x1xf32>
    %36 = tpu.reciprocal %35 {approx = true} : vector<4x8x1xf32> -> vector<4x8x1xf32>
    %37 = vector.broadcast %36 : vector<4x8x1xf32> to vector<4x8x16xf32>
    %38 = arith.mulf %33, %37 : vector<4x8x16xf32>
    %39 = vector.shape_cast %24 : vector<8x16xf32> to vector<1x8x16xf32>
    %40 = vector.broadcast %39 : vector<1x8x16xf32> to vector<4x8x16xf32>
    %41 = arith.mulf %38, %40 : vector<4x8x16xf32>
    %42 = arith.truncf %41 : vector<4x8x16xf32> to vector<4x8x16xbf16>
    %c0_15 = arith.constant 0 : index
    %c0_16 = arith.constant 0 : index
    %c0_17 = arith.constant 0 : index
    %43 = vector.load %arg20[%c0_15, %c0_16, %c0_17] : memref<4x16x8xbf16, #tpu.memory_space<vmem>>, vector<4x16x8xbf16>
    "tpu.trace_start"() <{level = 10 : i32, message = "hqk,hkd->hqd"}> : () -> ()
    %cst_18 = arith.constant dense<0.000000e+00> : vector<4x8x8xf32>
    %44 = tpu.matmul %42, %43, %cst_18 {dimension_numbers = #tpu.dot_dimension_numbers<[2], [1], [1], [2], [0, 0, 0, 1, 1, 2], [0], [0]>} : vector<4x8x16xbf16>, vector<4x16x8xbf16>, vector<4x8x8xf32> -> vector<4x8x8xf32>
    %cst_19 = arith.constant 0.000000e+00 : f32
    "tpu.trace_stop"() : () -> ()
    %45 = vector.broadcast %cst_19 : f32 to vector<8x32xf32>
    %46 = vector.extract_strided_slice %44 {offsets = [0, 0, 0], sizes = [1, 8, 8], strides = [1, 1, 1]} : vector<4x8x8xf32> to vector<1x8x8xf32>
    %47 = vector.shape_cast %46 : vector<1x8x8xf32> to vector<8x8xf32>
    %48 = arith.truncf %47 : vector<8x8xf32> to vector<8x8xbf16>
    %c0_20 = arith.constant 0 : index
    %c0_21 = arith.constant 0 : index
    %c0_22 = arith.constant 0 : index
    %49 = vector.load %arg9[%c0_20, %c0_21, %c0_22] : memref<4x8x32xbf16, #tpu.memory_space<vmem>>, vector<1x8x32xbf16>
    %50 = vector.shape_cast %49 : vector<1x8x32xbf16> to vector<8x32xbf16>
    %cst_23 = arith.constant dense<0.000000e+00> : vector<8x32xf32>
    %51 = tpu.matmul %48, %50, %cst_23 {dimension_numbers = #tpu.dot_dimension_numbers<[1], [0], [0], [1], [0, 0, 1, 1], [], []>} : vector<8x8xbf16>, vector<8x32xbf16>, vector<8x32xf32> -> vector<8x32xf32>
    %52 = arith.addf %45, %51 : vector<8x32xf32>
    %53 = vector.extract_strided_slice %44 {offsets = [1, 0, 0], sizes = [1, 8, 8], strides = [1, 1, 1]} : vector<4x8x8xf32> to vector<1x8x8xf32>
    %54 = vector.shape_cast %53 : vector<1x8x8xf32> to vector<8x8xf32>
    %55 = arith.truncf %54 : vector<8x8xf32> to vector<8x8xbf16>
    %c1 = arith.constant 1 : index
    %c0_24 = arith.constant 0 : index
    %c0_25 = arith.constant 0 : index
    %56 = vector.load %arg9[%c1, %c0_24, %c0_25] : memref<4x8x32xbf16, #tpu.memory_space<vmem>>, vector<1x8x32xbf16>
    %57 = vector.shape_cast %56 : vector<1x8x32xbf16> to vector<8x32xbf16>
    %cst_26 = arith.constant dense<0.000000e+00> : vector<8x32xf32>
    %58 = tpu.matmul %55, %57, %cst_26 {dimension_numbers = #tpu.dot_dimension_numbers<[1], [0], [0], [1], [0, 0, 1, 1], [], []>} : vector<8x8xbf16>, vector<8x32xbf16>, vector<8x32xf32> -> vector<8x32xf32>
    %59 = arith.addf %52, %58 : vector<8x32xf32>
    %60 = vector.extract_strided_slice %44 {offsets = [2, 0, 0], sizes = [1, 8, 8], strides = [1, 1, 1]} : vector<4x8x8xf32> to vector<1x8x8xf32>
    %61 = vector.shape_cast %60 : vector<1x8x8xf32> to vector<8x8xf32>
    %62 = arith.truncf %61 : vector<8x8xf32> to vector<8x8xbf16>
    %c2 = arith.constant 2 : index
    %c0_27 = arith.constant 0 : index
    %c0_28 = arith.constant 0 : index
    %63 = vector.load %arg9[%c2, %c0_27, %c0_28] : memref<4x8x32xbf16, #tpu.memory_space<vmem>>, vector<1x8x32xbf16>
    %64 = vector.shape_cast %63 : vector<1x8x32xbf16> to vector<8x32xbf16>
    %cst_29 = arith.constant dense<0.000000e+00> : vector<8x32xf32>
    %65 = tpu.matmul %62, %64, %cst_29 {dimension_numbers = #tpu.dot_dimension_numbers<[1], [0], [0], [1], [0, 0, 1, 1], [], []>} : vector<8x8xbf16>, vector<8x32xbf16>, vector<8x32xf32> -> vector<8x32xf32>
    %66 = arith.addf %59, %65 : vector<8x32xf32>
    %67 = vector.extract_strided_slice %44 {offsets = [3, 0, 0], sizes = [1, 8, 8], strides = [1, 1, 1]} : vector<4x8x8xf32> to vector<1x8x8xf32>
    %68 = vector.shape_cast %67 : vector<1x8x8xf32> to vector<8x8xf32>
    %69 = arith.truncf %68 : vector<8x8xf32> to vector<8x8xbf16>
    %c3 = arith.constant 3 : index
    %c0_30 = arith.constant 0 : index
    %c0_31 = arith.constant 0 : index
    %70 = vector.load %arg9[%c3, %c0_30, %c0_31] : memref<4x8x32xbf16, #tpu.memory_space<vmem>>, vector<1x8x32xbf16>
    %71 = vector.shape_cast %70 : vector<1x8x32xbf16> to vector<8x32xbf16>
    %cst_32 = arith.constant dense<0.000000e+00> : vector<8x32xf32>
    %72 = tpu.matmul %69, %71, %cst_32 {dimension_numbers = #tpu.dot_dimension_numbers<[1], [0], [0], [1], [0, 0, 1, 1], [], []>} : vector<8x8xbf16>, vector<8x32xbf16>, vector<8x32xf32> -> vector<8x32xf32>
    %73 = arith.addf %66, %72 : vector<8x32xf32>
    %74 = arith.addf %7, %73 : vector<8x32xf32>
    %c0_33 = arith.constant 0 : index
    %c0_34 = arith.constant 0 : index
    %75 = vector.load %arg10[%c0_33, %c0_34] : memref<1x32xf32, #tpu.memory_space<vmem>>, vector<1x32xf32>
    %76 = vector.broadcast %75 : vector<1x32xf32> to vector<8x32xf32>
    %77 = arith.addf %74, %76 : vector<8x32xf32>
    %c0_35 = arith.constant 0 : index
    %c0_36 = arith.constant 0 : index
    %78 = vector.load %arg11[%c0_35, %c0_36] : memref<1x32xf32, #tpu.memory_space<vmem>>, vector<1x32xf32>
    %c0_37 = arith.constant 0 : index
    %c0_38 = arith.constant 0 : index
    %79 = vector.load %arg12[%c0_37, %c0_38] : memref<1x32xf32, #tpu.memory_space<vmem>>, vector<1x32xf32>
    %cst_39 = arith.constant dense<0.000000e+00> : vector<8xf32>
    %80 = vector.multi_reduction <add>, %77, %cst_39 [1] : vector<8x32xf32> to vector<8xf32>
    %81 = vector.shape_cast %80 : vector<8xf32> to vector<8x1xf32>
    %cst_40 = arith.constant 3.200000e+01 : f32
    %82 = vector.broadcast %cst_40 : f32 to vector<8x1xf32>
    %83 = arith.divf %81, %82 : vector<8x1xf32>
    %84 = vector.broadcast %83 : vector<8x1xf32> to vector<8x32xf32>
    %85 = arith.subf %77, %84 : vector<8x32xf32>
    %86 = arith.mulf %85, %85 : vector<8x32xf32>
    %cst_41 = arith.constant dense<0.000000e+00> : vector<8xf32>
    %87 = vector.multi_reduction <add>, %86, %cst_41 [1] : vector<8x32xf32> to vector<8xf32>
    %88 = vector.shape_cast %87 : vector<8xf32> to vector<8x1xf32>
    %cst_42 = arith.constant 3.200000e+01 : f32
    %89 = vector.broadcast %cst_42 : f32 to vector<8x1xf32>
    %90 = arith.divf %88, %89 : vector<8x1xf32>
    %91 = vector.broadcast %83 : vector<8x1xf32> to vector<8x32xf32>
    %92 = arith.subf %77, %91 : vector<8x32xf32>
    %cst_43 = arith.constant 9.99999974E-6 : f32
    %93 = vector.broadcast %cst_43 : f32 to vector<8x1xf32>
    %94 = arith.addf %90, %93 : vector<8x1xf32>
    %95 = math.rsqrt %94 : vector<8x1xf32>
    %96 = vector.broadcast %95 : vector<8x1xf32> to vector<8x32xf32>
    %97 = arith.mulf %92, %96 : vector<8x32xf32>
    %98 = vector.broadcast %78 : vector<1x32xf32> to vector<8x32xf32>
    %99 = arith.mulf %97, %98 : vector<8x32xf32>
    %100 = vector.broadcast %79 : vector<1x32xf32> to vector<8x32xf32>
    %101 = arith.addf %99, %100 : vector<8x32xf32>
    %102 = arith.truncf %101 : vector<8x32xf32> to vector<8x32xbf16>
    %c0_44 = arith.constant 0 : index
    %c0_45 = arith.constant 0 : index
    %103 = vector.load %arg13[%c0_44, %c0_45] : memref<32x128xbf16, #tpu.memory_space<vmem>>, vector<32x128xbf16>
    %cst_46 = arith.constant dense<0.000000e+00> : vector<8x128xf32>
    %104 = tpu.matmul %102, %103, %cst_46 {dimension_numbers = #tpu.dot_dimension_numbers<[1], [0], [0], [1], [0, 0, 1, 1], [], []>} : vector<8x32xbf16>, vector<32x128xbf16>, vector<8x128xf32> -> vector<8x128xf32>
    %c0_47 = arith.constant 0 : index
    %c0_48 = arith.constant 0 : index
    %105 = vector.load %arg14[%c0_47, %c0_48] : memref<1x128xf32, #tpu.memory_space<vmem>>, vector<1x128xf32>
    %106 = vector.broadcast %105 : vector<1x128xf32> to vector<8x128xf32>
    %107 = arith.addf %104, %106 : vector<8x128xf32>
    %108 = arith.mulf %107, %107 : vector<8x128xf32>
    %109 = arith.mulf %107, %108 : vector<8x128xf32>
    %cst_49 = arith.constant 4.471500e-02 : f32
    %110 = vector.broadcast %cst_49 : f32 to vector<8x128xf32>
    %111 = arith.mulf %110, %109 : vector<8x128xf32>
    %112 = arith.addf %107, %111 : vector<8x128xf32>
    %cst_50 = arith.constant 0.797884583 : f32
    %113 = vector.broadcast %cst_50 : f32 to vector<8x128xf32>
    %114 = arith.mulf %113, %112 : vector<8x128xf32>
    %115 = math.tanh %114 : vector<8x128xf32>
    %cst_51 = arith.constant 1.000000e+00 : f32
    %116 = vector.broadcast %cst_51 : f32 to vector<8x128xf32>
    %117 = arith.addf %116, %115 : vector<8x128xf32>
    %cst_52 = arith.constant 5.000000e-01 : f32
    %118 = vector.broadcast %cst_52 : f32 to vector<8x128xf32>
    %119 = arith.mulf %118, %117 : vector<8x128xf32>
    %120 = arith.mulf %107, %119 : vector<8x128xf32>
    %121 = arith.truncf %120 : vector<8x128xf32> to vector<8x128xbf16>
    %c0_53 = arith.constant 0 : index
    %c0_54 = arith.constant 0 : index
    %122 = vector.load %arg15[%c0_53, %c0_54] : memref<128x32xbf16, #tpu.memory_space<vmem>>, vector<128x32xbf16>
    %cst_55 = arith.constant dense<0.000000e+00> : vector<8x32xf32>
    %123 = tpu.matmul %121, %122, %cst_55 {dimension_numbers = #tpu.dot_dimension_numbers<[1], [0], [0], [1], [0, 0, 1, 1], [], []>} : vector<8x128xbf16>, vector<128x32xbf16>, vector<8x32xf32> -> vector<8x32xf32>
    %124 = arith.addf %77, %123 : vector<8x32xf32>
    %c0_56 = arith.constant 0 : index
    %c0_57 = arith.constant 0 : index
    %125 = vector.load %arg16[%c0_56, %c0_57] : memref<1x32xf32, #tpu.memory_space<vmem>>, vector<1x32xf32>
    %126 = vector.broadcast %125 : vector<1x32xf32> to vector<8x32xf32>
    %127 = arith.addf %124, %126 : vector<8x32xf32>
    %c0_58 = arith.constant 0 : index
    %c0_59 = arith.constant 0 : index
    %c0_60 = arith.constant 0 : index
    %128 = vector.load %arg17[%c0_58, %c0_59, %c0_60] : memref<1x8x32xf32, #tpu.memory_space<vmem>>, vector<1x8x32xf32>
    %129 = vector.shape_cast %128 : vector<1x8x32xf32> to vector<8x32xf32>
    %130 = vector.shape_cast %127 : vector<8x32xf32> to vector<1x8x32xf32>
    tpu.vector_store %arg17[%c0_58, %c0_59, %c0_60], %130 {strides = array<i32>} : memref<1x8x32xf32, #tpu.memory_space<vmem>>, vector<1x8x32xf32>,
    return
  }
  func.func @transform_0(%arg0: i32, %arg1: i32) -> (i32, i32, i32) {
    %c0_i32 = arith.constant 0 : i32
    %c0_i32_0 = arith.constant 0 : i32
    %c0_i32_1 = arith.constant 0 : i32
    return %arg0, %c0_i32, %c0_i32_0 : i32, i32, i32
  }
  func.func @transform_1(%arg0: i32, %arg1: i32) -> (i32, i32) {
    %c0_i32 = arith.constant 0 : i32
    %c0_i32_0 = arith.constant 0 : i32
    %c0_i32_1 = arith.constant 0 : i32
    return %c0_i32, %c0_i32_0 : i32, i32
  }
  func.func @transform_2(%arg0: i32, %arg1: i32) -> i32 {
    %c0_i32 = arith.constant 0 : i32
    %c0_i32_0 = arith.constant 0 : i32
    return %c0_i32 : i32
  }
  func.func @transform_3(%arg0: i32, %arg1: i32) -> (i32, i32) {
    %c0_i32 = arith.constant 0 : i32
    %c0_i32_0 = arith.constant 0 : i32
    %c0_i32_1 = arith.constant 0 : i32
    return %c0_i32, %c0_i32_0 : i32, i32
  }
  func.func @transform_4(%arg0: i32, %arg1: i32) -> (i32, i32) {
    %c0_i32 = arith.constant 0 : i32
    %c0_i32_0 = arith.constant 0 : i32
    %c0_i32_1 = arith.constant 0 : i32
    return %c0_i32, %c0_i32_0 : i32, i32
  }
  func.func @transform_5(%arg0: i32, %arg1: i32) -> (i32, i32) {
    %c0_i32 = arith.constant 0 : i32
    %c0_i32_0 = arith.constant 0 : i32
    %c0_i32_1 = arith.constant 0 : i32
    return %c0_i32, %c0_i32_0 : i32, i32
  }
  func.func @transform_6(%arg0: i32, %arg1: i32) -> (i32, i32) {
    %c0_i32 = arith.constant 0 : i32
    %c0_i32_0 = arith.constant 0 : i32
    %c0_i32_1 = arith.constant 0 : i32
    return %c0_i32, %c0_i32_0 : i32, i32
  }
  func.func @transform_7(%arg0: i32, %arg1: i32) -> (i32, i32, i32) {
    %c0_i32 = arith.constant 0 : i32
    %c0_i32_0 = arith.constant 0 : i32
    %c0_i32_1 = arith.constant 0 : i32
    %c0_i32_2 = arith.constant 0 : i32
    return %c0_i32, %c0_i32_0, %c0_i32_1 : i32, i32, i32
  }
  func.func @transform_8(%arg0: i32, %arg1: i32) -> (i32, i32) {
    %c0_i32 = arith.constant 0 : i32
    %c0_i32_0 = arith.constant 0 : i32
    %c0_i32_1 = arith.constant 0 : i32
    return %c0_i32, %c0_i32_0 : i32, i32
  }
  func.func @transform_9(%arg0: i32, %arg1: i32) -> (i32, i32) {
    %c0_i32 = arith.constant 0 : i32
    %c0_i32_0 = arith.constant 0 : i32
    %c0_i32_1 = arith.constant 0 : i32
    return %c0_i32, %c0_i32_0 : i32, i32
  }
  func.func @transform_10(%arg0: i32, %arg1: i32) -> (i32, i32) {
    %c0_i32 = arith.constant 0 : i32
    %c0_i32_0 = arith.constant 0 : i32
    %c0_i32_1 = arith.constant 0 : i32
    return %c0_i32, %c0_i32_0 : i32, i32
  }
  func.func @transform_11(%arg0: i32, %arg1: i32) -> (i32, i32) {
    %c0_i32 = arith.constant 0 : i32
    %c0_i32_0 = arith.constant 0 : i32
    %c0_i32_1 = arith.constant 0 : i32
    return %c0_i32, %c0_i32_0 : i32, i32
  }
  func.func @transform_12(%arg0: i32, %arg1: i32) -> (i32, i32) {
    %c0_i32 = arith.constant 0 : i32
    %c0_i32_0 = arith.constant 0 : i32
    %c0_i32_1 = arith.constant 0 : i32
    return %c0_i32, %c0_i32_0 : i32, i32
  }
  func.func @transform_13(%arg0: i32, %arg1: i32) -> (i32, i32) {
    %c0_i32 = arith.constant 0 : i32
    %c0_i32_0 = arith.constant 0 : i32
    %c0_i32_1 = arith.constant 0 : i32
    return %c0_i32, %c0_i32_0 : i32, i32
  }
  func.func @transform_14(%arg0: i32, %arg1: i32) -> (i32, i32) {
    %c0_i32 = arith.constant 0 : i32
    %c0_i32_0 = arith.constant 0 : i32
    %c0_i32_1 = arith.constant 0 : i32
    return %c0_i32, %c0_i32_0 : i32, i32
  }
  func.func @transform_15(%arg0: i32, %arg1: i32) -> (i32, i32, i32) {
    %c0_i32 = arith.constant 0 : i32
    %c0_i32_0 = arith.constant 0 : i32
    return %arg0, %arg1, %c0_i32 : i32, i32, i32
  }
}

module attributes {stable_mosaic.version = 11 : i64} {
  func.func @kernel(%arg0: i32, %arg1: i32, %arg2: memref<1x16x32xf32, #tpu.memory_space<vmem>>, %arg3: memref<3x32xf32, #tpu.memory_space<vmem>>, %arg4: memref<1xf32, #tpu.memory_space<smem>>, %arg5: memref<1x32xf32, #tpu.memory_space<vmem>>, %arg6: memref<1x32xf32, #tpu.memory_space<vmem>>, %arg7: memref<32x96xbf16, #tpu.memory_space<vmem>>, %arg8: memref<1x96xf32, #tpu.memory_space<vmem>>, %arg9: memref<4x8x32xbf16, #tpu.memory_space<vmem>>, %arg10: memref<1x32xf32, #tpu.memory_space<vmem>>, %arg11: memref<1x32xf32, #tpu.memory_space<vmem>>, %arg12: memref<1x32xf32, #tpu.memory_space<vmem>>, %arg13: memref<32x128xbf16, #tpu.memory_space<vmem>>, %arg14: memref<1x128xf32, #tpu.memory_space<vmem>>, %arg15: memref<128x32xbf16, #tpu.memory_space<vmem>>, %arg16: memref<1x32xf32, #tpu.memory_space<vmem>>, %arg17: memref<1x8x32xf32, #tpu.memory_space<vmem>>, %arg18: memref<1x8x16xf32, #tpu.memory_space<vmem>>, %arg19: memref<1x1x16xf32, #tpu.memory_space<vmem>>, %arg20: memref<4x16x8xbf16, #tpu.memory_space<vmem>>, %arg21: memref<4x16x8xbf16, #tpu.memory_space<vmem>>, %arg22: memref<4x16x8xbf16, #tpu.memory_space<vmem>>, %arg23: memref<16x1xf32, #tpu.memory_space<vmem>>, %arg24: memref<1x16xf32, #tpu.memory_space<vmem>>) attributes {dimension_semantics = [#tpu.dimension_semantics<parallel>, #tpu.dimension_semantics<arbitrary>], iteration_bounds = array<i64: 2, 2>, scalar_prefetch = 0 : i64, scratch_operands = 5 : i64, tpu.core_type = #tpu.core_type<tc>, window_params = [{transform_indices = @transform_0, window_bounds = array<i64: 1, 16, 32>}, {pipeline_mode = #tpu.pipeline_mode<synchronous>, transform_indices = @transform_1, window_bounds = array<i64: 3, 32>}, {transform_indices = @transform_2, window_bounds = array<i64: 1>}, {pipeline_mode = #tpu.pipeline_mode<synchronous>, transform_indices = @transform_3, window_bounds = array<i64: 1, 32>}, {pipeline_mode = #tpu.pipeline_mode<synchronous>, transform_indices = @transform_4, window_bounds = array<i64: 1, 32>}, {pipeline_mode = #tpu.pipeline_mode<synchronous>, transform_indices = @transform_5, window_bounds = array<i64: 32, 96>}, {pipeline_mode = #tpu.pipeline_mode<synchronous>, transform_indices = @transform_6, window_bounds = array<i64: 1, 96>}, {pipeline_mode = #tpu.pipeline_mode<synchronous>, transform_indices = @transform_7, window_bounds = array<i64: 4, 8, 32>}, {pipeline_mode = #tpu.pipeline_mode<synchronous>, transform_indices = @transform_8, window_bounds = array<i64: 1, 32>}, {pipeline_mode = #tpu.pipeline_mode<synchronous>, transform_indices = @transform_9, window_bounds = array<i64: 1, 32>}, {pipeline_mode = #tpu.pipeline_mode<synchronous>, transform_indices = @transform_10, window_bounds = array<i64: 1, 32>}, {pipeline_mode = #tpu.pipeline_mode<synchronous>, transform_indices = @transform_11, window_bounds = array<i64: 32, 128>}, {pipeline_mode = #tpu.pipeline_mode<synchronous>, transform_indices = @transform_12, window_bounds = array<i64: 1, 128>}, {pipeline_mode = #tpu.pipeline_mode<synchronous>, transform_indices = @transform_13, window_bounds = array<i64: 128, 32>}, {pipeline_mode = #tpu.pipeline_mode<synchronous>, transform_indices = @transform_14, window_bounds = array<i64: 1, 32>}, {transform_indices = @transform_15, window_bounds = array<i64: 1, 8, 32>}, {transform_indices = @transform_16, window_bounds = array<i64: 1, 8, 16>}, {transform_indices = @transform_17, window_bounds = array<i64: 1, 1, 16>}]} {
    %c8_i32 = arith.constant 8 : i32
    %0 = arith.muli %arg1, %c8_i32 : i32
    %1 = tpu.assume_multiple %0, 8 : i32
    %c0_i32 = arith.constant 0 : i32
    %2 = arith.cmpi eq, %arg1, %c0_i32 : i32
    %3 = arith.extui %2 : i1 to i32
    %c0_i32_0 = arith.constant 0 : i32
    %4 = arith.cmpi ne, %3, %c0_i32_0 : i32
    scf.if %4 {
      %c0_68 = arith.constant 0 : index
      %c0_69 = arith.constant 0 : index
      %c0_70 = arith.constant 0 : index
      %140 = vector.load %arg2[%c0_68, %c0_69, %c0_70] : memref<1x16x32xf32, #tpu.memory_space<vmem>>, vector<1x16x32xf32>
      %141 = vector.shape_cast %140 : vector<1x16x32xf32> to vector<16x32xf32>
      %c0_71 = arith.constant 0 : index
      %c0_72 = arith.constant 0 : index
      %142 = vector.load %arg3[%c0_71, %c0_72] : memref<3x32xf32, #tpu.memory_space<vmem>>, vector<3x32xf32>
      %cst_73 = arith.constant dense<0.000000e+00> : vector<3x16xf32>
      %143 = tpu.matmul %142, %141, %cst_73 {dimension_numbers = #tpu.dot_dimension_numbers<[1], [1], [0], [0], [0, 0, 1, 0], [], []>} : vector<3x32xf32>, vector<16x32xf32>, vector<3x16xf32> -> vector<3x16xf32>
      %144 = vector.extract_strided_slice %143 {offsets = [2, 0], sizes = [1, 16], strides = [1, 1]} : vector<3x16xf32> to vector<1x16xf32>
      %cst_74 = arith.constant 0.000000e+00 : f32
      %145 = vector.broadcast %cst_74 : f32 to vector<1x2xf32>
      %146 = vector.extract_strided_slice %143 {offsets = [0, 0], sizes = [1, 14], strides = [1, 1]} : vector<3x16xf32> to vector<1x14xf32>
      %147 = tpu.concatenate %145, %146 in 1 : vector<1x2xf32>, vector<1x14xf32> -> vector<1x16xf32>
      %148 = arith.addf %144, %147 : vector<1x16xf32>
      %cst_75 = arith.constant 0.000000e+00 : f32
      %149 = vector.broadcast %cst_75 : f32 to vector<1x1xf32>
      %150 = vector.extract_strided_slice %143 {offsets = [1, 0], sizes = [1, 15], strides = [1, 1]} : vector<3x16xf32> to vector<1x15xf32>
      %151 = tpu.concatenate %149, %150 in 1 : vector<1x1xf32>, vector<1x15xf32> -> vector<1x16xf32>
      %152 = arith.addf %148, %151 : vector<1x16xf32>
      %c0_76 = arith.constant 0 : index
      %153 = memref.load %arg4[%c0_76] : memref<1xf32, #tpu.memory_space<smem>>
      %154 = vector.broadcast %153 : f32 to vector<1x16xf32>
      %155 = arith.addf %152, %154 : vector<1x16xf32>
      %156 = math.tanh %155 : vector<1x16xf32>
      %c0_77 = arith.constant 0 : index
      %c0_78 = arith.constant 0 : index
      %157 = vector.load %arg24[%c0_77, %c0_78] : memref<1x16xf32, #tpu.memory_space<vmem>>, vector<1x16xf32>
      tpu.vector_store %arg24[%c0_77, %c0_78], %156 {strides = array<i32>} : memref<1x16xf32, #tpu.memory_space<vmem>>, vector<1x16xf32>,
      %158 = tpu.iota {dimensions = array<i32: 0>} : vector<16x16xi32>
      %159 = tpu.iota {dimensions = array<i32: 1>} : vector<16x16xi32>
      %160 = arith.cmpi eq, %158, %159 : vector<16x16xi32>
      %cst_79 = arith.constant 0.000000e+00 : f32
      %161 = vector.shape_cast %156 : vector<1x16xf32> to vector<1x16xf32>
      %162 = vector.broadcast %161 : vector<1x16xf32> to vector<16x16xf32>
      %163 = vector.broadcast %cst_79 : f32 to vector<16x16xf32>
      %164 = arith.select %160, %162, %163 : vector<16x16xi1>, vector<16x16xf32>
      %cst_80 = arith.constant dense<0.000000e+00> : vector<16xf32>
      %165 = vector.multi_reduction <add>, %164, %cst_80 [1] : vector<16x16xf32> to vector<16xf32>
      %166 = vector.shape_cast %165 : vector<16xf32> to vector<16x1xf32>
      %c0_81 = arith.constant 0 : index
      %c0_82 = arith.constant 0 : index
      %167 = vector.load %arg23[%c0_81, %c0_82] : memref<16x1xf32, #tpu.memory_space<vmem>>, vector<16x1xf32>
      tpu.vector_store %arg23[%c0_81, %c0_82], %166 {strides = array<i32>} : memref<16x1xf32, #tpu.memory_space<vmem>>, vector<16x1xf32>,
      %c0_83 = arith.constant 0 : index
      %c0_84 = arith.constant 0 : index
      %168 = vector.load %arg5[%c0_83, %c0_84] : memref<1x32xf32, #tpu.memory_space<vmem>>, vector<1x32xf32>
      %c0_85 = arith.constant 0 : index
      %c0_86 = arith.constant 0 : index
      %169 = vector.load %arg6[%c0_85, %c0_86] : memref<1x32xf32, #tpu.memory_space<vmem>>, vector<1x32xf32>
      %cst_87 = arith.constant dense<0.000000e+00> : vector<16xf32>
      %170 = vector.multi_reduction <add>, %141, %cst_87 [1] : vector<16x32xf32> to vector<16xf32>
      %171 = vector.shape_cast %170 : vector<16xf32> to vector<16x1xf32>
      %cst_88 = arith.constant 3.200000e+01 : f32
      %172 = vector.broadcast %cst_88 : f32 to vector<16x1xf32>
      %173 = arith.divf %171, %172 : vector<16x1xf32>
      %174 = vector.broadcast %173 : vector<16x1xf32> to vector<16x32xf32>
      %175 = arith.subf %141, %174 : vector<16x32xf32>
      %176 = arith.mulf %175, %175 : vector<16x32xf32>
      %cst_89 = arith.constant dense<0.000000e+00> : vector<16xf32>
      %177 = vector.multi_reduction <add>, %176, %cst_89 [1] : vector<16x32xf32> to vector<16xf32>
      %178 = vector.shape_cast %177 : vector<16xf32> to vector<16x1xf32>
      %cst_90 = arith.constant 3.200000e+01 : f32
      %179 = vector.broadcast %cst_90 : f32 to vector<16x1xf32>
      %180 = arith.divf %178, %179 : vector<16x1xf32>
      %181 = vector.broadcast %173 : vector<16x1xf32> to vector<16x32xf32>
      %182 = arith.subf %141, %181 : vector<16x32xf32>
      %cst_91 = arith.constant 9.99999974E-6 : f32
      %183 = vector.broadcast %cst_91 : f32 to vector<16x1xf32>
      %184 = arith.addf %180, %183 : vector<16x1xf32>
      %185 = math.rsqrt %184 : vector<16x1xf32>
      %186 = vector.broadcast %185 : vector<16x1xf32> to vector<16x32xf32>
      %187 = arith.mulf %182, %186 : vector<16x32xf32>
      %188 = vector.broadcast %168 : vector<1x32xf32> to vector<16x32xf32>
      %189 = arith.mulf %187, %188 : vector<16x32xf32>
      %190 = vector.broadcast %169 : vector<1x32xf32> to vector<16x32xf32>
      %191 = arith.addf %189, %190 : vector<16x32xf32>
      %192 = arith.truncf %191 : vector<16x32xf32> to vector<16x32xbf16>
      %c0_92 = arith.constant 0 : index
      %c0_93 = arith.constant 0 : index
      %193 = vector.load %arg7[%c0_92, %c0_93] : memref<32x96xbf16, #tpu.memory_space<vmem>>, vector<32x96xbf16>
      %cst_94 = arith.constant dense<0.000000e+00> : vector<16x96xf32>
      %194 = tpu.matmul %192, %193, %cst_94 {dimension_numbers = #tpu.dot_dimension_numbers<[1], [0], [0], [1], [0, 0, 1, 1], [], []>} : vector<16x32xbf16>, vector<32x96xbf16>, vector<16x96xf32> -> vector<16x96xf32>
      %c0_95 = arith.constant 0 : index
      %c0_96 = arith.constant 0 : index
      %195 = vector.load %arg8[%c0_95, %c0_96] : memref<1x96xf32, #tpu.memory_space<vmem>>, vector<1x96xf32>
      %196 = vector.broadcast %195 : vector<1x96xf32> to vector<16x96xf32>
      %197 = arith.addf %194, %196 : vector<16x96xf32>
      %198 = vector.extract_strided_slice %197 {offsets = [0, 0], sizes = [16, 8], strides = [1, 1]} : vector<16x96xf32> to vector<16x8xf32>
      %cst_97 = arith.constant 0.353553385 : f32
      %199 = vector.broadcast %cst_97 : f32 to vector<16x8xf32>
      %200 = arith.mulf %198, %199 : vector<16x8xf32>
      %201 = arith.truncf %200 : vector<16x8xf32> to vector<16x8xbf16>
      %c0_98 = arith.constant 0 : index
      %c0_99 = arith.constant 0 : index
      %c0_100 = arith.constant 0 : index
      %202 = vector.load %arg20[%c0_98, %c0_99, %c0_100] : memref<4x16x8xbf16, #tpu.memory_space<vmem>>, vector<1x16x8xbf16>
      %203 = vector.shape_cast %202 : vector<1x16x8xbf16> to vector<16x8xbf16>
      %204 = vector.shape_cast %201 : vector<16x8xbf16> to vector<1x16x8xbf16>
      tpu.vector_store %arg20[%c0_98, %c0_99, %c0_100], %204 {strides = array<i32>} : memref<4x16x8xbf16, #tpu.memory_space<vmem>>, vector<1x16x8xbf16>,
      %205 = vector.extract_strided_slice %197 {offsets = [0, 32], sizes = [16, 8], strides = [1, 1]} : vector<16x96xf32> to vector<16x8xf32>
      %206 = arith.truncf %205 : vector<16x8xf32> to vector<16x8xbf16>
      %c0_101 = arith.constant 0 : index
      %c0_102 = arith.constant 0 : index
      %c0_103 = arith.constant 0 : index
      %207 = vector.load %arg21[%c0_101, %c0_102, %c0_103] : memref<4x16x8xbf16, #tpu.memory_space<vmem>>, vector<1x16x8xbf16>
      %208 = vector.shape_cast %207 : vector<1x16x8xbf16> to vector<16x8xbf16>
      %209 = vector.shape_cast %206 : vector<16x8xbf16> to vector<1x16x8xbf16>
      tpu.vector_store %arg21[%c0_101, %c0_102, %c0_103], %209 {strides = array<i32>} : memref<4x16x8xbf16, #tpu.memory_space<vmem>>, vector<1x16x8xbf16>,
      %210 = vector.extract_strided_slice %197 {offsets = [0, 64], sizes = [16, 8], strides = [1, 1]} : vector<16x96xf32> to vector<16x8xf32>
      %211 = arith.truncf %210 : vector<16x8xf32> to vector<16x8xbf16>
      %c0_104 = arith.constant 0 : index
      %c0_105 = arith.constant 0 : index
      %c0_106 = arith.constant 0 : index
      %212 = vector.load %arg22[%c0_104, %c0_105, %c0_106] : memref<4x16x8xbf16, #tpu.memory_space<vmem>>, vector<1x16x8xbf16>
      %213 = vector.shape_cast %212 : vector<1x16x8xbf16> to vector<16x8xbf16>
      %214 = vector.shape_cast %211 : vector<16x8xbf16> to vector<1x16x8xbf16>
      tpu.vector_store %arg22[%c0_104, %c0_105, %c0_106], %214 {strides = array<i32>} : memref<4x16x8xbf16, #tpu.memory_space<vmem>>, vector<1x16x8xbf16>,
      %215 = vector.extract_strided_slice %197 {offsets = [0, 8], sizes = [16, 8], strides = [1, 1]} : vector<16x96xf32> to vector<16x8xf32>
      %cst_107 = arith.constant 0.353553385 : f32
      %216 = vector.broadcast %cst_107 : f32 to vector<16x8xf32>
      %217 = arith.mulf %215, %216 : vector<16x8xf32>
      %218 = arith.truncf %217 : vector<16x8xf32> to vector<16x8xbf16>
      %c1_108 = arith.constant 1 : index
      %c0_109 = arith.constant 0 : index
      %c0_110 = arith.constant 0 : index
      %219 = vector.load %arg20[%c1_108, %c0_109, %c0_110] : memref<4x16x8xbf16, #tpu.memory_space<vmem>>, vector<1x16x8xbf16>
      %220 = vector.shape_cast %219 : vector<1x16x8xbf16> to vector<16x8xbf16>
      %221 = vector.shape_cast %218 : vector<16x8xbf16> to vector<1x16x8xbf16>
      tpu.vector_store %arg20[%c1_108, %c0_109, %c0_110], %221 {strides = array<i32>} : memref<4x16x8xbf16, #tpu.memory_space<vmem>>, vector<1x16x8xbf16>,
      %222 = vector.extract_strided_slice %197 {offsets = [0, 40], sizes = [16, 8], strides = [1, 1]} : vector<16x96xf32> to vector<16x8xf32>
      %223 = arith.truncf %222 : vector<16x8xf32> to vector<16x8xbf16>
      %c1_111 = arith.constant 1 : index
      %c0_112 = arith.constant 0 : index
      %c0_113 = arith.constant 0 : index
      %224 = vector.load %arg21[%c1_111, %c0_112, %c0_113] : memref<4x16x8xbf16, #tpu.memory_space<vmem>>, vector<1x16x8xbf16>
      %225 = vector.shape_cast %224 : vector<1x16x8xbf16> to vector<16x8xbf16>
      %226 = vector.shape_cast %223 : vector<16x8xbf16> to vector<1x16x8xbf16>
      tpu.vector_store %arg21[%c1_111, %c0_112, %c0_113], %226 {strides = array<i32>} : memref<4x16x8xbf16, #tpu.memory_space<vmem>>, vector<1x16x8xbf16>,
      %227 = vector.extract_strided_slice %197 {offsets = [0, 72], sizes = [16, 8], strides = [1, 1]} : vector<16x96xf32> to vector<16x8xf32>
      %228 = arith.truncf %227 : vector<16x8xf32> to vector<16x8xbf16>
      %c1_114 = arith.constant 1 : index
      %c0_115 = arith.constant 0 : index
      %c0_116 = arith.constant 0 : index
      %229 = vector.load %arg22[%c1_114, %c0_115, %c0_116] : memref<4x16x8xbf16, #tpu.memory_space<vmem>>, vector<1x16x8xbf16>
      %230 = vector.shape_cast %229 : vector<1x16x8xbf16> to vector<16x8xbf16>
      %231 = vector.shape_cast %228 : vector<16x8xbf16> to vector<1x16x8xbf16>
      tpu.vector_store %arg22[%c1_114, %c0_115, %c0_116], %231 {strides = array<i32>} : memref<4x16x8xbf16, #tpu.memory_space<vmem>>, vector<1x16x8xbf16>,
      %232 = vector.extract_strided_slice %197 {offsets = [0, 16], sizes = [16, 8], strides = [1, 1]} : vector<16x96xf32> to vector<16x8xf32>
      %cst_117 = arith.constant 0.353553385 : f32
      %233 = vector.broadcast %cst_117 : f32 to vector<16x8xf32>
      %234 = arith.mulf %232, %233 : vector<16x8xf32>
      %235 = arith.truncf %234 : vector<16x8xf32> to vector<16x8xbf16>
      %c2_118 = arith.constant 2 : index
      %c0_119 = arith.constant 0 : index
      %c0_120 = arith.constant 0 : index
      %236 = vector.load %arg20[%c2_118, %c0_119, %c0_120] : memref<4x16x8xbf16, #tpu.memory_space<vmem>>, vector<1x16x8xbf16>
      %237 = vector.shape_cast %236 : vector<1x16x8xbf16> to vector<16x8xbf16>
      %238 = vector.shape_cast %235 : vector<16x8xbf16> to vector<1x16x8xbf16>
      tpu.vector_store %arg20[%c2_118, %c0_119, %c0_120], %238 {strides = array<i32>} : memref<4x16x8xbf16, #tpu.memory_space<vmem>>, vector<1x16x8xbf16>,
      %239 = vector.extract_strided_slice %197 {offsets = [0, 48], sizes = [16, 8], strides = [1, 1]} : vector<16x96xf32> to vector<16x8xf32>
      %240 = arith.truncf %239 : vector<16x8xf32> to vector<16x8xbf16>
      %c2_121 = arith.constant 2 : index
      %c0_122 = arith.constant 0 : index
      %c0_123 = arith.constant 0 : index
      %241 = vector.load %arg21[%c2_121, %c0_122, %c0_123] : memref<4x16x8xbf16, #tpu.memory_space<vmem>>, vector<1x16x8xbf16>
      %242 = vector.shape_cast %241 : vector<1x16x8xbf16> to vector<16x8xbf16>
      %243 = vector.shape_cast %240 : vector<16x8xbf16> to vector<1x16x8xbf16>
      tpu.vector_store %arg21[%c2_121, %c0_122, %c0_123], %243 {strides = array<i32>} : memref<4x16x8xbf16, #tpu.memory_space<vmem>>, vector<1x16x8xbf16>,
      %244 = vector.extract_strided_slice %197 {offsets = [0, 80], sizes = [16, 8], strides = [1, 1]} : vector<16x96xf32> to vector<16x8xf32>
      %245 = arith.truncf %244 : vector<16x8xf32> to vector<16x8xbf16>
      %c2_124 = arith.constant 2 : index
      %c0_125 = arith.constant 0 : index
      %c0_126 = arith.constant 0 : index
      %246 = vector.load %arg22[%c2_124, %c0_125, %c0_126] : memref<4x16x8xbf16, #tpu.memory_space<vmem>>, vector<1x16x8xbf16>
      %247 = vector.shape_cast %246 : vector<1x16x8xbf16> to vector<16x8xbf16>
      %248 = vector.shape_cast %245 : vector<16x8xbf16> to vector<1x16x8xbf16>
      tpu.vector_store %arg22[%c2_124, %c0_125, %c0_126], %248 {strides = array<i32>} : memref<4x16x8xbf16, #tpu.memory_space<vmem>>, vector<1x16x8xbf16>,
      %249 = vector.extract_strided_slice %197 {offsets = [0, 24], sizes = [16, 8], strides = [1, 1]} : vector<16x96xf32> to vector<16x8xf32>
      %cst_127 = arith.constant 0.353553385 : f32
      %250 = vector.broadcast %cst_127 : f32 to vector<16x8xf32>
      %251 = arith.mulf %249, %250 : vector<16x8xf32>
      %252 = arith.truncf %251 : vector<16x8xf32> to vector<16x8xbf16>
      %c3_128 = arith.constant 3 : index
      %c0_129 = arith.constant 0 : index
      %c0_130 = arith.constant 0 : index
      %253 = vector.load %arg20[%c3_128, %c0_129, %c0_130] : memref<4x16x8xbf16, #tpu.memory_space<vmem>>, vector<1x16x8xbf16>
      %254 = vector.shape_cast %253 : vector<1x16x8xbf16> to vector<16x8xbf16>
      %255 = vector.shape_cast %252 : vector<16x8xbf16> to vector<1x16x8xbf16>
      tpu.vector_store %arg20[%c3_128, %c0_129, %c0_130], %255 {strides = array<i32>} : memref<4x16x8xbf16, #tpu.memory_space<vmem>>, vector<1x16x8xbf16>,
      %256 = vector.extract_strided_slice %197 {offsets = [0, 56], sizes = [16, 8], strides = [1, 1]} : vector<16x96xf32> to vector<16x8xf32>
      %257 = arith.truncf %256 : vector<16x8xf32> to vector<16x8xbf16>
      %c3_131 = arith.constant 3 : index
      %c0_132 = arith.constant 0 : index
      %c0_133 = arith.constant 0 : index
      %258 = vector.load %arg21[%c3_131, %c0_132, %c0_133] : memref<4x16x8xbf16, #tpu.memory_space<vmem>>, vector<1x16x8xbf16>
      %259 = vector.shape_cast %258 : vector<1x16x8xbf16> to vector<16x8xbf16>
      %260 = vector.shape_cast %257 : vector<16x8xbf16> to vector<1x16x8xbf16>
      tpu.vector_store %arg21[%c3_131, %c0_132, %c0_133], %260 {strides = array<i32>} : memref<4x16x8xbf16, #tpu.memory_space<vmem>>, vector<1x16x8xbf16>,
      %261 = vector.extract_strided_slice %197 {offsets = [0, 88], sizes = [16, 8], strides = [1, 1]} : vector<16x96xf32> to vector<16x8xf32>
      %262 = arith.truncf %261 : vector<16x8xf32> to vector<16x8xbf16>
      %c3_134 = arith.constant 3 : index
      %c0_135 = arith.constant 0 : index
      %c0_136 = arith.constant 0 : index
      %263 = vector.load %arg22[%c3_134, %c0_135, %c0_136] : memref<4x16x8xbf16, #tpu.memory_space<vmem>>, vector<1x16x8xbf16>
      %264 = vector.shape_cast %263 : vector<1x16x8xbf16> to vector<16x8xbf16>
      %265 = vector.shape_cast %262 : vector<16x8xbf16> to vector<1x16x8xbf16>
      tpu.vector_store %arg22[%c3_134, %c0_135, %c0_136], %265 {strides = array<i32>} : memref<4x16x8xbf16, #tpu.memory_space<vmem>>, vector<1x16x8xbf16>,
    } else {
    }
    %c0 = arith.constant 0 : index
    %5 = arith.index_cast %1 : i32 to index
    %c0_1 = arith.constant 0 : index
    %6 = vector.load %arg2[%c0, %5, %c0_1] : memref<1x16x32xf32, #tpu.memory_space<vmem>>, vector<1x8x32xf32>
    %7 = vector.shape_cast %6 : vector<1x8x32xf32> to vector<8x32xf32>
    %8 = arith.index_cast %1 : i32 to index
    %c0_2 = arith.constant 0 : index
    %9 = vector.load %arg23[%8, %c0_2] : memref<16x1xf32, #tpu.memory_space<vmem>>, vector<8x1xf32>
    %c0_3 = arith.constant 0 : index
    %c0_4 = arith.constant 0 : index
    %10 = vector.load %arg24[%c0_3, %c0_4] : memref<1x16xf32, #tpu.memory_space<vmem>>, vector<1x16xf32>
    %11 = vector.broadcast %9 : vector<8x1xf32> to vector<8x16xf32>
    %12 = vector.broadcast %10 : vector<1x16xf32> to vector<8x16xf32>
    %13 = arith.subf %11, %12 : vector<8x16xf32>
    %14 = math.absf %13 : vector<8x16xf32>
    %cst = arith.constant 0.000000e+00 : f32
    %15 = vector.broadcast %cst : f32 to vector<8x16xf32>
    %16 = arith.subf %15, %14 : vector<8x16xf32>
    %cst_5 = arith.constant 1.000000e+00 : f32
    %17 = vector.broadcast %cst_5 : f32 to vector<8x16xf32>
    %18 = arith.mulf %16, %17 : vector<8x16xf32>
    %19 = math.exp %18 : vector<8x16xf32>
    %cst_6 = arith.constant dense<0.000000e+00> : vector<8xf32>
    %20 = vector.multi_reduction <add>, %19, %cst_6 [1] : vector<8x16xf32> to vector<8xf32>
    %21 = vector.shape_cast %20 : vector<8xf32> to vector<8x1xf32>
    %22 = tpu.reciprocal %21 {approx = true} : vector<8x1xf32> -> vector<8x1xf32>
    %23 = vector.broadcast %22 : vector<8x1xf32> to vector<8x16xf32>
    %24 = arith.mulf %19, %23 : vector<8x16xf32>
    %c0_7 = arith.constant 0 : index
    %25 = arith.index_cast %1 : i32 to index
    %c0_8 = arith.constant 0 : index
    %26 = vector.load %arg20[%c0_7, %25, %c0_8] : memref<4x16x8xbf16, #tpu.memory_space<vmem>>, vector<4x8x8xbf16>
    %c0_9 = arith.constant 0 : index
    %c0_10 = arith.constant 0 : index
    %c0_11 = arith.constant 0 : index
    %27 = vector.load %arg21[%c0_9, %c0_10, %c0_11] : memref<4x16x8xbf16, #tpu.memory_space<vmem>>, vector<4x16x8xbf16>
    "tpu.trace_start"() <{level = 10 : i32, message = "hqd,hkd->hqk"}> : () -> ()
    %cst_12 = arith.constant dense<0.000000e+00> : vector<4x8x16xf32>
    %28 = tpu.matmul %26, %27, %cst_12 {dimension_numbers = #tpu.dot_dimension_numbers<[2], [2], [1], [1], [0, 0, 0, 1, 1, 1], [0], [0]>} : vector<4x8x8xbf16>, vector<4x16x8xbf16>, vector<4x8x16xf32> -> vector<4x8x16xf32>
    "tpu.trace_stop"() : () -> ()
    %cst_13 = arith.constant dense<0xFF800000> : vector<4x8xf32>
    %29 = vector.multi_reduction <maximumf>, %28, %cst_13 [2] : vector<4x8x16xf32> to vector<4x8xf32>
    %30 = vector.shape_cast %29 : vector<4x8xf32> to vector<4x8x1xf32>
    %31 = vector.broadcast %30 : vector<4x8x1xf32> to vector<4x8x16xf32>
    %32 = arith.subf %28, %31 : vector<4x8x16xf32>
    %33 = math.exp %32 : vector<4x8x16xf32>
    %cst_14 = arith.constant dense<0.000000e+00> : vector<4x8xf32>
    %34 = vector.multi_reduction <add>, %33, %cst_14 [2] : vector<4x8x16xf32> to vector<4x8xf32>
    %35 = vector.shape_cast %34 : vector<4x8xf32> to vector<4x8x1xf32>
    %36 = tpu.reciprocal %35 {approx = true} : vector<4x8x1xf32> -> vector<4x8x1xf32>
    %37 = vector.broadcast %36 : vector<4x8x1xf32> to vector<4x8x16xf32>
    %38 = arith.mulf %33, %37 : vector<4x8x16xf32>
    %39 = vector.shape_cast %24 : vector<8x16xf32> to vector<1x8x16xf32>
    %40 = vector.broadcast %39 : vector<1x8x16xf32> to vector<4x8x16xf32>
    %41 = arith.mulf %38, %40 : vector<4x8x16xf32>
    %42 = arith.truncf %41 : vector<4x8x16xf32> to vector<4x8x16xbf16>
    %c0_15 = arith.constant 0 : index
    %c0_16 = arith.constant 0 : index
    %c0_17 = arith.constant 0 : index
    %43 = vector.load %arg22[%c0_15, %c0_16, %c0_17] : memref<4x16x8xbf16, #tpu.memory_space<vmem>>, vector<4x16x8xbf16>
    "tpu.trace_start"() <{level = 10 : i32, message = "hqk,hkd->hqd"}> : () -> ()
    %cst_18 = arith.constant dense<0.000000e+00> : vector<4x8x8xf32>
    %44 = tpu.matmul %42, %43, %cst_18 {dimension_numbers = #tpu.dot_dimension_numbers<[2], [1], [1], [2], [0, 0, 0, 1, 1, 2], [0], [0]>} : vector<4x8x16xbf16>, vector<4x16x8xbf16>, vector<4x8x8xf32> -> vector<4x8x8xf32>
    %cst_19 = arith.constant 0.000000e+00 : f32
    "tpu.trace_stop"() : () -> ()
    %45 = vector.broadcast %cst_19 : f32 to vector<8x32xf32>
    %46 = vector.extract_strided_slice %44 {offsets = [0, 0, 0], sizes = [1, 8, 8], strides = [1, 1, 1]} : vector<4x8x8xf32> to vector<1x8x8xf32>
    %47 = vector.shape_cast %46 : vector<1x8x8xf32> to vector<8x8xf32>
    %48 = arith.truncf %47 : vector<8x8xf32> to vector<8x8xbf16>
    %c0_20 = arith.constant 0 : index
    %c0_21 = arith.constant 0 : index
    %c0_22 = arith.constant 0 : index
    %49 = vector.load %arg9[%c0_20, %c0_21, %c0_22] : memref<4x8x32xbf16, #tpu.memory_space<vmem>>, vector<1x8x32xbf16>
    %50 = vector.shape_cast %49 : vector<1x8x32xbf16> to vector<8x32xbf16>
    %cst_23 = arith.constant dense<0.000000e+00> : vector<8x32xf32>
    %51 = tpu.matmul %48, %50, %cst_23 {dimension_numbers = #tpu.dot_dimension_numbers<[1], [0], [0], [1], [0, 0, 1, 1], [], []>} : vector<8x8xbf16>, vector<8x32xbf16>, vector<8x32xf32> -> vector<8x32xf32>
    %52 = arith.addf %45, %51 : vector<8x32xf32>
    %53 = vector.extract_strided_slice %44 {offsets = [1, 0, 0], sizes = [1, 8, 8], strides = [1, 1, 1]} : vector<4x8x8xf32> to vector<1x8x8xf32>
    %54 = vector.shape_cast %53 : vector<1x8x8xf32> to vector<8x8xf32>
    %55 = arith.truncf %54 : vector<8x8xf32> to vector<8x8xbf16>
    %c1 = arith.constant 1 : index
    %c0_24 = arith.constant 0 : index
    %c0_25 = arith.constant 0 : index
    %56 = vector.load %arg9[%c1, %c0_24, %c0_25] : memref<4x8x32xbf16, #tpu.memory_space<vmem>>, vector<1x8x32xbf16>
    %57 = vector.shape_cast %56 : vector<1x8x32xbf16> to vector<8x32xbf16>
    %cst_26 = arith.constant dense<0.000000e+00> : vector<8x32xf32>
    %58 = tpu.matmul %55, %57, %cst_26 {dimension_numbers = #tpu.dot_dimension_numbers<[1], [0], [0], [1], [0, 0, 1, 1], [], []>} : vector<8x8xbf16>, vector<8x32xbf16>, vector<8x32xf32> -> vector<8x32xf32>
    %59 = arith.addf %52, %58 : vector<8x32xf32>
    %60 = vector.extract_strided_slice %44 {offsets = [2, 0, 0], sizes = [1, 8, 8], strides = [1, 1, 1]} : vector<4x8x8xf32> to vector<1x8x8xf32>
    %61 = vector.shape_cast %60 : vector<1x8x8xf32> to vector<8x8xf32>
    %62 = arith.truncf %61 : vector<8x8xf32> to vector<8x8xbf16>
    %c2 = arith.constant 2 : index
    %c0_27 = arith.constant 0 : index
    %c0_28 = arith.constant 0 : index
    %63 = vector.load %arg9[%c2, %c0_27, %c0_28] : memref<4x8x32xbf16, #tpu.memory_space<vmem>>, vector<1x8x32xbf16>
    %64 = vector.shape_cast %63 : vector<1x8x32xbf16> to vector<8x32xbf16>
    %cst_29 = arith.constant dense<0.000000e+00> : vector<8x32xf32>
    %65 = tpu.matmul %62, %64, %cst_29 {dimension_numbers = #tpu.dot_dimension_numbers<[1], [0], [0], [1], [0, 0, 1, 1], [], []>} : vector<8x8xbf16>, vector<8x32xbf16>, vector<8x32xf32> -> vector<8x32xf32>
    %66 = arith.addf %59, %65 : vector<8x32xf32>
    %67 = vector.extract_strided_slice %44 {offsets = [3, 0, 0], sizes = [1, 8, 8], strides = [1, 1, 1]} : vector<4x8x8xf32> to vector<1x8x8xf32>
    %68 = vector.shape_cast %67 : vector<1x8x8xf32> to vector<8x8xf32>
    %69 = arith.truncf %68 : vector<8x8xf32> to vector<8x8xbf16>
    %c3 = arith.constant 3 : index
    %c0_30 = arith.constant 0 : index
    %c0_31 = arith.constant 0 : index
    %70 = vector.load %arg9[%c3, %c0_30, %c0_31] : memref<4x8x32xbf16, #tpu.memory_space<vmem>>, vector<1x8x32xbf16>
    %71 = vector.shape_cast %70 : vector<1x8x32xbf16> to vector<8x32xbf16>
    %cst_32 = arith.constant dense<0.000000e+00> : vector<8x32xf32>
    %72 = tpu.matmul %69, %71, %cst_32 {dimension_numbers = #tpu.dot_dimension_numbers<[1], [0], [0], [1], [0, 0, 1, 1], [], []>} : vector<8x8xbf16>, vector<8x32xbf16>, vector<8x32xf32> -> vector<8x32xf32>
    %73 = arith.addf %66, %72 : vector<8x32xf32>
    %74 = arith.addf %7, %73 : vector<8x32xf32>
    %c0_33 = arith.constant 0 : index
    %c0_34 = arith.constant 0 : index
    %75 = vector.load %arg10[%c0_33, %c0_34] : memref<1x32xf32, #tpu.memory_space<vmem>>, vector<1x32xf32>
    %76 = vector.broadcast %75 : vector<1x32xf32> to vector<8x32xf32>
    %77 = arith.addf %74, %76 : vector<8x32xf32>
    %c0_35 = arith.constant 0 : index
    %c0_36 = arith.constant 0 : index
    %78 = vector.load %arg11[%c0_35, %c0_36] : memref<1x32xf32, #tpu.memory_space<vmem>>, vector<1x32xf32>
    %c0_37 = arith.constant 0 : index
    %c0_38 = arith.constant 0 : index
    %79 = vector.load %arg12[%c0_37, %c0_38] : memref<1x32xf32, #tpu.memory_space<vmem>>, vector<1x32xf32>
    %cst_39 = arith.constant dense<0.000000e+00> : vector<8xf32>
    %80 = vector.multi_reduction <add>, %77, %cst_39 [1] : vector<8x32xf32> to vector<8xf32>
    %81 = vector.shape_cast %80 : vector<8xf32> to vector<8x1xf32>
    %cst_40 = arith.constant 3.200000e+01 : f32
    %82 = vector.broadcast %cst_40 : f32 to vector<8x1xf32>
    %83 = arith.divf %81, %82 : vector<8x1xf32>
    %84 = vector.broadcast %83 : vector<8x1xf32> to vector<8x32xf32>
    %85 = arith.subf %77, %84 : vector<8x32xf32>
    %86 = arith.mulf %85, %85 : vector<8x32xf32>
    %cst_41 = arith.constant dense<0.000000e+00> : vector<8xf32>
    %87 = vector.multi_reduction <add>, %86, %cst_41 [1] : vector<8x32xf32> to vector<8xf32>
    %88 = vector.shape_cast %87 : vector<8xf32> to vector<8x1xf32>
    %cst_42 = arith.constant 3.200000e+01 : f32
    %89 = vector.broadcast %cst_42 : f32 to vector<8x1xf32>
    %90 = arith.divf %88, %89 : vector<8x1xf32>
    %91 = vector.broadcast %83 : vector<8x1xf32> to vector<8x32xf32>
    %92 = arith.subf %77, %91 : vector<8x32xf32>
    %cst_43 = arith.constant 9.99999974E-6 : f32
    %93 = vector.broadcast %cst_43 : f32 to vector<8x1xf32>
    %94 = arith.addf %90, %93 : vector<8x1xf32>
    %95 = math.rsqrt %94 : vector<8x1xf32>
    %96 = vector.broadcast %95 : vector<8x1xf32> to vector<8x32xf32>
    %97 = arith.mulf %92, %96 : vector<8x32xf32>
    %98 = vector.broadcast %78 : vector<1x32xf32> to vector<8x32xf32>
    %99 = arith.mulf %97, %98 : vector<8x32xf32>
    %100 = vector.broadcast %79 : vector<1x32xf32> to vector<8x32xf32>
    %101 = arith.addf %99, %100 : vector<8x32xf32>
    %102 = arith.truncf %101 : vector<8x32xf32> to vector<8x32xbf16>
    %c0_44 = arith.constant 0 : index
    %c0_45 = arith.constant 0 : index
    %103 = vector.load %arg13[%c0_44, %c0_45] : memref<32x128xbf16, #tpu.memory_space<vmem>>, vector<32x128xbf16>
    %cst_46 = arith.constant dense<0.000000e+00> : vector<8x128xf32>
    %104 = tpu.matmul %102, %103, %cst_46 {dimension_numbers = #tpu.dot_dimension_numbers<[1], [0], [0], [1], [0, 0, 1, 1], [], []>} : vector<8x32xbf16>, vector<32x128xbf16>, vector<8x128xf32> -> vector<8x128xf32>
    %c0_47 = arith.constant 0 : index
    %c0_48 = arith.constant 0 : index
    %105 = vector.load %arg14[%c0_47, %c0_48] : memref<1x128xf32, #tpu.memory_space<vmem>>, vector<1x128xf32>
    %106 = vector.broadcast %105 : vector<1x128xf32> to vector<8x128xf32>
    %107 = arith.addf %104, %106 : vector<8x128xf32>
    %108 = arith.mulf %107, %107 : vector<8x128xf32>
    %109 = arith.mulf %107, %108 : vector<8x128xf32>
    %cst_49 = arith.constant 4.471500e-02 : f32
    %110 = vector.broadcast %cst_49 : f32 to vector<8x128xf32>
    %111 = arith.mulf %110, %109 : vector<8x128xf32>
    %112 = arith.addf %107, %111 : vector<8x128xf32>
    %cst_50 = arith.constant 0.797884583 : f32
    %113 = vector.broadcast %cst_50 : f32 to vector<8x128xf32>
    %114 = arith.mulf %113, %112 : vector<8x128xf32>
    %115 = math.tanh %114 : vector<8x128xf32>
    %cst_51 = arith.constant 1.000000e+00 : f32
    %116 = vector.broadcast %cst_51 : f32 to vector<8x128xf32>
    %117 = arith.addf %116, %115 : vector<8x128xf32>
    %cst_52 = arith.constant 5.000000e-01 : f32
    %118 = vector.broadcast %cst_52 : f32 to vector<8x128xf32>
    %119 = arith.mulf %118, %117 : vector<8x128xf32>
    %120 = arith.mulf %107, %119 : vector<8x128xf32>
    %121 = arith.truncf %120 : vector<8x128xf32> to vector<8x128xbf16>
    %c0_53 = arith.constant 0 : index
    %c0_54 = arith.constant 0 : index
    %122 = vector.load %arg15[%c0_53, %c0_54] : memref<128x32xbf16, #tpu.memory_space<vmem>>, vector<128x32xbf16>
    %cst_55 = arith.constant dense<0.000000e+00> : vector<8x32xf32>
    %123 = tpu.matmul %121, %122, %cst_55 {dimension_numbers = #tpu.dot_dimension_numbers<[1], [0], [0], [1], [0, 0, 1, 1], [], []>} : vector<8x128xbf16>, vector<128x32xbf16>, vector<8x32xf32> -> vector<8x32xf32>
    %124 = arith.addf %77, %123 : vector<8x32xf32>
    %c0_56 = arith.constant 0 : index
    %c0_57 = arith.constant 0 : index
    %125 = vector.load %arg16[%c0_56, %c0_57] : memref<1x32xf32, #tpu.memory_space<vmem>>, vector<1x32xf32>
    %126 = vector.broadcast %125 : vector<1x32xf32> to vector<8x32xf32>
    %127 = arith.addf %124, %126 : vector<8x32xf32>
    %c0_58 = arith.constant 0 : index
    %c0_59 = arith.constant 0 : index
    %c0_60 = arith.constant 0 : index
    %128 = vector.load %arg17[%c0_58, %c0_59, %c0_60] : memref<1x8x32xf32, #tpu.memory_space<vmem>>, vector<1x8x32xf32>
    %129 = vector.shape_cast %128 : vector<1x8x32xf32> to vector<8x32xf32>
    %130 = vector.shape_cast %127 : vector<8x32xf32> to vector<1x8x32xf32>
    tpu.vector_store %arg17[%c0_58, %c0_59, %c0_60], %130 {strides = array<i32>} : memref<1x8x32xf32, #tpu.memory_space<vmem>>, vector<1x8x32xf32>,
    %cst_61 = arith.constant dense<0.000000e+00> : vector<8x16xf32>
    %131 = vector.multi_reduction <add>, %41, %cst_61 [0] : vector<4x8x16xf32> to vector<8x16xf32>
    %cst_62 = arith.constant 4.000000e+00 : f32
    %132 = vector.broadcast %cst_62 : f32 to vector<8x16xf32>
    %133 = arith.divf %131, %132 : vector<8x16xf32>
    %c0_63 = arith.constant 0 : index
    %c0_64 = arith.constant 0 : index
    %c0_65 = arith.constant 0 : index
    %134 = vector.load %arg18[%c0_63, %c0_64, %c0_65] : memref<1x8x16xf32, #tpu.memory_space<vmem>>, vector<1x8x16xf32>
    %135 = vector.shape_cast %134 : vector<1x8x16xf32> to vector<8x16xf32>
    %136 = vector.shape_cast %133 : vector<8x16xf32> to vector<1x8x16xf32>
    tpu.vector_store %arg18[%c0_63, %c0_64, %c0_65], %136 {strides = array<i32>} : memref<1x8x16xf32, #tpu.memory_space<vmem>>, vector<1x8x16xf32>,
    %c0_i32_66 = arith.constant 0 : i32
    %137 = arith.cmpi eq, %arg1, %c0_i32_66 : i32
    %138 = arith.extui %137 : i1 to i32
    %c0_i32_67 = arith.constant 0 : i32
    %139 = arith.cmpi ne, %138, %c0_i32_67 : i32
    scf.if %139 {
      %c0_68 = arith.constant 0 : index
      %c0_69 = arith.constant 0 : index
      %140 = vector.load %arg24[%c0_68, %c0_69] : memref<1x16xf32, #tpu.memory_space<vmem>>, vector<1x16xf32>
      %c0_70 = arith.constant 0 : index
      %c0_71 = arith.constant 0 : index
      %c0_72 = arith.constant 0 : index
      %141 = vector.load %arg19[%c0_70, %c0_71, %c0_72] : memref<1x1x16xf32, #tpu.memory_space<vmem>>, vector<1x1x16xf32>
      %142 = vector.shape_cast %141 : vector<1x1x16xf32> to vector<1x16xf32>
      %143 = vector.shape_cast %140 : vector<1x16xf32> to vector<1x1x16xf32>
      tpu.vector_store %arg19[%c0_70, %c0_71, %c0_72], %143 {strides = array<i32>} : memref<1x1x16xf32, #tpu.memory_space<vmem>>, vector<1x1x16xf32>,
    } else {
    }
    return
  }
  func.func @transform_0(%arg0: i32, %arg1: i32) -> (i32, i32, i32) {
    %c0_i32 = arith.constant 0 : i32
    %c0_i32_0 = arith.constant 0 : i32
    %c0_i32_1 = arith.constant 0 : i32
    return %arg0, %c0_i32, %c0_i32_0 : i32, i32, i32
  }
  func.func @transform_1(%arg0: i32, %arg1: i32) -> (i32, i32) {
    %c0_i32 = arith.constant 0 : i32
    %c0_i32_0 = arith.constant 0 : i32
    %c0_i32_1 = arith.constant 0 : i32
    return %c0_i32, %c0_i32_0 : i32, i32
  }
  func.func @transform_2(%arg0: i32, %arg1: i32) -> i32 {
    %c0_i32 = arith.constant 0 : i32
    %c0_i32_0 = arith.constant 0 : i32
    return %c0_i32 : i32
  }
  func.func @transform_3(%arg0: i32, %arg1: i32) -> (i32, i32) {
    %c0_i32 = arith.constant 0 : i32
    %c0_i32_0 = arith.constant 0 : i32
    %c0_i32_1 = arith.constant 0 : i32
    return %c0_i32, %c0_i32_0 : i32, i32
  }
  func.func @transform_4(%arg0: i32, %arg1: i32) -> (i32, i32) {
    %c0_i32 = arith.constant 0 : i32
    %c0_i32_0 = arith.constant 0 : i32
    %c0_i32_1 = arith.constant 0 : i32
    return %c0_i32, %c0_i32_0 : i32, i32
  }
  func.func @transform_5(%arg0: i32, %arg1: i32) -> (i32, i32) {
    %c0_i32 = arith.constant 0 : i32
    %c0_i32_0 = arith.constant 0 : i32
    %c0_i32_1 = arith.constant 0 : i32
    return %c0_i32, %c0_i32_0 : i32, i32
  }
  func.func @transform_6(%arg0: i32, %arg1: i32) -> (i32, i32) {
    %c0_i32 = arith.constant 0 : i32
    %c0_i32_0 = arith.constant 0 : i32
    %c0_i32_1 = arith.constant 0 : i32
    return %c0_i32, %c0_i32_0 : i32, i32
  }
  func.func @transform_7(%arg0: i32, %arg1: i32) -> (i32, i32, i32) {
    %c0_i32 = arith.constant 0 : i32
    %c0_i32_0 = arith.constant 0 : i32
    %c0_i32_1 = arith.constant 0 : i32
    %c0_i32_2 = arith.constant 0 : i32
    return %c0_i32, %c0_i32_0, %c0_i32_1 : i32, i32, i32
  }
  func.func @transform_8(%arg0: i32, %arg1: i32) -> (i32, i32) {
    %c0_i32 = arith.constant 0 : i32
    %c0_i32_0 = arith.constant 0 : i32
    %c0_i32_1 = arith.constant 0 : i32
    return %c0_i32, %c0_i32_0 : i32, i32
  }
  func.func @transform_9(%arg0: i32, %arg1: i32) -> (i32, i32) {
    %c0_i32 = arith.constant 0 : i32
    %c0_i32_0 = arith.constant 0 : i32
    %c0_i32_1 = arith.constant 0 : i32
    return %c0_i32, %c0_i32_0 : i32, i32
  }
  func.func @transform_10(%arg0: i32, %arg1: i32) -> (i32, i32) {
    %c0_i32 = arith.constant 0 : i32
    %c0_i32_0 = arith.constant 0 : i32
    %c0_i32_1 = arith.constant 0 : i32
    return %c0_i32, %c0_i32_0 : i32, i32
  }
  func.func @transform_11(%arg0: i32, %arg1: i32) -> (i32, i32) {
    %c0_i32 = arith.constant 0 : i32
    %c0_i32_0 = arith.constant 0 : i32
    %c0_i32_1 = arith.constant 0 : i32
    return %c0_i32, %c0_i32_0 : i32, i32
  }
  func.func @transform_12(%arg0: i32, %arg1: i32) -> (i32, i32) {
    %c0_i32 = arith.constant 0 : i32
    %c0_i32_0 = arith.constant 0 : i32
    %c0_i32_1 = arith.constant 0 : i32
    return %c0_i32, %c0_i32_0 : i32, i32
  }
  func.func @transform_13(%arg0: i32, %arg1: i32) -> (i32, i32) {
    %c0_i32 = arith.constant 0 : i32
    %c0_i32_0 = arith.constant 0 : i32
    %c0_i32_1 = arith.constant 0 : i32
    return %c0_i32, %c0_i32_0 : i32, i32
  }
  func.func @transform_14(%arg0: i32, %arg1: i32) -> (i32, i32) {
    %c0_i32 = arith.constant 0 : i32
    %c0_i32_0 = arith.constant 0 : i32
    %c0_i32_1 = arith.constant 0 : i32
    return %c0_i32, %c0_i32_0 : i32, i32
  }
  func.func @transform_15(%arg0: i32, %arg1: i32) -> (i32, i32, i32) {
    %c0_i32 = arith.constant 0 : i32
    %c0_i32_0 = arith.constant 0 : i32
    return %arg0, %arg1, %c0_i32 : i32, i32, i32
  }
  func.func @transform_16(%arg0: i32, %arg1: i32) -> (i32, i32, i32) {
    %c0_i32 = arith.constant 0 : i32
    %c0_i32_0 = arith.constant 0 : i32
    return %arg0, %arg1, %c0_i32 : i32, i32, i32
  }
  func.func @transform_17(%arg0: i32, %arg1: i32) -> (i32, i32, i32) {
    %c0_i32 = arith.constant 0 : i32
    %c0_i32_0 = arith.constant 0 : i32
    %c0_i32_1 = arith.constant 0 : i32
    return %arg0, %c0_i32, %c0_i32_0 : i32, i32, i32
  }
}

</mosaic_0001>

<llo_original>
// kernel: syntactic_transformer_forward.2
$region0: #{syntactic_transformer_forward.2}
  #allocation0 [shape = 'u32[]', space=smem, size = 0x4, offset = 0x4, fixed_abs, tag = 'smem constant byte address 0x4 - core index']
  #allocation1 [shape = 'u32[144,128]{1,0:T(1,128)}', space=vmem, size = 0x12000, scoped, tag = 'internal scratch']
  #allocation2 [shape = 'bf16[4,16,8]{2,1,0:T(8,128)(2,1)}', space=vmem, size = 0x4000, scoped, tag = 'scratch operand']
  #allocation3 [shape = 'bf16[4,16,8]{2,1,0:T(8,128)(2,1)}', space=vmem, size = 0x4000, scoped, tag = 'scratch operand']
  #allocation4 [shape = 'bf16[4,16,8]{2,1,0:T(8,128)(2,1)}', space=vmem, size = 0x4000, scoped, tag = 'scratch operand']
  #allocation5 [shape = 'f32[16,1]{1,0:T(8,128)}', space=vmem, size = 0x2000, scoped, tag = 'scratch operand']
  #allocation6 [shape = 'f32[1,16]{1,0:T(1,128)}', space=vmem, size = 0x200, scoped, tag = 'scratch operand']
  #allocation7 [shape = 'f32[1]{0:T(128)S(6)}', space=smem, size = 0x200, scoped, tag = 'scoped memory for syntactic_transformer_forward.2']
  %s0 = inlined_call_operand.vmem [shape: f32[2,16,32], index: 0, kind: input, shape index: {}]
  %s1 = inlined_call_operand.vmem [shape: f32[3,32], index: 1, kind: input, shape index: {}]
  %s2 = inlined_call_operand.<no memory space> [shape: f32[1], index: 2, kind: input, shape index: {}]
  %s3 = inlined_call_operand.vmem [shape: f32[1,32], index: 3, kind: input, shape index: {}]
  %s4 = inlined_call_operand.vmem [shape: f32[1,32], index: 4, kind: input, shape index: {}]
  %s5 = inlined_call_operand.vmem [shape: bf16[32,96], index: 5, kind: input, shape index: {}]
  %s6 = inlined_call_operand.vmem [shape: f32[1,96], index: 6, kind: input, shape index: {}]
  %s7 = inlined_call_operand.vmem [shape: bf16[4,8,32], index: 7, kind: input, shape index: {}]
  %s8 = inlined_call_operand.vmem [shape: f32[1,32], index: 8, kind: input, shape index: {}]
  %s9 = inlined_call_operand.vmem [shape: f32[1,32], index: 9, kind: input, shape index: {}]
  %s10 = inlined_call_operand.vmem [shape: f32[1,32], index: 10, kind: input, shape index: {}]
  %s11 = inlined_call_operand.vmem [shape: bf16[32,128], index: 11, kind: input, shape index: {}]
  %s12 = inlined_call_operand.vmem [shape: f32[1,128], index: 12, kind: input, shape index: {}]
  %s13 = inlined_call_operand.vmem [shape: bf16[128,32], index: 13, kind: input, shape index: {}]
  %s14 = inlined_call_operand.vmem [shape: f32[1,32], index: 14, kind: input, shape index: {}]
  %s15 = inlined_call_operand.vmem [shape: f32[2,16,32], index: 15, kind: output, shape index: {}]
  %s16 = sld [smem:[#allocation0]]
  $region97: #{syntactic_transformer_forward.2} parent=0
    _
  %s18 = ssub.s32 1, %s16
  %s19 = scalar_select 0, %s18, %s16
  %20 = sst [smem:[#allocation7]] %s2
  loop: start=0, step=1, limit=6
  $region2: #{syntactic_transformer_forward.2} parent=0 // loop_pre_header
    _
  $region3: #{syntactic_transformer_forward.2} parent=0 // loop_header
    %s22 = sphi 0, %s26
    %p23 = scmp.ge.s32.totalorder %s22, 6
    %s29 = sphi 0, %s41
    %s30 = sphi 0, %s37
    %s31 = sphi 0, %s29
    %s32 = sphi 0, %s30
    %s33 = sphi 0, %s31
    %s34 = sphi 0, %s32
    %s44 = sphi 0, %s46
    %s47 = sphi 0, %s44
    %s48 = sphi 0, %s47
    %s64 = sphi 0, %s48
    %s68 = sphi 0, %s68
    %s70 = sphi 0, %s68
    %s71 = sphi 0, %s70
    %s85 = sphi 0, %s71
    %s89 = sphi 0, %s89
    %s91 = sphi 0, %s89
    %s92 = sphi 0, %s91
    %s106 = sphi 0, %s92
    %s110 = sphi 0, %s110
    %s112 = sphi 0, %s110
    %s113 = sphi 0, %s112
    %s127 = sphi 0, %s113
    %s131 = sphi 0, %s131
    %s133 = sphi 0, %s131
    %s134 = sphi 0, %s133
    %s148 = sphi 0, %s134
    %s152 = sphi 0, %s152
    %s154 = sphi 0, %s152
    %s155 = sphi 0, %s154
    %s169 = sphi 0, %s155
    %s173 = sphi 0, %s173
    %s175 = sphi 0, %s173
    %s176 = sphi 0, %s175
    %s190 = sphi 0, %s176
    %s194 = sphi 0, %s194
    %s196 = sphi 0, %s194
    %s197 = sphi 0, %s196
    %s211 = sphi 0, %s197
    %s215 = sphi 0, %s215
    %s217 = sphi 0, %s215
    %s218 = sphi 0, %s217
    %s232 = sphi 0, %s218
    %s236 = sphi 0, %s236
    %s238 = sphi 0, %s236
    %s239 = sphi 0, %s238
    %s253 = sphi 0, %s239
    %s257 = sphi 0, %s257
    %s259 = sphi 0, %s257
    %s260 = sphi 0, %s259
    %s274 = sphi 0, %s260
    %s278 = sphi 0, %s278
    %s280 = sphi 0, %s278
    %s281 = sphi 0, %s280
    %s295 = sphi 0, %s281
    %s299 = sphi 0, %s299
    %s301 = sphi 0, %s299
    %s302 = sphi 0, %s301
    %s316 = sphi 0, %s302
    %s320 = sphi 0, %s320
    %s322 = sphi 0, %s320
    %s323 = sphi 0, %s322
    %s337 = sphi 0, %s323
    %s341 = sphi 0, %s341
    %s343 = sphi 0, %s341
    %s344 = sphi 0, %s343
    %s358 = sphi 0, %s344
    %s366 = sphi 0, %s368
    %s369 = sphi 0, %s366
    %s370 = sphi 0, %s369
    %s386 = sphi 0, %s370
  $region4: #{syntactic_transformer_forward.2} parent=0 // loop_header_branch
    %25 = sbr.rel (%p23) target = $region8
  $region5: #{syntactic_transformer_forward.2} parent=0 // loop_body
    %s27 = ssub.s32 %s22, 1
    %s28 = ssub.s32 %s22, 2
    %s35 = sadd.s32 1, %s30
    %p36 = scmp.ge.s32.totalorder %s35, 2
    %s37 = scalar_select %p36, 0, %s35
    %s38 = sadd.s32 1, %s29
    %s39 = scalar_select %p36, %s38, %s29
    %p40 = scmp.ge.s32.totalorder %s39, 2
    %s41 = scalar_select %p40, 0, %s39
    %s42 = ssub.s32 %s29, %s41
    %p43 = scmp.eq.s32.totalorder %s42, 0
    %s45 = sadd.s32 %s44, 1
    %s46 = scalar_select %p43, %s44, %s45
    %p49 = pneg %p43
    %p50 = scmp.eq.s32.totalorder %s22, 3
    %p51 = por %p49, %p50
    %p52 = scmp.ne.s32.totalorder %s44, %s47
    %p53 = scmp.eq.s32.totalorder %s22, 0
    %p54 = por %p52, %p53
    %p55 = scmp.ne.s32.totalorder %s44, %s47
    %p56 = scmp.eq.s32.totalorder %s27, 3
    %p57 = por %p55, %p56
    %p58 = scmp.ne.s32.totalorder %s47, %s48
    %p59 = scmp.eq.s32.totalorder %s27, 0
    %p60 = por %p58, %p59
    %p61 = scmp.ne.s32.totalorder %s47, %s48
    %p62 = scmp.eq.s32.totalorder %s28, 3
    %p63 = por %p61, %p62
    %p65 = scmp.ne.s32.totalorder %s48, %s64
    %p66 = scmp.eq.s32.totalorder %s28, 0
    %p67 = por %p65, %p66
    %s69 = sadd.s32 %s68, 1
    %p72 = scmp.eq.s32.totalorder %s22, 3
    %p73 = scmp.ne.s32.totalorder %s68, %s70
    %p74 = scmp.eq.s32.totalorder %s22, 0
    %p75 = por %p73, %p74
    %p76 = scmp.ne.s32.totalorder %s68, %s70
    %p77 = scmp.eq.s32.totalorder %s27, 3
    %p78 = por %p76, %p77
    %p79 = scmp.ne.s32.totalorder %s70, %s71
    %p80 = scmp.eq.s32.totalorder %s27, 0
    %p81 = por %p79, %p80
    %p82 = scmp.ne.s32.totalorder %s70, %s71
    %p83 = scmp.eq.s32.totalorder %s28, 3
    %p84 = por %p82, %p83
    %p86 = scmp.ne.s32.totalorder %s71, %s85
    %p87 = scmp.eq.s32.totalorder %s28, 0
    %p88 = por %p86, %p87
    %s90 = sadd.s32 %s89, 1
    %p93 = scmp.eq.s32.totalorder %s22, 3
    %p94 = scmp.ne.s32.totalorder %s89, %s91
    %p95 = scmp.eq.s32.totalorder %s22, 0
    %p96 = por %p94, %p95
    %p97 = scmp.ne.s32.totalorder %s89, %s91
    %p98 = scmp.eq.s32.totalorder %s27, 3
    %p99 = por %p97, %p98
    %p100 = scmp.ne.s32.totalorder %s91, %s92
    %p101 = scmp.eq.s32.totalorder %s27, 0
    %p102 = por %p100, %p101
    %p103 = scmp.ne.s32.totalorder %s91, %s92
    %p104 = scmp.eq.s32.totalorder %s28, 3
    %p105 = por %p103, %p104
    %p107 = scmp.ne.s32.totalorder %s92, %s106
    %p108 = scmp.eq.s32.totalorder %s28, 0
    %p109 = por %p107, %p108
    %s111 = sadd.s32 %s110, 1
    %p114 = scmp.eq.s32.totalorder %s22, 3
    %p115 = scmp.ne.s32.totalorder %s110, %s112
    %p116 = scmp.eq.s32.totalorder %s22, 0
    %p117 = por %p115, %p116
    %p118 = scmp.ne.s32.totalorder %s110, %s112
    %p119 = scmp.eq.s32.totalorder %s27, 3
    %p120 = por %p118, %p119
    %p121 = scmp.ne.s32.totalorder %s112, %s113
    %p122 = scmp.eq.s32.totalorder %s27, 0
    %p123 = por %p121, %p122
    %p124 = scmp.ne.s32.totalorder %s112, %s113
    %p125 = scmp.eq.s32.totalorder %s28, 3
    %p126 = por %p124, %p125
    %p128 = scmp.ne.s32.totalorder %s113, %s127
    %p129 = scmp.eq.s32.totalorder %s28, 0
    %p130 = por %p128, %p129
    %s132 = sadd.s32 %s131, 1
    %p135 = scmp.eq.s32.totalorder %s22, 3
    %p136 = scmp.ne.s32.totalorder %s131, %s133
    %p137 = scmp.eq.s32.totalorder %s22, 0
    %p138 = por %p136, %p137
    %p139 = scmp.ne.s32.totalorder %s131, %s133
    %p140 = scmp.eq.s32.totalorder %s27, 3
    %p141 = por %p139, %p140
    %p142 = scmp.ne.s32.totalorder %s133, %s134
    %p143 = scmp.eq.s32.totalorder %s27, 0
    %p144 = por %p142, %p143
    %p145 = scmp.ne.s32.totalorder %s133, %s134
    %p146 = scmp.eq.s32.totalorder %s28, 3
    %p147 = por %p145, %p146
    %p149 = scmp.ne.s32.totalorder %s134, %s148
    %p150 = scmp.eq.s32.totalorder %s28, 0
    %p151 = por %p149, %p150
    %s153 = sadd.s32 %s152, 1
    %p156 = scmp.eq.s32.totalorder %s22, 3
    %p157 = scmp.ne.s32.totalorder %s152, %s154
    %p158 = scmp.eq.s32.totalorder %s22, 0
    %p159 = por %p157, %p158
    %p160 = scmp.ne.s32.totalorder %s152, %s154
    %p161 = scmp.eq.s32.totalorder %s27, 3
    %p162 = por %p160, %p161
    %p163 = scmp.ne.s32.totalorder %s154, %s155
    %p164 = scmp.eq.s32.totalorder %s27, 0
    %p165 = por %p163, %p164
    %p166 = scmp.ne.s32.totalorder %s154, %s155
    %p167 = scmp.eq.s32.totalorder %s28, 3
    %p168 = por %p166, %p167
    %p170 = scmp.ne.s32.totalorder %s155, %s169
    %p171 = scmp.eq.s32.totalorder %s28, 0
    %p172 = por %p170, %p171
    %s174 = sadd.s32 %s173, 1
    %p177 = scmp.eq.s32.totalorder %s22, 3
    %p178 = scmp.ne.s32.totalorder %s173, %s175
    %p179 = scmp.eq.s32.totalorder %s22, 0
    %p180 = por %p178, %p179
    %p181 = scmp.ne.s32.totalorder %s173, %s175
    %p182 = scmp.eq.s32.totalorder %s27, 3
    %p183 = por %p181, %p182
    %p184 = scmp.ne.s32.totalorder %s175, %s176
    %p185 = scmp.eq.s32.totalorder %s27, 0
    %p186 = por %p184, %p185
    %p187 = scmp.ne.s32.totalorder %s175, %s176
    %p188 = scmp.eq.s32.totalorder %s28, 3
    %p189 = por %p187, %p188
    %p191 = scmp.ne.s32.totalorder %s176, %s190
    %p192 = scmp.eq.s32.totalorder %s28, 0
    %p193 = por %p191, %p192
    %s195 = sadd.s32 %s194, 1
    %p198 = scmp.eq.s32.totalorder %s22, 3
    %p199 = scmp.ne.s32.totalorder %s194, %s196
    %p200 = scmp.eq.s32.totalorder %s22, 0
    %p201 = por %p199, %p200
    %p202 = scmp.ne.s32.totalorder %s194, %s196
    %p203 = scmp.eq.s32.totalorder %s27, 3
    %p204 = por %p202, %p203
    %p205 = scmp.ne.s32.totalorder %s196, %s197
    %p206 = scmp.eq.s32.totalorder %s27, 0
    %p207 = por %p205, %p206
    %p208 = scmp.ne.s32.totalorder %s196, %s197
    %p209 = scmp.eq.s32.totalorder %s28, 3
    %p210 = por %p208, %p209
    %p212 = scmp.ne.s32.totalorder %s197, %s211
    %p213 = scmp.eq.s32.totalorder %s28, 0
    %p214 = por %p212, %p213
    %s216 = sadd.s32 %s215, 1
    %p219 = scmp.eq.s32.totalorder %s22, 3
    %p220 = scmp.ne.s32.totalorder %s215, %s217
    %p221 = scmp.eq.s32.totalorder %s22, 0
    %p222 = por %p220, %p221
    %p223 = scmp.ne.s32.totalorder %s215, %s217
    %p224 = scmp.eq.s32.totalorder %s27, 3
    %p225 = por %p223, %p224
    %p226 = scmp.ne.s32.totalorder %s217, %s218
    %p227 = scmp.eq.s32.totalorder %s27, 0
    %p228 = por %p226, %p227
    %p229 = scmp.ne.s32.totalorder %s217, %s218
    %p230 = scmp.eq.s32.totalorder %s28, 3
    %p231 = por %p229, %p230
    %p233 = scmp.ne.s32.totalorder %s218, %s232
    %p234 = scmp.eq.s32.totalorder %s28, 0
    %p235 = por %p233, %p234
    %s237 = sadd.s32 %s236, 1
    %p240 = scmp.eq.s32.totalorder %s22, 3
    %p241 = scmp.ne.s32.totalorder %s236, %s238
    %p242 = scmp.eq.s32.totalorder %s22, 0
    %p243 = por %p241, %p242
    %p244 = scmp.ne.s32.totalorder %s236, %s238
    %p245 = scmp.eq.s32.totalorder %s27, 3
    %p246 = por %p244, %p245
    %p247 = scmp.ne.s32.totalorder %s238, %s239
    %p248 = scmp.eq.s32.totalorder %s27, 0
    %p249 = por %p247, %p248
    %p250 = scmp.ne.s32.totalorder %s238, %s239
    %p251 = scmp.eq.s32.totalorder %s28, 3
    %p252 = por %p250, %p251
    %p254 = scmp.ne.s32.totalorder %s239, %s253
    %p255 = scmp.eq.s32.totalorder %s28, 0
    %p256 = por %p254, %p255
    %s258 = sadd.s32 %s257, 1
    %p261 = scmp.eq.s32.totalorder %s22, 3
    %p262 = scmp.ne.s32.totalorder %s257, %s259
    %p263 = scmp.eq.s32.totalorder %s22, 0
    %p264 = por %p262, %p263
    %p265 = scmp.ne.s32.totalorder %s257, %s259
    %p266 = scmp.eq.s32.totalorder %s27, 3
    %p267 = por %p265, %p266
    %p268 = scmp.ne.s32.totalorder %s259, %s260
    %p269 = scmp.eq.s32.totalorder %s27, 0
    %p270 = por %p268, %p269
    %p271 = scmp.ne.s32.totalorder %s259, %s260
    %p272 = scmp.eq.s32.totalorder %s28, 3
    %p273 = por %p271, %p272
    %p275 = scmp.ne.s32.totalorder %s260, %s274
    %p276 = scmp.eq.s32.totalorder %s28, 0
    %p277 = por %p275, %p276
    %s279 = sadd.s32 %s278, 1
    %p282 = scmp.eq.s32.totalorder %s22, 3
    %p283 = scmp.ne.s32.totalorder %s278, %s280
    %p284 = scmp.eq.s32.totalorder %s22, 0
    %p285 = por %p283, %p284
    %p286 = scmp.ne.s32.totalorder %s278, %s280
    %p287 = scmp.eq.s32.totalorder %s27, 3
    %p288 = por %p286, %p287
    %p289 = scmp.ne.s32.totalorder %s280, %s281
    %p290 = scmp.eq.s32.totalorder %s27, 0
    %p291 = por %p289, %p290
    %p292 = scmp.ne.s32.totalorder %s280, %s281
    %p293 = scmp.eq.s32.totalorder %s28, 3
    %p294 = por %p292, %p293
    %p296 = scmp.ne.s32.totalorder %s281, %s295
    %p297 = scmp.eq.s32.totalorder %s28, 0
    %p298 = por %p296, %p297
    %s300 = sadd.s32 %s299, 1
    %p303 = scmp.eq.s32.totalorder %s22, 3
    %p304 = scmp.ne.s32.totalorder %s299, %s301
    %p305 = scmp.eq.s32.totalorder %s22, 0
    %p306 = por %p304, %p305
    %p307 = scmp.ne.s32.totalorder %s299, %s301
    %p308 = scmp.eq.s32.totalorder %s27, 3
    %p309 = por %p307, %p308
    %p310 = scmp.ne.s32.totalorder %s301, %s302
    %p311 = scmp.eq.s32.totalorder %s27, 0
    %p312 = por %p310, %p311
    %p313 = scmp.ne.s32.totalorder %s301, %s302
    %p314 = scmp.eq.s32.totalorder %s28, 3
    %p315 = por %p313, %p314
    %p317 = scmp.ne.s32.totalorder %s302, %s316
    %p318 = scmp.eq.s32.totalorder %s28, 0
    %p319 = por %p317, %p318
    %s321 = sadd.s32 %s320, 1
    %p324 = scmp.eq.s32.totalorder %s22, 3
    %p325 = scmp.ne.s32.totalorder %s320, %s322
    %p326 = scmp.eq.s32.totalorder %s22, 0
    %p327 = por %p325, %p326
    %p328 = scmp.ne.s32.totalorder %s320, %s322
    %p329 = scmp.eq.s32.totalorder %s27, 3
    %p330 = por %p328, %p329
    %p331 = scmp.ne.s32.totalorder %s322, %s323
    %p332 = scmp.eq.s32.totalorder %s27, 0
    %p333 = por %p331, %p332
    %p334 = scmp.ne.s32.totalorder %s322, %s323
    %p335 = scmp.eq.s32.totalorder %s28, 3
    %p336 = por %p334, %p335
    %p338 = scmp.ne.s32.totalorder %s323, %s337
    %p339 = scmp.eq.s32.totalorder %s28, 0
    %p340 = por %p338, %p339
    %s342 = sadd.s32 %s341, 1
    %p345 = scmp.eq.s32.totalorder %s22, 3
    %p346 = scmp.ne.s32.totalorder %s341, %s343
    %p347 = scmp.eq.s32.totalorder %s22, 0
    %p348 = por %p346, %p347
    %p349 = scmp.ne.s32.totalorder %s341, %s343
    %p350 = scmp.eq.s32.totalorder %s27, 3
    %p351 = por %p349, %p350
    %p352 = scmp.ne.s32.totalorder %s343, %s344
    %p353 = scmp.eq.s32.totalorder %s27, 0
    %p354 = por %p352, %p353
    %p355 = scmp.ne.s32.totalorder %s343, %s344
    %p356 = scmp.eq.s32.totalorder %s28, 3
    %p357 = por %p355, %p356
    %p359 = scmp.ne.s32.totalorder %s344, %s358
    %p360 = scmp.eq.s32.totalorder %s28, 0
    %p361 = por %p359, %p360
    %s362 = ssub.s32 %s29, %s41
    %s363 = ssub.s32 %s30, %s37
    %s364 = sor.u32 %s362, %s363
    %p365 = scmp.eq.s32.totalorder %s364, 0
    %s367 = sadd.s32 %s366, 1
    %s368 = scalar_select %p365, %s366, %s367
    %p371 = pneg %p365
    %p372 = scmp.eq.s32.totalorder %s22, 3
    %p373 = por %p371, %p372
    %p374 = scmp.ne.s32.totalorder %s366, %s369
    %p375 = scmp.eq.s32.totalorder %s22, 0
    %p376 = por %p374, %p375
    %p377 = scmp.ne.s32.totalorder %s366, %s369
    %p378 = scmp.eq.s32.totalorder %s27, 3
    %p379 = por %p377, %p378
    %p380 = scmp.ne.s32.totalorder %s369, %s370
    %p381 = scmp.eq.s32.totalorder %s27, 0
    %p382 = por %p380, %p381
    %p383 = scmp.ne.s32.totalorder %s369, %s370
    %p384 = scmp.eq.s32.totalorder %s28, 3
    %p385 = por %p383, %p384
    %p387 = scmp.ne.s32.totalorder %s370, %s386
    %p388 = scmp.eq.s32.totalorder %s28, 0
    %p389 = por %p387, %p388
    %p390 = scmp.le.s32.totalorder 1, %s22
    %p391 = scmp.lt.s32.totalorder %s22, 5
    %p392 = pnand %p390, %p391
    %p393 = pneg %p392
    // Predicated region
    $region9: #{syntactic_transformer_forward.2} parent=5 // pred_check
      _
    $region10: #{syntactic_transformer_forward.2} parent=5 // pred_check_branch
      %395 = sbr.rel (%p392) target = $region12
    $region11: #{syntactic_transformer_forward.2} parent=5 // pred_region
      %s396 = ssub.s32 %s22, 1
      // Predicated region
      $region13: #{syntactic_transformer_forward.2} parent=11 // pred_check
        %p397 = pneg %p81
      $region14: #{syntactic_transformer_forward.2} parent=11 // pred_check_branch
        %399 = sbr.rel (%p397) target = $region16
      $region15: #{syntactic_transformer_forward.2} parent=11 // pred_region
        _
      $region16: #{syntactic_transformer_forward.2} parent=11 // pred_fallthru
        _
      // Predicated region
      $region17: #{syntactic_transformer_forward.2} parent=11 // pred_check
        %p400 = pneg %p102
      $region18: #{syntactic_transformer_forward.2} parent=11 // pred_check_branch
        %402 = sbr.rel (%p400) target = $region20
      $region19: #{syntactic_transformer_forward.2} parent=11 // pred_region
        _
      $region20: #{syntactic_transformer_forward.2} parent=11 // pred_fallthru
        _
      // Predicated region
      $region21: #{syntactic_transformer_forward.2} parent=11 // pred_check
        %p403 = pneg %p123
      $region22: #{syntactic_transformer_forward.2} parent=11 // pred_check_branch
        %405 = sbr.rel (%p403) target = $region24
      $region23: #{syntactic_transformer_forward.2} parent=11 // pred_region
        _
      $region24: #{syntactic_transformer_forward.2} parent=11 // pred_fallthru
        _
      // Predicated region
      $region25: #{syntactic_transformer_forward.2} parent=11 // pred_check
        %p406 = pneg %p144
      $region26: #{syntactic_transformer_forward.2} parent=11 // pred_check_branch
        %408 = sbr.rel (%p406) target = $region28
      $region27: #{syntactic_transformer_forward.2} parent=11 // pred_region
        _
      $region28: #{syntactic_transformer_forward.2} parent=11 // pred_fallthru
        _
      // Predicated region
      $region29: #{syntactic_transformer_forward.2} parent=11 // pred_check
        %p409 = pneg %p165
      $region30: #{syntactic_transformer_forward.2} parent=11 // pred_check_branch
        %411 = sbr.rel (%p409) target = $region32
      $region31: #{syntactic_transformer_forward.2} parent=11 // pred_region
        _
      $region32: #{syntactic_transformer_forward.2} parent=11 // pred_fallthru
        _
      // Predicated region
      $region33: #{syntactic_transformer_forward.2} parent=11 // pred_check
        %p412 = pneg %p186
      $region34: #{syntactic_transformer_forward.2} parent=11 // pred_check_branch
        %414 = sbr.rel (%p412) target = $region36
      $region35: #{syntactic_transformer_forward.2} parent=11 // pred_region
        _
      $region36: #{syntactic_transformer_forward.2} parent=11 // pred_fallthru
        _
      // Predicated region
      $region37: #{syntactic_transformer_forward.2} parent=11 // pred_check
        %p415 = pneg %p207
      $region38: #{syntactic_transformer_forward.2} parent=11 // pred_check_branch
        %417 = sbr.rel (%p415) target = $region40
      $region39: #{syntactic_transformer_forward.2} parent=11 // pred_region
        _
      $region40: #{syntactic_transformer_forward.2} parent=11 // pred_fallthru
        _
      // Predicated region
      $region41: #{syntactic_transformer_forward.2} parent=11 // pred_check
        %p418 = pneg %p228
      $region42: #{syntactic_transformer_forward.2} parent=11 // pred_check_branch
        %420 = sbr.rel (%p418) target = $region44
      $region43: #{syntactic_transformer_forward.2} parent=11 // pred_region
        _
      $region44: #{syntactic_transformer_forward.2} parent=11 // pred_fallthru
        _
      // Predicated region
      $region45: #{syntactic_transformer_forward.2} parent=11 // pred_check
        %p421 = pneg %p249
      $region46: #{syntactic_transformer_forward.2} parent=11 // pred_check_branch
        %423 = sbr.rel (%p421) target = $region48
      $region47: #{syntactic_transformer_forward.2} parent=11 // pred_region
        _
      $region48: #{syntactic_transformer_forward.2} parent=11 // pred_fallthru
        _
      // Predicated region
      $region49: #{syntactic_transformer_forward.2} parent=11 // pred_check
        %p424 = pneg %p270
      $region50: #{syntactic_transformer_forward.2} parent=11 // pred_check_branch
        %426 = sbr.rel (%p424) target = $region52
      $region51: #{syntactic_transformer_forward.2} parent=11 // pred_region
        _
      $region52: #{syntactic_transformer_forward.2} parent=11 // pred_fallthru
        _
      // Predicated region
      $region53: #{syntactic_transformer_forward.2} parent=11 // pred_check
        %p427 = pneg %p291
      $region54: #{syntactic_transformer_forward.2} parent=11 // pred_check_branch
        %429 = sbr.rel (%p427) target = $region56
      $region55: #{syntactic_transformer_forward.2} parent=11 // pred_region
        _
      $region56: #{syntactic_transformer_forward.2} parent=11 // pred_fallthru
        _
      // Predicated region
      $region57: #{syntactic_transformer_forward.2} parent=11 // pred_check
        %p430 = pneg %p312
      $region58: #{syntactic_transformer_forward.2} parent=11 // pred_check_branch
        %432 = sbr.rel (%p430) target = $region60
      $region59: #{syntactic_transformer_forward.2} parent=11 // pred_region
        _
      $region60: #{syntactic_transformer_forward.2} parent=11 // pred_fallthru
        _
      // Predicated region
      $region61: #{syntactic_transformer_forward.2} parent=11 // pred_check
        %p433 = pneg %p333
      $region62: #{syntactic_transformer_forward.2} parent=11 // pred_check_branch
        %435 = sbr.rel (%p433) target = $region64
      $region63: #{syntactic_transformer_forward.2} parent=11 // pred_region
        _
      $region64: #{syntactic_transformer_forward.2} parent=11 // pred_fallthru
        _
      // Predicated region
      $region65: #{syntactic_transformer_forward.2} parent=11 // pred_check
        %p436 = pneg %p354
      $region66: #{syntactic_transformer_forward.2} parent=11 // pred_check_branch
        %438 = sbr.rel (%p436) target = $region68
      $region67: #{syntactic_transformer_forward.2} parent=11 // pred_region
        _
      $region68: #{syntactic_transformer_forward.2} parent=11 // pred_fallthru
        _
    $region12: #{syntactic_transformer_forward.2} parent=5 // pred_fallthru
      _
    %p439 = scmp.lt.s32.totalorder %s22, 4
    // Predicated region
    $region69: #{syntactic_transformer_forward.2} parent=5 // pred_check
      %p440 = pneg %p439
    $region70: #{syntactic_transformer_forward.2} parent=5 // pred_check_branch
      %442 = sbr.rel (%p440) target = $region72
    $region71: #{syntactic_transformer_forward.2} parent=5 // pred_region
      // Predicated region
      $region73: #{syntactic_transformer_forward.2} parent=71 // pred_check
        %p443 = pneg %p54
      $region74: #{syntactic_transformer_forward.2} parent=71 // pred_check_branch
        %445 = sbr.rel (%p443) target = $region76
      $region75: #{syntactic_transformer_forward.2} parent=71 // pred_region
        %p446 = scmp.lt.s32.totalorder %s29, 1
        %s447 = scalar_select %p446, %s29, 1
        %s448 = smul.addr %s447, 2
        %s449 = smul.addr %s448, 8
        %s450 = scalar_lea.vmem %s0, %s449
      $region76: #{syntactic_transformer_forward.2} parent=71 // pred_fallthru
        _
    $region72: #{syntactic_transformer_forward.2} parent=5 // pred_fallthru
      _
    %p451 = scmp.le.s32.totalorder 1, %s22
    %p452 = scmp.lt.s32.totalorder %s22, 5
    %p453 = pnand %p451, %p452
    %p454 = pneg %p453
    // Predicated region
    $region77: #{syntactic_transformer_forward.2} parent=5 // pred_check
      _
    $region78: #{syntactic_transformer_forward.2} parent=5 // pred_check_branch
      %456 = sbr.rel (%p453) target = $region80
    $region79: #{syntactic_transformer_forward.2} parent=5 // pred_region
      %s457 = ssub.s32 %s22, 1
      %p458 = scmp.lt.s32.totalorder %s31, 1
      %s459 = scalar_select %p458, %s31, 1
      %s460 = smul.addr %s459, 2
      %s461 = smul.addr %s460, 8
      %s462 = scalar_lea.vmem %s0, %s461
      %p463 = pneg %p60
      %p464 = pneg %p57
      %p465 = pneg %p81
      %p466 = pneg %p78
      %p467 = pneg %p102
      %p468 = pneg %p99
      %p469 = pneg %p123
      %p470 = pneg %p120
      %p471 = pneg %p144
      %p472 = pneg %p141
      %p473 = pneg %p165
      %p474 = pneg %p162
      %p475 = pneg %p186
      %p476 = pneg %p183
      %p477 = pneg %p207
      %p478 = pneg %p204
      %p479 = pneg %p228
      %p480 = pneg %p225
      %p481 = pneg %p249
      %p482 = pneg %p246
      %p483 = pneg %p270
      %p484 = pneg %p267
      %p485 = pneg %p291
      %p486 = pneg %p288
      %p487 = pneg %p312
      %p488 = pneg %p309
      %p489 = pneg %p333
      %p490 = pneg %p330
      %p491 = pneg %p354
      %p492 = pneg %p351
      %p493 = pneg %p382
      %p494 = pneg %p379
      %p495 = scmp.lt.s32.totalorder %s31, 1
      %s496 = scalar_select %p495, %s31, 1
      %p497 = scmp.lt.s32.totalorder %s32, 1
      %s498 = scalar_select %p497, %s32, 1
      %s499 = smul.addr %s496, 2
      %s500 = sadd.s32 %s498, %s499
      %s501 = smul.addr %s500, 8
      %s502 = scalar_lea.vmem %s15, %s501
      %p503 = scmp.lt.s32.totalorder %s31, 1
      %s504 = scalar_select %p503, %s31, 1
      %s505 = smul.addr %s504, 2
      %s506 = smul.addr %s505, 8
      %s507 = scalar_lea.vmem %s0, %s506
      %p508 = scmp.lt.s32.totalorder %s31, 1
      %s509 = scalar_select %p508, %s31, 1
      %p510 = scmp.lt.s32.totalorder %s32, 1
      %s511 = scalar_select %p510, %s32, 1
      %s512 = smul.addr %s509, 2
      %s513 = sadd.s32 %s511, %s512
      %s514 = smul.addr %s513, 8
      %s515 = scalar_lea.vmem %s15, %s514
      %s517 = smul.u32 %s32, 8
      %p518 = scmp.eq.s32.totalorder %s32, 0
      // Predicated region
      $region81: #{syntactic_transformer_forward.2} parent=79 // pred_check
        %p519 = pneg %p518
      $region82: #{syntactic_transformer_forward.2} parent=79 // pred_check_branch
        %521 = sbr.rel (%p519) target = $region84
      $region83: #{syntactic_transformer_forward.2} parent=79 // pred_region
        %v522 = vld [vmem:[%s507] sm:$0xff]
        %v523 = vld [vmem:[%s507 + $0x8] sm:$0xff]
        %v524 = vld [vmem:[%s1] sm:$0x7]
        %vm525 = vcmask 261120
        %v527 = vsel %vm525, %v524, 0
        %v530 = vsel %vm525, %v522, 0
        %v533 = vsel %vm525, %v523, 0
        %535 = vmatprep.subr.mxu0 0.0
        %536 = vmatpush1.xpose.msra.mxu0 0.0
        %537 = vmatprep.subr.mxu0 0.0
        %538 = vmatpush1.xpose.msra.mxu0 0.0
        %539 = vmatprep.subr.mxu0 0.0
        %540 = vmatpush1.xpose.msra.mxu0 0.0
        %541 = vmatprep.subr.mxu0 0.0
        %542 = vmatpush1.xpose.msra.mxu0 0.0
        %543 = vmatprep.subr.mxu0 0.0
        %544 = vmatpush1.xpose.msra.mxu0 0.0
        %545 = vmatprep.subr.mxu0 0.0
        %546 = vmatpush1.xpose.msra.mxu0 0.0
        %547 = vmatprep.subr.mxu0 0.0
        %548 = vmatpush1.xpose.msra.mxu0 0.0
        %549 = vmatprep.subr.mxu0 0.0
        %550 = vmatpush1.xpose.msra.mxu0 0.0
        %551 = vmatprep.subr.mxu0 0.0
        %552 = vmatpush1.xpose.msra.mxu0 0.0
        %553 = vmatprep.subr.mxu0 0.0
        %554 = vmatpush1.xpose.msra.mxu0 0.0
        %555 = vmatprep.subr.mxu0 0.0
        %556 = vmatpush1.xpose.msra.mxu0 0.0
        %557 = vmatprep.subr.mxu0 0.0
        %558 = vmatpush1.xpose.msra.mxu0 0.0
        %559 = vmatprep.subr.mxu0 0.0
        %560 = vmatpush1.xpose.msra.mxu0 0.0
        %561 = vmatprep.subr.mxu0 0.0
        %562 = vmatpush1.xpose.msra.mxu0 0.0
        %563 = vmatprep.subr.mxu0 0.0
        %564 = vmatpush1.xpose.msra.mxu0 %v533
        %565 = vmatprep.subr.mxu0 0.0
        %566 = vmatpush1.xpose.msra.mxu0 %v530
        %567 = vmatprep.subr.mxu0 0.0
        %568 = vmatpush2.xpose.msra.mxu0 0.0
        %569 = vmatprep.subr.mxu0 0.0
        %570 = vmatpush2.xpose.msra.mxu0 0.0
        %571 = vmatprep.subr.mxu0 0.0
        %572 = vmatpush2.xpose.msra.mxu0 0.0
        %573 = vmatprep.subr.mxu0 0.0
        %574 = vmatpush2.xpose.msra.mxu0 0.0
        %575 = vmatprep.subr.mxu0 0.0
        %576 = vmatpush2.xpose.msra.mxu0 0.0
        %577 = vmatprep.subr.mxu0 0.0
        %578 = vmatpush2.xpose.msra.mxu0 0.0
        %579 = vmatprep.subr.mxu0 0.0
        %580 = vmatpush2.xpose.msra.mxu0 0.0
        %581 = vmatprep.subr.mxu0 0.0
        %582 = vmatpush2.xpose.msra.mxu0 0.0
        %583 = vmatprep.subr.mxu0 0.0
        %584 = vmatpush2.xpose.msra.mxu0 0.0
        %585 = vmatprep.subr.mxu0 0.0
        %586 = vmatpush2.xpose.msra.mxu0 0.0
        %587 = vmatprep.subr.mxu0 0.0
        %588 = vmatpush2.xpose.msra.mxu0 0.0
        %589 = vmatprep.subr.mxu0 0.0
        %590 = vmatpush2.xpose.msra.mxu0 0.0
        %591 = vmatprep.subr.mxu0 0.0
        %592 = vmatpush2.xpose.msra.mxu0 0.0
        %593 = vmatprep.subr.mxu0 0.0
        %594 = vmatpush2.xpose.msra.mxu0 0.0
        %595 = vmatprep.subr.mxu0 0.0
        %596 = vmatpush2.xpose.msra.mxu0 0.0
        %597 = vmatprep.subr.mxu0 0.0
        %598 = vmatpush2.xpose.msra.mxu0 0.0
        %599 = vmatprep.mubr.f32.mxu0 0.0
        %600 = vmatmul.mubr.f32.gmra.mxu0 %v527
        %v601 = vpop.f32.mrf.mxu0
        %v602 = vadd.f32 0.0, %v601
        %v603 = vpop.f32.mrf.mxu0
        %604 = vdwg.mxu0
        %606 = vrot.lane.b32.xlu0 %v602, 2
        %v607 = vpop.permute.xlu0 %606
        %vm609 = vcmask 15360
        %v610 = vsel %vm609, 0.0, %v607
        %v612 = vrot.slane %v610, 6
        %v614 = vadd.f32 %v602, %v612
        %v615 = vrot.slane %v602, 1
        %616 = vrot.lane.b32.xlu0 %v615, 1
        %v617 = vpop.permute.xlu0 %616
        %vm619 = vcmask 7168
        %v620 = vsel %vm619, 0.0, %v617
        %v622 = vrot.slane %v620, 6
        %v624 = vadd.f32 %v614, %v622
        %s625 = sld [smem:[#allocation7]]
        %v626 = vstv %s625
        %v627 = vadd.f32 %v624, %v626
        %v628 = vtanh.pop %v627
        %vm629 = vcmask 124930
        %630 = vst.msk [vmem:[#allocation6 - $0x2] sm:$0x4] %vm629, %v628
        %v631 = vlaneseq
        %v632 = vshrl.u32 %v631, 7
        %v633 = vadd.s32 %v632, 8
        %v634 = vlaneseq
        %v635 = vand.u32 %v634, 127
        %vm636 = vcmp.eq.s32.totalorder %v632, %v635
        %vm637 = vcmp.eq.s32.totalorder %v633, %v635
        %v638 = vlaneseq
        %v639 = vshrl.u32 %v638, 7
        %v640 = vsub.s32 2, %v639
        %v641 = vrot.slane %v628, %v640
        %v642 = vsel %vm636, %v641, 0.0
        %v643 = vsel %vm637, %v641, 0.0
        %vm644 = vcmask 130048
        %v645 = vsel %vm644, %v642, 0.0
        %646 = vadd.xlane.f32.xlu0 %v645
        %v647 = vpop.xlane.xlu0 %646
        %v648 = vsel %vm644, %v643, 0.0
        %649 = vadd.xlane.f32.xlu0 %v648
        %v650 = vpop.xlane.xlu0 %649
        %651 = vst.msk [vmem:[#allocation5] sm:$0xff] %vm619, %v647
        %652 = vst.msk [vmem:[#allocation5 + $0x8] sm:$0xff] %vm619, %v650
        %v653 = vld [vmem:[%s3] sm:$0x1]
        %v654 = vld [vmem:[%s4] sm:$0x1]
        %v655 = vsel %vm525, %v522, 0.0
        %656 = vadd.xlane.f32.xlu0 %v655
        %v657 = vpop.xlane.xlu0 %656
        %v658 = vsel %vm525, %v523, 0.0
        %659 = vadd.xlane.f32.xlu0 %v658
        %v660 = vpop.xlane.xlu0 %659
        %v661 = vrcp.pop 32.0
        %v662 = vmul.f32 %v657, %v661
        %v663 = vmul.f32 %v660, %v661
        %v664 = vsub.f32 %v522, %v662
        %v665 = vsub.f32 %v523, %v663
        %v666 = vmul.f32 %v664, %v664
        %v667 = vmul.f32 %v665, %v665
        %v668 = vsel %vm525, %v666, 0.0
        %669 = vadd.xlane.f32.xlu0 %v668
        %v670 = vpop.xlane.xlu0 %669
        %v671 = vsel %vm525, %v667, 0.0
        %672 = vadd.xlane.f32.xlu0 %v671
        %v673 = vpop.xlane.xlu0 %672
        %v674 = vmul.f32 %v670, %v661
        %v675 = vmul.f32 %v673, %v661
        %v676 = vadd.f32 %v674, 1e-05
        %v677 = vadd.f32 %v675, 1e-05
        %v678 = vrsqrt.pop %v676
        %v679 = vrsqrt.pop %v677
        %v680 = vmul.f32 %v664, %v678
        %v681 = vmul.f32 %v665, %v679
        %v683 = vlaneseq
        %v684 = vshrl.u32 %v683, 7
        %v685 = vsub.s32 0, %v684
        %v686 = vrot.slane %v653, %v685
        %v688 = vmul.f32 %v680, %v686
        %v689 = vmul.f32 %v681, %v686
        %v691 = vlaneseq
        %v692 = vshrl.u32 %v691, 7
        %v693 = vsub.s32 0, %v692
        %v694 = vrot.slane %v654, %v693
        %v696 = vadd.f32 %v688, %v694
        %v697 = vadd.f32 %v689, %v694
        %v698 = vpack.c.bf16 %v697, %v696
        %v699 = vld [vmem:[%s5] sm:$0xf]
        %v700 = vld [vmem:[%s5 + $0x4] sm:$0xf]
        %v701 = vld [vmem:[%s5 + $0x8] sm:$0xf]
        %v702 = vld [vmem:[%s5 + $0xc] sm:$0xf]
        %v703 = vld [vmem:[%s6] sm:$0x1]
        %v705 = vlaneseq
        %v706 = vshrl.u32 %v705, 7
        %v707 = vsub.s32 0, %v706
        %v708 = vrot.slane %v703, %v707
        %v714 = vunpack.c.l.b16 %v699
        %v715 = vunpack.c.l.b16 %v700
        %v716 = vunpack.c.l.b16 %v701
        %v717 = vunpack.c.l.b16 %v702
        %v718 = vpack.c.b16 %v715, %v714
        %v719 = vpack.c.b16 %v717, %v716
        %v723 = vsel %vm525, %v698, 0
        %725 = vmatprep.subr.bf16.mxu0 0
        %726 = vmatpush1.bf16.msra.mxu0 0
        %727 = vmatprep.subr.bf16.mxu0 0
        %728 = vmatpush1.bf16.msra.mxu0 0
        %729 = vmatprep.subr.bf16.mxu0 0
        %730 = vmatpush1.bf16.msra.mxu0 0
        %731 = vmatprep.subr.bf16.mxu0 0
        %732 = vmatpush1.bf16.msra.mxu0 0
        %733 = vmatprep.subr.bf16.mxu0 0
        %734 = vmatpush1.bf16.msra.mxu0 0
        %735 = vmatprep.subr.bf16.mxu0 0
        %736 = vmatpush1.bf16.msra.mxu0 0
        %737 = vmatprep.subr.bf16.mxu0 0
        %738 = vmatpush1.bf16.msra.mxu0 %v719
        %739 = vmatprep.subr.bf16.mxu0 0
        %740 = vmatpush1.bf16.msra.mxu0 %v718
        %741 = vmatprep.subr.bf16.mxu0 0
        %742 = vmatpush2.bf16.msra.mxu0 0
        %743 = vmatprep.subr.bf16.mxu0 0
        %744 = vmatpush2.bf16.msra.mxu0 0
        %745 = vmatprep.subr.bf16.mxu0 0
        %746 = vmatpush2.bf16.msra.mxu0 0
        %747 = vmatprep.subr.bf16.mxu0 0
        %748 = vmatpush2.bf16.msra.mxu0 0
        %749 = vmatprep.subr.bf16.mxu0 0
        %750 = vmatpush2.bf16.msra.mxu0 0
        %751 = vmatprep.subr.bf16.mxu0 0
        %752 = vmatpush2.bf16.msra.mxu0 0
        %753 = vmatprep.subr.bf16.mxu0 0
        %754 = vmatpush2.bf16.msra.mxu0 0
        %755 = vmatprep.subr.bf16.mxu0 0
        %756 = vmatpush2.bf16.msra.mxu0 0
        %757 = vmatprep.mubr.bf16.mxu0 0
        %758 = vmatmul.mubr.bf16.gmra.mxu0 %v723
        %v759 = vpop.f32.mrf.mxu0
        %v760 = vadd.f32 %v708, %v759
        %v761 = vpop.f32.mrf.mxu0
        %v762 = vpop.f32.mrf.mxu0
        %v763 = vadd.f32 %v708, %v762
        %v764 = vpop.f32.mrf.mxu0
        %765 = vdwg.mxu0
        %v766 = vmul.f32 %v760, 0.35355338
        %v767 = vmul.f32 %v763, 0.35355338
        %v768 = vpack.c.bf16 %v767, %v766
        %v770 = vunpack.c.l.b16 %v768
        %v771 = vunpack.c.h.b16 %v768
        %v772 = vpack.c.b16 %v770, %v770
        %v773 = vpack.c.b16 %v771, %v771
        %vm776 = vcmask 60416
        %777 = vst.msk [vmem:[#allocation2] sm:$0xf] %vm776, %v772
        %778 = vst.msk [vmem:[#allocation2 + $0x4] sm:$0xf] %vm776, %v773
        %v779 = vpack.c.bf16 %v763, %v760
        %v781 = vunpack.c.l.b16 %v779
        %v782 = vunpack.c.h.b16 %v779
        %v783 = vpack.c.b16 %v781, %v781
        %v784 = vpack.c.b16 %v782, %v782
        %785 = vrot.lane.b32.xlu0 %v783, 96
        %v786 = vpop.permute.xlu0 %785
        %787 = vrot.lane.b32.xlu0 %v784, 96
        %v788 = vpop.permute.xlu0 %787
        %791 = vst.msk [vmem:[#allocation3] sm:$0xf] %vm776, %v786
        %792 = vst.msk [vmem:[#allocation3 + $0x4] sm:$0xf] %vm776, %v788
        %793 = vrot.lane.b32.xlu0 %v783, 64
        %v794 = vpop.permute.xlu0 %793
        %795 = vrot.lane.b32.xlu0 %v784, 64
        %v796 = vpop.permute.xlu0 %795
        %799 = vst.msk [vmem:[#allocation4] sm:$0xf] %vm776, %v794
        %800 = vst.msk [vmem:[#allocation4 + $0x4] sm:$0xf] %vm776, %v796
        %801 = vrot.lane.b32.xlu0 %v772, 120
        %v802 = vpop.permute.xlu0 %801
        %803 = vrot.lane.b32.xlu0 %v773, 120
        %v804 = vpop.permute.xlu0 %803
        %s807 = scalar_lea.vmem [#allocation2], 8
        %808 = vst.msk [vmem:[%s807] sm:$0xf] %vm776, %v802
        %809 = vst.msk [vmem:[%s807 + $0x4] sm:$0xf] %vm776, %v804
        %810 = vrot.lane.b32.xlu0 %v783, 88
        %v811 = vpop.permute.xlu0 %810
        %812 = vrot.lane.b32.xlu0 %v784, 88
        %v813 = vpop.permute.xlu0 %812
        %s816 = scalar_lea.vmem [#allocation3], 8
        %817 = vst.msk [vmem:[%s816] sm:$0xf] %vm776, %v811
        %818 = vst.msk [vmem:[%s816 + $0x4] sm:$0xf] %vm776, %v813
        %819 = vrot.lane.b32.xlu0 %v783, 56
        %v820 = vpop.permute.xlu0 %819
        %821 = vrot.lane.b32.xlu0 %v784, 56
        %v822 = vpop.permute.xlu0 %821
        %s825 = scalar_lea.vmem [#allocation4], 8
        %826 = vst.msk [vmem:[%s825] sm:$0xf] %vm776, %v820
        %827 = vst.msk [vmem:[%s825 + $0x4] sm:$0xf] %vm776, %v822
        %828 = vrot.lane.b32.xlu0 %v772, 112
        %v829 = vpop.permute.xlu0 %828
        %830 = vrot.lane.b32.xlu0 %v773, 112
        %v831 = vpop.permute.xlu0 %830
        %s834 = scalar_lea.vmem [#allocation2], 16
        %835 = vst.msk [vmem:[%s834] sm:$0xf] %vm776, %v829
        %836 = vst.msk [vmem:[%s834 + $0x4] sm:$0xf] %vm776, %v831
        %837 = vrot.lane.b32.xlu0 %v783, 80
        %v838 = vpop.permute.xlu0 %837
        %839 = vrot.lane.b32.xlu0 %v784, 80
        %v840 = vpop.permute.xlu0 %839
        %s843 = scalar_lea.vmem [#allocation3], 16
        %844 = vst.msk [vmem:[%s843] sm:$0xf] %vm776, %v838
        %845 = vst.msk [vmem:[%s843 + $0x4] sm:$0xf] %vm776, %v840
        %846 = vrot.lane.b32.xlu0 %v783, 48
        %v847 = vpop.permute.xlu0 %846
        %848 = vrot.lane.b32.xlu0 %v784, 48
        %v849 = vpop.permute.xlu0 %848
        %s852 = scalar_lea.vmem [#allocation4], 16
        %853 = vst.msk [vmem:[%s852] sm:$0xf] %vm776, %v847
        %854 = vst.msk [vmem:[%s852 + $0x4] sm:$0xf] %vm776, %v849
        %855 = vrot.lane.b32.xlu0 %v772, 104
        %v856 = vpop.permute.xlu0 %855
        %857 = vrot.lane.b32.xlu0 %v773, 104
        %v858 = vpop.permute.xlu0 %857
        %s861 = scalar_lea.vmem [#allocation2], 24
        %862 = vst.msk [vmem:[%s861] sm:$0xf] %vm776, %v856
        %863 = vst.msk [vmem:[%s861 + $0x4] sm:$0xf] %vm776, %v858
        %864 = vrot.lane.b32.xlu0 %v783, 72
        %v865 = vpop.permute.xlu0 %864
        %866 = vrot.lane.b32.xlu0 %v784, 72
        %v867 = vpop.permute.xlu0 %866
        %s870 = scalar_lea.vmem [#allocation3], 24
        %871 = vst.msk [vmem:[%s870] sm:$0xf] %vm776, %v865
        %872 = vst.msk [vmem:[%s870 + $0x4] sm:$0xf] %vm776, %v867
        %873 = vrot.lane.b32.xlu0 %v783, 40
        %v874 = vpop.permute.xlu0 %873
        %875 = vrot.lane.b32.xlu0 %v784, 40
        %v876 = vpop.permute.xlu0 %875
        %s879 = scalar_lea.vmem [#allocation4], 24
        %880 = vst.msk [vmem:[%s879] sm:$0xf] %vm776, %v874
        %881 = vst.msk [vmem:[%s879 + $0x4] sm:$0xf] %vm776, %v876
      $region84: #{syntactic_transformer_forward.2} parent=79 // pred_fallthru
        _
      %s882 = scalar_lea.vmem %s507, %s517
      %v883 = vld [vmem:[%s882] sm:$0xff]
      %s884 = scalar_lea.vmem [#allocation5], %s517
      %v885 = vld [vmem:[%s884] sm:$0xff]
      %v886 = vld [vmem:[#allocation6] sm:$0x1]
      %888 = vset.pattern.permute.xlu0 0
      %889 = vperm.xlu0 %888, %v885
      %v890 = vpop.permute.xlu0 %889
      %v893 = vlaneseq
      %v894 = vshrl.u32 %v893, 7
      %v895 = vsub.s32 0, %v894
      %v896 = vrot.slane %v886, %v895
      %v898 = vsub.f32 %v890, %v896
      %v899 = vand.u32 2147483647, %v898
      %v900 = vsub.f32 0.0, %v899
      %v901 = vmul.f32 %v900, 1.442695
      %v902 = vpow.pop %v901
      %vm903 = vcmask 130048
      %v904 = vsel %vm903, %v902, 0.0
      %905 = vadd.xlane.f32.xlu0 %v904
      %v906 = vpop.xlane.xlu0 %905
      %v907 = vrcp.pop %v906
      %v908 = vmul.f32 %v902, %v907
      %s909 = sshra.s32 %s517, 3
      %s910 = sand.u32 %s517, 7
      %s911 = smul.addr %s909, 4
      %s912 = scalar_lea.vmem [#allocation2], %s911
      %v913 = vld [vmem:[%s912] sm:$0xf]
      %v914 = vld [vmem:[%s912 + $0x8] sm:$0xf]
      %v915 = vld [vmem:[%s912 + $0x10] sm:$0xf]
      %v916 = vld [vmem:[%s912 + $0x18] sm:$0xf]
      %v917 = vld [vmem:[#allocation3] sm:$0xf]
      %v918 = vld [vmem:[#allocation3 + $0x4] sm:$0xf]
      %v919 = vld [vmem:[#allocation3 + $0x8] sm:$0xf]
      %v920 = vld [vmem:[#allocation3 + $0xc] sm:$0xf]
      %v921 = vld [vmem:[#allocation3 + $0x10] sm:$0xf]
      %v922 = vld [vmem:[#allocation3 + $0x14] sm:$0xf]
      %v923 = vld [vmem:[#allocation3 + $0x18] sm:$0xf]
      %v924 = vld [vmem:[#allocation3 + $0x1c] sm:$0xf]
      %v927 = vunpack.c.l.b16 %v917
      %v928 = vunpack.c.l.b16 %v918
      %v929 = vpack.c.b16 %v928, %v927
      %vm930 = vcmask 64512
      %v932 = vsel %vm930, %v913, 0
      %v935 = vsel %vm930, %v929, 0
      %937 = vmatprep.subr.bf16.mxu0 0
      %938 = vmatpush1.bf16.xpose.msra.mxu0 0
      %939 = vmatprep.subr.bf16.mxu0 0
      %940 = vmatpush1.bf16.xpose.msra.mxu0 0
      %941 = vmatprep.subr.bf16.mxu0 0
      %942 = vmatpush1.bf16.xpose.msra.mxu0 0
      %943 = vmatprep.subr.bf16.mxu0 0
      %944 = vmatpush1.bf16.xpose.msra.mxu0 0
      %945 = vmatprep.subr.bf16.mxu0 0
      %946 = vmatpush1.bf16.xpose.msra.mxu0 0
      %947 = vmatprep.subr.bf16.mxu0 0
      %948 = vmatpush1.bf16.xpose.msra.mxu0 0
      %949 = vmatprep.subr.bf16.mxu0 0
      %950 = vmatpush1.bf16.xpose.msra.mxu0 0
      %951 = vmatprep.subr.bf16.mxu0 0
      %952 = vmatpush1.bf16.xpose.msra.mxu0 %v935
      %953 = vmatprep.subr.bf16.mxu0 0
      %954 = vmatpush2.bf16.xpose.msra.mxu0 0
      %955 = vmatprep.subr.bf16.mxu0 0
      %956 = vmatpush2.bf16.xpose.msra.mxu0 0
      %957 = vmatprep.subr.bf16.mxu0 0
      %958 = vmatpush2.bf16.xpose.msra.mxu0 0
      %959 = vmatprep.subr.bf16.mxu0 0
      %960 = vmatpush2.bf16.xpose.msra.mxu0 0
      %961 = vmatprep.subr.bf16.mxu0 0
      %962 = vmatpush2.bf16.xpose.msra.mxu0 0
      %963 = vmatprep.subr.bf16.mxu0 0
      %964 = vmatpush2.bf16.xpose.msra.mxu0 0
      %965 = vmatprep.subr.bf16.mxu0 0
      %966 = vmatpush2.bf16.xpose.msra.mxu0 0
      %967 = vmatprep.subr.bf16.mxu0 0
      %968 = vmatpush2.bf16.xpose.msra.mxu0 0
      %969 = vmatprep.mubr.bf16.mxu0 0
      %970 = vmatmul.mubr.bf16.gmra.mxu0 %v932
      %v971 = vpop.f32.mrf.mxu0
      %v972 = vadd.f32 0.0, %v971
      %v973 = vpop.f32.mrf.mxu0
      %v974 = vpop.f32.mrf.mxu0
      %v975 = vpop.f32.mrf.mxu0
      %976 = vdwg.mxu0
      %v979 = vunpack.c.l.b16 %v919
      %v980 = vunpack.c.l.b16 %v920
      %v981 = vpack.c.b16 %v980, %v979
      %v983 = vsel %vm930, %v914, 0
      %v986 = vsel %vm930, %v981, 0
      %988 = vmatprep.subr.bf16.mxu0 0
      %989 = vmatpush1.bf16.xpose.msra.mxu0 0
      %990 = vmatprep.subr.bf16.mxu0 0
      %991 = vmatpush1.bf16.xpose.msra.mxu0 0
      %992 = vmatprep.subr.bf16.mxu0 0
      %993 = vmatpush1.bf16.xpose.msra.mxu0 0
      %994 = vmatprep.subr.bf16.mxu0 0
      %995 = vmatpush1.bf16.xpose.msra.mxu0 0
      %996 = vmatprep.subr.bf16.mxu0 0
      %997 = vmatpush1.bf16.xpose.msra.mxu0 0
      %998 = vmatprep.subr.bf16.mxu0 0
      %999 = vmatpush1.bf16.xpose.msra.mxu0 0
      %1000 = vmatprep.subr.bf16.mxu0 0
      %1001 = vmatpush1.bf16.xpose.msra.mxu0 0
      %1002 = vmatprep.subr.bf16.mxu0 0
      %1003 = vmatpush1.bf16.xpose.msra.mxu0 %v986
      %1004 = vmatprep.subr.bf16.mxu0 0
      %1005 = vmatpush2.bf16.xpose.msra.mxu0 0
      %1006 = vmatprep.subr.bf16.mxu0 0
      %1007 = vmatpush2.bf16.xpose.msra.mxu0 0
      %1008 = vmatprep.subr.bf16.mxu0 0
      %1009 = vmatpush2.bf16.xpose.msra.mxu0 0
      %1010 = vmatprep.subr.bf16.mxu0 0
      %1011 = vmatpush2.bf16.xpose.msra.mxu0 0
      %1012 = vmatprep.subr.bf16.mxu0 0
      %1013 = vmatpush2.bf16.xpose.msra.mxu0 0
      %1014 = vmatprep.subr.bf16.mxu0 0
      %1015 = vmatpush2.bf16.xpose.msra.mxu0 0
      %1016 = vmatprep.subr.bf16.mxu0 0
      %1017 = vmatpush2.bf16.xpose.msra.mxu0 0
      %1018 = vmatprep.subr.bf16.mxu0 0
      %1019 = vmatpush2.bf16.xpose.msra.mxu0 0
      %1020 = vmatprep.mubr.bf16.mxu0 0
      %1021 = vmatmul.mubr.bf16.gmra.mxu0 %v983
      %v1022 = vpop.f32.mrf.mxu0
      %v1023 = vadd.f32 0.0, %v1022
      %v1024 = vpop.f32.mrf.mxu0
      %v1025 = vpop.f32.mrf.mxu0
      %v1026 = vpop.f32.mrf.mxu0
      %1027 = vdwg.mxu0
      %v1030 = vunpack.c.l.b16 %v921
      %v1031 = vunpack.c.l.b16 %v922
      %v1032 = vpack.c.b16 %v1031, %v1030
      %v1034 = vsel %vm930, %v915, 0
      %v1037 = vsel %vm930, %v1032, 0
      %1039 = vmatprep.subr.bf16.mxu0 0
      %1040 = vmatpush1.bf16.xpose.msra.mxu0 0
      %1041 = vmatprep.subr.bf16.mxu0 0
      %1042 = vmatpush1.bf16.xpose.msra.mxu0 0
      %1043 = vmatprep.subr.bf16.mxu0 0
      %1044 = vmatpush1.bf16.xpose.msra.mxu0 0
      %1045 = vmatprep.subr.bf16.mxu0 0
      %1046 = vmatpush1.bf16.xpose.msra.mxu0 0
      %1047 = vmatprep.subr.bf16.mxu0 0
      %1048 = vmatpush1.bf16.xpose.msra.mxu0 0
      %1049 = vmatprep.subr.bf16.mxu0 0
      %1050 = vmatpush1.bf16.xpose.msra.mxu0 0
      %1051 = vmatprep.subr.bf16.mxu0 0
      %1052 = vmatpush1.bf16.xpose.msra.mxu0 0
      %1053 = vmatprep.subr.bf16.mxu0 0
      %1054 = vmatpush1.bf16.xpose.msra.mxu0 %v1037
      %1055 = vmatprep.subr.bf16.mxu0 0
      %1056 = vmatpush2.bf16.xpose.msra.mxu0 0
      %1057 = vmatprep.subr.bf16.mxu0 0
      %1058 = vmatpush2.bf16.xpose.msra.mxu0 0
      %1059 = vmatprep.subr.bf16.mxu0 0
      %1060 = vmatpush2.bf16.xpose.msra.mxu0 0
      %1061 = vmatprep.subr.bf16.mxu0 0
      %1062 = vmatpush2.bf16.xpose.msra.mxu0 0
      %1063 = vmatprep.subr.bf16.mxu0 0
      %1064 = vmatpush2.bf16.xpose.msra.mxu0 0
      %1065 = vmatprep.subr.bf16.mxu0 0
      %1066 = vmatpush2.bf16.xpose.msra.mxu0 0
      %1067 = vmatprep.subr.bf16.mxu0 0
      %1068 = vmatpush2.bf16.xpose.msra.mxu0 0
      %1069 = vmatprep.subr.bf16.mxu0 0
      %1070 = vmatpush2.bf16.xpose.msra.mxu0 0
      %1071 = vmatprep.mubr.bf16.mxu0 0
      %1072 = vmatmul.mubr.bf16.gmra.mxu0 %v1034
      %v1073 = vpop.f32.mrf.mxu0
      %v1074 = vadd.f32 0.0, %v1073
      %v1075 = vpop.f32.mrf.mxu0
      %v1076 = vpop.f32.mrf.mxu0
      %v1077 = vpop.f32.mrf.mxu0
      %1078 = vdwg.mxu0
      %v1081 = vunpack.c.l.b16 %v923
      %v1082 = vunpack.c.l.b16 %v924
      %v1083 = vpack.c.b16 %v1082, %v1081
      %v1085 = vsel %vm930, %v916, 0
      %v1088 = vsel %vm930, %v1083, 0
      %1090 = vmatprep.subr.bf16.mxu0 0
      %1091 = vmatpush1.bf16.xpose.msra.mxu0 0
      %1092 = vmatprep.subr.bf16.mxu0 0
      %1093 = vmatpush1.bf16.xpose.msra.mxu0 0
      %1094 = vmatprep.subr.bf16.mxu0 0
      %1095 = vmatpush1.bf16.xpose.msra.mxu0 0
      %1096 = vmatprep.subr.bf16.mxu0 0
      %1097 = vmatpush1.bf16.xpose.msra.mxu0 0
      %1098 = vmatprep.subr.bf16.mxu0 0
      %1099 = vmatpush1.bf16.xpose.msra.mxu0 0
      %1100 = vmatprep.subr.bf16.mxu0 0
      %1101 = vmatpush1.bf16.xpose.msra.mxu0 0
      %1102 = vmatprep.subr.bf16.mxu0 0
      %1103 = vmatpush1.bf16.xpose.msra.mxu0 0
      %1104 = vmatprep.subr.bf16.mxu0 0
      %1105 = vmatpush1.bf16.xpose.msra.mxu0 %v1088
      %1106 = vmatprep.subr.bf16.mxu0 0
      %1107 = vmatpush2.bf16.xpose.msra.mxu0 0
      %1108 = vmatprep.subr.bf16.mxu0 0
      %1109 = vmatpush2.bf16.xpose.msra.mxu0 0
      %1110 = vmatprep.subr.bf16.mxu0 0
      %1111 = vmatpush2.bf16.xpose.msra.mxu0 0
      %1112 = vmatprep.subr.bf16.mxu0 0
      %1113 = vmatpush2.bf16.xpose.msra.mxu0 0
      %1114 = vmatprep.subr.bf16.mxu0 0
      %1115 = vmatpush2.bf16.xpose.msra.mxu0 0
      %1116 = vmatprep.subr.bf16.mxu0 0
      %1117 = vmatpush2.bf16.xpose.msra.mxu0 0
      %1118 = vmatprep.subr.bf16.mxu0 0
      %1119 = vmatpush2.bf16.xpose.msra.mxu0 0
      %1120 = vmatprep.subr.bf16.mxu0 0
      %1121 = vmatpush2.bf16.xpose.msra.mxu0 0
      %1122 = vmatprep.mubr.bf16.mxu0 0
      %1123 = vmatmul.mubr.bf16.gmra.mxu0 %v1085
      %v1124 = vpop.f32.mrf.mxu0
      %v1125 = vadd.f32 0.0, %v1124
      %v1126 = vpop.f32.mrf.mxu0
      %v1127 = vpop.f32.mrf.mxu0
      %v1128 = vpop.f32.mrf.mxu0
      %1129 = vdwg.mxu0
      %v1130 = vsel %vm903, %v972, -inf
      %1131 = vmax.xlane.f32.xlu0 %v1130
      %v1132 = vpop.xlane.xlu0 %1131
      %v1133 = vsel %vm903, %v1023, -inf
      %1134 = vmax.xlane.f32.xlu0 %v1133
      %v1135 = vpop.xlane.xlu0 %1134
      %v1136 = vsel %vm903, %v1074, -inf
      %1137 = vmax.xlane.f32.xlu0 %v1136
      %v1138 = vpop.xlane.xlu0 %1137
      %v1139 = vsel %vm903, %v1125, -inf
      %1140 = vmax.xlane.f32.xlu0 %v1139
      %v1141 = vpop.xlane.xlu0 %1140
      %v1142 = vsub.f32 %v972, %v1132
      %v1143 = vsub.f32 %v1023, %v1135
      %v1144 = vsub.f32 %v1074, %v1138
      %v1145 = vsub.f32 %v1125, %v1141
      %v1146 = vmul.f32 %v1142, 1.442695
      %v1147 = vpow.pop %v1146
      %v1148 = vmul.f32 %v1143, 1.442695
      %v1149 = vpow.pop %v1148
      %v1150 = vmul.f32 %v1144, 1.442695
      %v1151 = vpow.pop %v1150
      %v1152 = vmul.f32 %v1145, 1.442695
      %v1153 = vpow.pop %v1152
      %v1154 = vsel %vm903, %v1147, 0.0
      %1155 = vadd.xlane.f32.xlu0 %v1154
      %v1156 = vpop.xlane.xlu0 %1155
      %v1157 = vsel %vm903, %v1149, 0.0
      %1158 = vadd.xlane.f32.xlu0 %v1157
      %v1159 = vpop.xlane.xlu0 %1158
      %v1160 = vsel %vm903, %v1151, 0.0
      %1161 = vadd.xlane.f32.xlu0 %v1160
      %v1162 = vpop.xlane.xlu0 %1161
      %v1163 = vsel %vm903, %v1153, 0.0
      %1164 = vadd.xlane.f32.xlu0 %v1163
      %v1165 = vpop.xlane.xlu0 %1164
      %v1166 = vrcp.pop %v1156
      %v1167 = vrcp.pop %v1159
      %v1168 = vrcp.pop %v1162
      %v1169 = vrcp.pop %v1165
      %v1170 = vmul.f32 %v1147, %v1166
      %v1171 = vmul.f32 %v1149, %v1167
      %v1172 = vmul.f32 %v1151, %v1168
      %v1173 = vmul.f32 %v1153, %v1169
      %v1174 = vmul.f32 %v1170, %v908
      %v1175 = vmul.f32 %v1171, %v908
      %v1176 = vmul.f32 %v1172, %v908
      %v1177 = vmul.f32 %v1173, %v908
      %v1178 = vpack.c.bf16 %v1174, %v1174
      %v1179 = vpack.c.bf16 %v1175, %v1175
      %v1180 = vpack.c.bf16 %v1176, %v1176
      %v1181 = vpack.c.bf16 %v1177, %v1177
      %v1182 = vld [vmem:[#allocation4] sm:$0xf]
      %v1183 = vld [vmem:[#allocation4 + $0x4] sm:$0xf]
      %v1184 = vld [vmem:[#allocation4 + $0x8] sm:$0xf]
      %v1185 = vld [vmem:[#allocation4 + $0xc] sm:$0xf]
      %v1186 = vld [vmem:[#allocation4 + $0x10] sm:$0xf]
      %v1187 = vld [vmem:[#allocation4 + $0x14] sm:$0xf]
      %v1188 = vld [vmem:[#allocation4 + $0x18] sm:$0xf]
      %v1189 = vld [vmem:[#allocation4 + $0x1c] sm:$0xf]
      %v1192 = vunpack.c.l.b16 %v1182
      %v1193 = vunpack.c.l.b16 %v1183
      %v1194 = vpack.c.b16 %v1193, %v1192
      %v1197 = vsel %vm903, %v1178, 0
      %1199 = vmatprep.subr.bf16.mxu0 0
      %1200 = vmatpush1.bf16.msra.mxu0 0
      %1201 = vmatprep.subr.bf16.mxu0 0
      %1202 = vmatpush1.bf16.msra.mxu0 0
      %1203 = vmatprep.subr.bf16.mxu0 0
      %1204 = vmatpush1.bf16.msra.mxu0 0
      %1205 = vmatprep.subr.bf16.mxu0 0
      %1206 = vmatpush1.bf16.msra.mxu0 0
      %1207 = vmatprep.subr.bf16.mxu0 0
      %1208 = vmatpush1.bf16.msra.mxu0 0
      %1209 = vmatprep.subr.bf16.mxu0 0
      %1210 = vmatpush1.bf16.msra.mxu0 0
      %1211 = vmatprep.subr.bf16.mxu0 0
      %1212 = vmatpush1.bf16.msra.mxu0 0
      %1213 = vmatprep.subr.bf16.mxu0 0
      %1214 = vmatpush1.bf16.msra.mxu0 %v1194
      %1215 = vmatprep.subr.bf16.mxu0 0
      %1216 = vmatpush2.bf16.msra.mxu0 0
      %1217 = vmatprep.subr.bf16.mxu0 0
      %1218 = vmatpush2.bf16.msra.mxu0 0
      %1219 = vmatprep.subr.bf16.mxu0 0
      %1220 = vmatpush2.bf16.msra.mxu0 0
      %1221 = vmatprep.subr.bf16.mxu0 0
      %1222 = vmatpush2.bf16.msra.mxu0 0
      %1223 = vmatprep.subr.bf16.mxu0 0
      %1224 = vmatpush2.bf16.msra.mxu0 0
      %1225 = vmatprep.subr.bf16.mxu0 0
      %1226 = vmatpush2.bf16.msra.mxu0 0
      %1227 = vmatprep.subr.bf16.mxu0 0
      %1228 = vmatpush2.bf16.msra.mxu0 0
      %1229 = vmatprep.subr.bf16.mxu0 0
      %1230 = vmatpush2.bf16.msra.mxu0 0
      %1231 = vmatprep.mubr.bf16.mxu0 0
      %1232 = vmatmul.mubr.bf16.gmra.mxu0 %v1197
      %v1233 = vpop.f32.mrf.mxu0
      %v1234 = vadd.f32 0.0, %v1233
      %v1235 = vpop.f32.mrf.mxu0
      %v1236 = vpop.f32.mrf.mxu0
      %v1237 = vpop.f32.mrf.mxu0
      %1238 = vdwg.mxu0
      %v1241 = vunpack.c.l.b16 %v1184
      %v1242 = vunpack.c.l.b16 %v1185
      %v1243 = vpack.c.b16 %v1242, %v1241
      %v1246 = vsel %vm903, %v1179, 0
      %1248 = vmatprep.subr.bf16.mxu0 0
      %1249 = vmatpush1.bf16.msra.mxu0 0
      %1250 = vmatprep.subr.bf16.mxu0 0
      %1251 = vmatpush1.bf16.msra.mxu0 0
      %1252 = vmatprep.subr.bf16.mxu0 0
      %1253 = vmatpush1.bf16.msra.mxu0 0
      %1254 = vmatprep.subr.bf16.mxu0 0
      %1255 = vmatpush1.bf16.msra.mxu0 0
      %1256 = vmatprep.subr.bf16.mxu0 0
      %1257 = vmatpush1.bf16.msra.mxu0 0
      %1258 = vmatprep.subr.bf16.mxu0 0
      %1259 = vmatpush1.bf16.msra.mxu0 0
      %1260 = vmatprep.subr.bf16.mxu0 0
      %1261 = vmatpush1.bf16.msra.mxu0 0
      %1262 = vmatprep.subr.bf16.mxu0 0
      %1263 = vmatpush1.bf16.msra.mxu0 %v1243
      %1264 = vmatprep.subr.bf16.mxu0 0
      %1265 = vmatpush2.bf16.msra.mxu0 0
      %1266 = vmatprep.subr.bf16.mxu0 0
      %1267 = vmatpush2.bf16.msra.mxu0 0
      %1268 = vmatprep.subr.bf16.mxu0 0
      %1269 = vmatpush2.bf16.msra.mxu0 0
      %1270 = vmatprep.subr.bf16.mxu0 0
      %1271 = vmatpush2.bf16.msra.mxu0 0
      %1272 = vmatprep.subr.bf16.mxu0 0
      %1273 = vmatpush2.bf16.msra.mxu0 0
      %1274 = vmatprep.subr.bf16.mxu0 0
      %1275 = vmatpush2.bf16.msra.mxu0 0
      %1276 = vmatprep.subr.bf16.mxu0 0
      %1277 = vmatpush2.bf16.msra.mxu0 0
      %1278 = vmatprep.subr.bf16.mxu0 0
      %1279 = vmatpush2.bf16.msra.mxu0 0
      %1280 = vmatprep.mubr.bf16.mxu0 0
      %1281 = vmatmul.mubr.bf16.gmra.mxu0 %v1246
      %v1282 = vpop.f32.mrf.mxu0
      %v1283 = vadd.f32 0.0, %v1282
      %v1284 = vpop.f32.mrf.mxu0
      %v1285 = vpop.f32.mrf.mxu0
      %v1286 = vpop.f32.mrf.mxu0
      %1287 = vdwg.mxu0
      %v1290 = vunpack.c.l.b16 %v1186
      %v1291 = vunpack.c.l.b16 %v1187
      %v1292 = vpack.c.b16 %v1291, %v1290
      %v1295 = vsel %vm903, %v1180, 0
      %1297 = vmatprep.subr.bf16.mxu0 0
      %1298 = vmatpush1.bf16.msra.mxu0 0
      %1299 = vmatprep.subr.bf16.mxu0 0
      %1300 = vmatpush1.bf16.msra.mxu0 0
      %1301 = vmatprep.subr.bf16.mxu0 0
      %1302 = vmatpush1.bf16.msra.mxu0 0
      %1303 = vmatprep.subr.bf16.mxu0 0
      %1304 = vmatpush1.bf16.msra.mxu0 0
      %1305 = vmatprep.subr.bf16.mxu0 0
      %1306 = vmatpush1.bf16.msra.mxu0 0
      %1307 = vmatprep.subr.bf16.mxu0 0
      %1308 = vmatpush1.bf16.msra.mxu0 0
      %1309 = vmatprep.subr.bf16.mxu0 0
      %1310 = vmatpush1.bf16.msra.mxu0 0
      %1311 = vmatprep.subr.bf16.mxu0 0
      %1312 = vmatpush1.bf16.msra.mxu0 %v1292
      %1313 = vmatprep.subr.bf16.mxu0 0
      %1314 = vmatpush2.bf16.msra.mxu0 0
      %1315 = vmatprep.subr.bf16.mxu0 0
      %1316 = vmatpush2.bf16.msra.mxu0 0
      %1317 = vmatprep.subr.bf16.mxu0 0
      %1318 = vmatpush2.bf16.msra.mxu0 0
      %1319 = vmatprep.subr.bf16.mxu0 0
      %1320 = vmatpush2.bf16.msra.mxu0 0
      %1321 = vmatprep.subr.bf16.mxu0 0
      %1322 = vmatpush2.bf16.msra.mxu0 0
      %1323 = vmatprep.subr.bf16.mxu0 0
      %1324 = vmatpush2.bf16.msra.mxu0 0
      %1325 = vmatprep.subr.bf16.mxu0 0
      %1326 = vmatpush2.bf16.msra.mxu0 0
      %1327 = vmatprep.subr.bf16.mxu0 0
      %1328 = vmatpush2.bf16.msra.mxu0 0
      %1329 = vmatprep.mubr.bf16.mxu0 0
      %1330 = vmatmul.mubr.bf16.gmra.mxu0 %v1295
      %v1331 = vpop.f32.mrf.mxu0
      %v1332 = vadd.f32 0.0, %v1331
      %v1333 = vpop.f32.mrf.mxu0
      %v1334 = vpop.f32.mrf.mxu0
      %v1335 = vpop.f32.mrf.mxu0
      %1336 = vdwg.mxu0
      %v1339 = vunpack.c.l.b16 %v1188
      %v1340 = vunpack.c.l.b16 %v1189
      %v1341 = vpack.c.b16 %v1340, %v1339
      %v1344 = vsel %vm903, %v1181, 0
      %1346 = vmatprep.subr.bf16.mxu0 0
      %1347 = vmatpush1.bf16.msra.mxu0 0
      %1348 = vmatprep.subr.bf16.mxu0 0
      %1349 = vmatpush1.bf16.msra.mxu0 0
      %1350 = vmatprep.subr.bf16.mxu0 0
      %1351 = vmatpush1.bf16.msra.mxu0 0
      %1352 = vmatprep.subr.bf16.mxu0 0
      %1353 = vmatpush1.bf16.msra.mxu0 0
      %1354 = vmatprep.subr.bf16.mxu0 0
      %1355 = vmatpush1.bf16.msra.mxu0 0
      %1356 = vmatprep.subr.bf16.mxu0 0
      %1357 = vmatpush1.bf16.msra.mxu0 0
      %1358 = vmatprep.subr.bf16.mxu0 0
      %1359 = vmatpush1.bf16.msra.mxu0 0
      %1360 = vmatprep.subr.bf16.mxu0 0
      %1361 = vmatpush1.bf16.msra.mxu0 %v1341
      %1362 = vmatprep.subr.bf16.mxu0 0
      %1363 = vmatpush2.bf16.msra.mxu0 0
      %1364 = vmatprep.subr.bf16.mxu0 0
      %1365 = vmatpush2.bf16.msra.mxu0 0
      %1366 = vmatprep.subr.bf16.mxu0 0
      %1367 = vmatpush2.bf16.msra.mxu0 0
      %1368 = vmatprep.subr.bf16.mxu0 0
      %1369 = vmatpush2.bf16.msra.mxu0 0
      %1370 = vmatprep.subr.bf16.mxu0 0
      %1371 = vmatpush2.bf16.msra.mxu0 0
      %1372 = vmatprep.subr.bf16.mxu0 0
      %1373 = vmatpush2.bf16.msra.mxu0 0
      %1374 = vmatprep.subr.bf16.mxu0 0
      %1375 = vmatpush2.bf16.msra.mxu0 0
      %1376 = vmatprep.subr.bf16.mxu0 0
      %1377 = vmatpush2.bf16.msra.mxu0 0
      %1378 = vmatprep.mubr.bf16.mxu0 0
      %1379 = vmatmul.mubr.bf16.gmra.mxu0 %v1344
      %v1380 = vpop.f32.mrf.mxu0
      %v1381 = vadd.f32 0.0, %v1380
      %v1382 = vpop.f32.mrf.mxu0
      %v1383 = vpop.f32.mrf.mxu0
      %v1384 = vpop.f32.mrf.mxu0
      %1385 = vdwg.mxu0
      %v1386 = vpack.c.bf16 %v1234, %v1234
      %v1387 = vld [vmem:[%s7] sm:$0xf]
      %v1388 = vpack.c.bf16 %v1283, %v1283
      %s1389 = scalar_lea.vmem %s7, 4
      %v1390 = vld [vmem:[%s1389] sm:$0xf]
      %v1392 = vsel %vm930, %v1388, 0
      %vm1394 = vcmask 1043456
      %v1396 = vsel %vm1394, %v1390, 0
      %1398 = vmatprep.subr.bf16.mxu0 0
      %1399 = vmatpush1.bf16.msra.mxu0 0
      %1400 = vmatprep.subr.bf16.mxu0 0
      %1401 = vmatpush1.bf16.msra.mxu0 0
      %1402 = vmatprep.subr.bf16.mxu0 0
      %1403 = vmatpush1.bf16.msra.mxu0 0
      %1404 = vmatprep.subr.bf16.mxu0 0
      %1405 = vmatpush1.bf16.msra.mxu0 0
      %1406 = vmatprep.subr.bf16.mxu0 0
      %1407 = vmatpush1.bf16.msra.mxu0 0
      %1408 = vmatprep.subr.bf16.mxu0 0
      %1409 = vmatpush1.bf16.msra.mxu0 0
      %1410 = vmatprep.subr.bf16.mxu0 0
      %1411 = vmatpush1.bf16.msra.mxu0 0
      %1412 = vmatprep.subr.bf16.mxu0 0
      %1413 = vmatpush1.bf16.msra.mxu0 %v1396
      %1414 = vmatprep.subr.bf16.mxu0 0
      %1415 = vmatpush2.bf16.msra.mxu0 0
      %1416 = vmatprep.subr.bf16.mxu0 0
      %1417 = vmatpush2.bf16.msra.mxu0 0
      %1418 = vmatprep.subr.bf16.mxu0 0
      %1419 = vmatpush2.bf16.msra.mxu0 0
      %1420 = vmatprep.subr.bf16.mxu0 0
      %1421 = vmatpush2.bf16.msra.mxu0 0
      %1422 = vmatprep.subr.bf16.mxu0 0
      %1423 = vmatpush2.bf16.msra.mxu0 0
      %1424 = vmatprep.subr.bf16.mxu0 0
      %1425 = vmatpush2.bf16.msra.mxu0 0
      %1426 = vmatprep.subr.bf16.mxu0 0
      %1427 = vmatpush2.bf16.msra.mxu0 0
      %1428 = vmatprep.subr.bf16.mxu0 0
      %1429 = vmatpush2.bf16.msra.mxu0 0
      %1430 = vmatprep.mubr.bf16.mxu0 0
      %1431 = vmatmul.mubr.bf16.gmra.mxu0 %v1392
      %v1432 = vpop.f32.mrf.mxu0
      %v1433 = vadd.f32 0.0, %v1432
      %v1434 = vpop.f32.mrf.mxu0
      %v1435 = vpop.f32.mrf.mxu0
      %v1436 = vpop.f32.mrf.mxu0
      %1437 = vdwg.mxu0
      %v1439 = vsel %vm930, %v1386, 0
      %v1442 = vsel %vm1394, %v1387, 0
      %1444 = vmatprep.subr.bf16.mxu0 0
      %1445 = vmatpush1.bf16.msra.mxu0 0
      %1446 = vmatprep.subr.bf16.mxu0 0
      %1447 = vmatpush1.bf16.msra.mxu0 0
      %1448 = vmatprep.subr.bf16.mxu0 0
      %1449 = vmatpush1.bf16.msra.mxu0 0
      %1450 = vmatprep.subr.bf16.mxu0 0
      %1451 = vmatpush1.bf16.msra.mxu0 0
      %1452 = vmatprep.subr.bf16.mxu0 0
      %1453 = vmatpush1.bf16.msra.mxu0 0
      %1454 = vmatprep.subr.bf16.mxu0 0
      %1455 = vmatpush1.bf16.msra.mxu0 0
      %1456 = vmatprep.subr.bf16.mxu0 0
      %1457 = vmatpush1.bf16.msra.mxu0 0
      %1458 = vmatprep.subr.bf16.mxu0 0
      %1459 = vmatpush1.bf16.msra.mxu0 %v1442
      %1460 = vmatprep.subr.bf16.mxu0 0
      %1461 = vmatpush2.bf16.msra.mxu0 0
      %1462 = vmatprep.subr.bf16.mxu0 0
      %1463 = vmatpush2.bf16.msra.mxu0 0
      %1464 = vmatprep.subr.bf16.mxu0 0
      %1465 = vmatpush2.bf16.msra.mxu0 0
      %1466 = vmatprep.subr.bf16.mxu0 0
      %1467 = vmatpush2.bf16.msra.mxu0 0
      %1468 = vmatprep.subr.bf16.mxu0 0
      %1469 = vmatpush2.bf16.msra.mxu0 0
      %1470 = vmatprep.subr.bf16.mxu0 0
      %1471 = vmatpush2.bf16.msra.mxu0 0
      %1472 = vmatprep.subr.bf16.mxu0 0
      %1473 = vmatpush2.bf16.msra.mxu0 0
      %1474 = vmatprep.subr.bf16.mxu0 0
      %1475 = vmatpush2.bf16.msra.mxu0 0
      %1476 = vmatprep.mubr.bf16.mxu0 0
      %1477 = vmatmul.mubr.bf16.gmra.mxu0 %v1439
      %v1478 = vpop.f32.mrf.mxu0
      %v1479 = vadd.f32 %v1433, %v1478
      %v1480 = vpop.f32.mrf.mxu0
      %v1481 = vpop.f32.mrf.mxu0
      %v1482 = vpop.f32.mrf.mxu0
      %1483 = vdwg.mxu0
      %v1484 = vpack.c.bf16 %v1332, %v1332
      %s1485 = scalar_lea.vmem %s7, 8
      %v1486 = vld [vmem:[%s1485] sm:$0xf]
      %v1488 = vsel %vm930, %v1484, 0
      %v1491 = vsel %vm1394, %v1486, 0
      %1493 = vmatprep.subr.bf16.mxu0 0
      %1494 = vmatpush1.bf16.msra.mxu0 0
      %1495 = vmatprep.subr.bf16.mxu0 0
      %1496 = vmatpush1.bf16.msra.mxu0 0
      %1497 = vmatprep.subr.bf16.mxu0 0
      %1498 = vmatpush1.bf16.msra.mxu0 0
      %1499 = vmatprep.subr.bf16.mxu0 0
      %1500 = vmatpush1.bf16.msra.mxu0 0
      %1501 = vmatprep.subr.bf16.mxu0 0
      %1502 = vmatpush1.bf16.msra.mxu0 0
      %1503 = vmatprep.subr.bf16.mxu0 0
      %1504 = vmatpush1.bf16.msra.mxu0 0
      %1505 = vmatprep.subr.bf16.mxu0 0
      %1506 = vmatpush1.bf16.msra.mxu0 0
      %1507 = vmatprep.subr.bf16.mxu0 0
      %1508 = vmatpush1.bf16.msra.mxu0 %v1491
      %1509 = vmatprep.subr.bf16.mxu0 0
      %1510 = vmatpush2.bf16.msra.mxu0 0
      %1511 = vmatprep.subr.bf16.mxu0 0
      %1512 = vmatpush2.bf16.msra.mxu0 0
      %1513 = vmatprep.subr.bf16.mxu0 0
      %1514 = vmatpush2.bf16.msra.mxu0 0
      %1515 = vmatprep.subr.bf16.mxu0 0
      %1516 = vmatpush2.bf16.msra.mxu0 0
      %1517 = vmatprep.subr.bf16.mxu0 0
      %1518 = vmatpush2.bf16.msra.mxu0 0
      %1519 = vmatprep.subr.bf16.mxu0 0
      %1520 = vmatpush2.bf16.msra.mxu0 0
      %1521 = vmatprep.subr.bf16.mxu0 0
      %1522 = vmatpush2.bf16.msra.mxu0 0
      %1523 = vmatprep.subr.bf16.mxu0 0
      %1524 = vmatpush2.bf16.msra.mxu0 0
      %1525 = vmatprep.mubr.bf16.mxu0 0
      %1526 = vmatmul.mubr.bf16.gmra.mxu0 %v1488
      %v1527 = vpop.f32.mrf.mxu0
      %v1528 = vadd.f32 0.0, %v1527
      %v1529 = vpop.f32.mrf.mxu0
      %v1530 = vpop.f32.mrf.mxu0
      %v1531 = vpop.f32.mrf.mxu0
      %1532 = vdwg.mxu0
      %v1533 = vadd.f32 %v1479, %v1528
      %v1534 = vpack.c.bf16 %v1381, %v1381
      %s1535 = scalar_lea.vmem %s7, 12
      %v1536 = vld [vmem:[%s1535] sm:$0xf]
      %v1538 = vsel %vm930, %v1534, 0
      %v1541 = vsel %vm1394, %v1536, 0
      %1543 = vmatprep.subr.bf16.mxu0 0
      %1544 = vmatpush1.bf16.msra.mxu0 0
      %1545 = vmatprep.subr.bf16.mxu0 0
      %1546 = vmatpush1.bf16.msra.mxu0 0
      %1547 = vmatprep.subr.bf16.mxu0 0
      %1548 = vmatpush1.bf16.msra.mxu0 0
      %1549 = vmatprep.subr.bf16.mxu0 0
      %1550 = vmatpush1.bf16.msra.mxu0 0
      %1551 = vmatprep.subr.bf16.mxu0 0
      %1552 = vmatpush1.bf16.msra.mxu0 0
      %1553 = vmatprep.subr.bf16.mxu0 0
      %1554 = vmatpush1.bf16.msra.mxu0 0
      %1555 = vmatprep.subr.bf16.mxu0 0
      %1556 = vmatpush1.bf16.msra.mxu0 0
      %1557 = vmatprep.subr.bf16.mxu0 0
      %1558 = vmatpush1.bf16.msra.mxu0 %v1541
      %1559 = vmatprep.subr.bf16.mxu0 0
      %1560 = vmatpush2.bf16.msra.mxu0 0
      %1561 = vmatprep.subr.bf16.mxu0 0
      %1562 = vmatpush2.bf16.msra.mxu0 0
      %1563 = vmatprep.subr.bf16.mxu0 0
      %1564 = vmatpush2.bf16.msra.mxu0 0
      %1565 = vmatprep.subr.bf16.mxu0 0
      %1566 = vmatpush2.bf16.msra.mxu0 0
      %1567 = vmatprep.subr.bf16.mxu0 0
      %1568 = vmatpush2.bf16.msra.mxu0 0
      %1569 = vmatprep.subr.bf16.mxu0 0
      %1570 = vmatpush2.bf16.msra.mxu0 0
      %1571 = vmatprep.subr.bf16.mxu0 0
      %1572 = vmatpush2.bf16.msra.mxu0 0
      %1573 = vmatprep.subr.bf16.mxu0 0
      %1574 = vmatpush2.bf16.msra.mxu0 0
      %1575 = vmatprep.mubr.bf16.mxu0 0
      %1576 = vmatmul.mubr.bf16.gmra.mxu0 %v1538
      %v1577 = vpop.f32.mrf.mxu0
      %v1578 = vadd.f32 0.0, %v1577
      %v1579 = vpop.f32.mrf.mxu0
      %v1580 = vpop.f32.mrf.mxu0
      %v1581 = vpop.f32.mrf.mxu0
      %1582 = vdwg.mxu0
      %v1583 = vadd.f32 %v1533, %v1578
      %v1584 = vadd.f32 %v883, %v1583
      %v1585 = vld [vmem:[%s8] sm:$0x1]
      %v1587 = vlaneseq
      %v1588 = vshrl.u32 %v1587, 7
      %v1589 = vsub.s32 0, %v1588
      %v1590 = vrot.slane %v1585, %v1589
      %v1592 = vadd.f32 %v1584, %v1590
      %v1593 = vld [vmem:[%s9] sm:$0x1]
      %v1594 = vld [vmem:[%s10] sm:$0x1]
      %vm1595 = vcmask 261120
      %v1596 = vsel %vm1595, %v1592, 0.0
      %1597 = vadd.xlane.f32.xlu0 %v1596
      %v1598 = vpop.xlane.xlu0 %1597
      %v1599 = vrcp.pop 32.0
      %v1600 = vmul.f32 %v1598, %v1599
      %v1601 = vsub.f32 %v1592, %v1600
      %v1602 = vmul.f32 %v1601, %v1601
      %v1603 = vsel %vm1595, %v1602, 0.0
      %1604 = vadd.xlane.f32.xlu0 %v1603
      %v1605 = vpop.xlane.xlu0 %1604
      %v1606 = vmul.f32 %v1605, %v1599
      %v1607 = vadd.f32 %v1606, 1e-05
      %v1608 = vrsqrt.pop %v1607
      %v1609 = vmul.f32 %v1601, %v1608
      %v1611 = vlaneseq
      %v1612 = vshrl.u32 %v1611, 7
      %v1613 = vsub.s32 0, %v1612
      %v1614 = vrot.slane %v1593, %v1613
      %v1616 = vmul.f32 %v1609, %v1614
      %v1618 = vlaneseq
      %v1619 = vshrl.u32 %v1618, 7
      %v1620 = vsub.s32 0, %v1619
      %v1621 = vrot.slane %v1594, %v1620
      %v1623 = vadd.f32 %v1616, %v1621
      %v1624 = vpack.c.bf16 %v1623, %v1623
      %v1625 = vld [vmem:[%s11] sm:$0xf]
      %v1626 = vld [vmem:[%s11 + $0x4] sm:$0xf]
      %v1627 = vld [vmem:[%s11 + $0x8] sm:$0xf]
      %v1628 = vld [vmem:[%s11 + $0xc] sm:$0xf]
      %v1629 = vld [vmem:[%s12] sm:$0x1]
      %v1631 = vlaneseq
      %v1632 = vshrl.u32 %v1631, 7
      %v1633 = vsub.s32 0, %v1632
      %v1634 = vrot.slane %v1629, %v1633
      %v1640 = vunpack.c.l.b16 %v1625
      %v1641 = vunpack.c.l.b16 %v1626
      %v1642 = vunpack.c.l.b16 %v1627
      %v1643 = vunpack.c.l.b16 %v1628
      %v1644 = vpack.c.b16 %v1641, %v1640
      %v1645 = vpack.c.b16 %v1643, %v1642
      %v1649 = vsel %vm1595, %v1624, 0
      %1651 = vmatprep.subr.bf16.mxu0 0
      %1652 = vmatpush1.bf16.msra.mxu0 0
      %1653 = vmatprep.subr.bf16.mxu0 0
      %1654 = vmatpush1.bf16.msra.mxu0 0
      %1655 = vmatprep.subr.bf16.mxu0 0
      %1656 = vmatpush1.bf16.msra.mxu0 0
      %1657 = vmatprep.subr.bf16.mxu0 0
      %1658 = vmatpush1.bf16.msra.mxu0 0
      %1659 = vmatprep.subr.bf16.mxu0 0
      %1660 = vmatpush1.bf16.msra.mxu0 0
      %1661 = vmatprep.subr.bf16.mxu0 0
      %1662 = vmatpush1.bf16.msra.mxu0 0
      %1663 = vmatprep.subr.bf16.mxu0 0
      %1664 = vmatpush1.bf16.msra.mxu0 %v1645
      %1665 = vmatprep.subr.bf16.mxu0 0
      %1666 = vmatpush1.bf16.msra.mxu0 %v1644
      %1667 = vmatprep.subr.bf16.mxu0 0
      %1668 = vmatpush2.bf16.msra.mxu0 0
      %1669 = vmatprep.subr.bf16.mxu0 0
      %1670 = vmatpush2.bf16.msra.mxu0 0
      %1671 = vmatprep.subr.bf16.mxu0 0
      %1672 = vmatpush2.bf16.msra.mxu0 0
      %1673 = vmatprep.subr.bf16.mxu0 0
      %1674 = vmatpush2.bf16.msra.mxu0 0
      %1675 = vmatprep.subr.bf16.mxu0 0
      %1676 = vmatpush2.bf16.msra.mxu0 0
      %1677 = vmatprep.subr.bf16.mxu0 0
      %1678 = vmatpush2.bf16.msra.mxu0 0
      %1679 = vmatprep.subr.bf16.mxu0 0
      %1680 = vmatpush2.bf16.msra.mxu0 0
      %1681 = vmatprep.subr.bf16.mxu0 0
      %1682 = vmatpush2.bf16.msra.mxu0 0
      %1683 = vmatprep.mubr.bf16.mxu0 0
      %1684 = vmatmul.mubr.bf16.gmra.mxu0 %v1649
      %v1685 = vpop.f32.mrf.mxu0
      %v1686 = vadd.f32 %v1634, %v1685
      %v1687 = vpop.f32.mrf.mxu0
      %v1688 = vpop.f32.mrf.mxu0
      %v1689 = vpop.f32.mrf.mxu0
      %1690 = vdwg.mxu0
      %v1691 = vmul.f32 %v1686, %v1686
      %v1692 = vmul.f32 %v1686, %v1691
      %v1693 = vmul.f32 %v1692, 0.044715
      %v1694 = vadd.f32 %v1686, %v1693
      %v1695 = vmul.f32 %v1694, 0.7978846
      %v1696 = vtanh.pop %v1695
      %v1697 = vadd.f32 %v1696, 1.0
      %v1698 = vmul.f32 %v1697, 0.5
      %v1699 = vmul.f32 %v1686, %v1698
      %v1700 = vpack.c.bf16 %v1699, %v1699
      %v1701 = vld [vmem:[%s13] sm:$0xf]
      %v1702 = vld [vmem:[%s13 + $0x4] sm:$0xf]
      %v1703 = vld [vmem:[%s13 + $0x8] sm:$0xf]
      %v1704 = vld [vmem:[%s13 + $0xc] sm:$0xf]
      %v1705 = vld [vmem:[%s13 + $0x10] sm:$0xf]
      %v1706 = vld [vmem:[%s13 + $0x14] sm:$0xf]
      %v1707 = vld [vmem:[%s13 + $0x18] sm:$0xf]
      %v1708 = vld [vmem:[%s13 + $0x1c] sm:$0xf]
      %v1709 = vld [vmem:[%s13 + $0x20] sm:$0xf]
      %v1710 = vld [vmem:[%s13 + $0x24] sm:$0xf]
      %v1711 = vld [vmem:[%s13 + $0x28] sm:$0xf]
      %v1712 = vld [vmem:[%s13 + $0x2c] sm:$0xf]
      %v1713 = vld [vmem:[%s13 + $0x30] sm:$0xf]
      %v1714 = vld [vmem:[%s13 + $0x34] sm:$0xf]
      %v1715 = vld [vmem:[%s13 + $0x38] sm:$0xf]
      %v1716 = vld [vmem:[%s13 + $0x3c] sm:$0xf]
      %v1733 = vunpack.c.l.b16 %v1701
      %v1734 = vunpack.c.l.b16 %v1702
      %v1735 = vunpack.c.l.b16 %v1703
      %v1736 = vunpack.c.l.b16 %v1704
      %v1737 = vunpack.c.l.b16 %v1705
      %v1738 = vunpack.c.l.b16 %v1706
      %v1739 = vunpack.c.l.b16 %v1707
      %v1740 = vunpack.c.l.b16 %v1708
      %v1741 = vunpack.c.l.b16 %v1709
      %v1742 = vunpack.c.l.b16 %v1710
      %v1743 = vunpack.c.l.b16 %v1711
      %v1744 = vunpack.c.l.b16 %v1712
      %v1745 = vunpack.c.l.b16 %v1713
      %v1746 = vunpack.c.l.b16 %v1714
      %v1747 = vunpack.c.l.b16 %v1715
      %v1748 = vunpack.c.l.b16 %v1716
      %v1749 = vpack.c.b16 %v1734, %v1733
      %v1750 = vpack.c.b16 %v1736, %v1735
      %v1751 = vpack.c.b16 %v1738, %v1737
      %v1752 = vpack.c.b16 %v1740, %v1739
      %v1753 = vpack.c.b16 %v1742, %v1741
      %v1754 = vpack.c.b16 %v1744, %v1743
      %v1755 = vpack.c.b16 %v1746, %v1745
      %v1756 = vpack.c.b16 %v1748, %v1747
      %1765 = vmatprep.subr.bf16.mxu0 0
      %1766 = vmatpush1.bf16.msra.mxu0 %v1756
      %1767 = vmatprep.subr.bf16.mxu0 0
      %1768 = vmatpush1.bf16.msra.mxu0 %v1755
      %1769 = vmatprep.subr.bf16.mxu0 0
      %1770 = vmatpush1.bf16.msra.mxu0 %v1754
      %1771 = vmatprep.subr.bf16.mxu0 0
      %1772 = vmatpush1.bf16.msra.mxu0 %v1753
      %1773 = vmatprep.subr.bf16.mxu0 0
      %1774 = vmatpush1.bf16.msra.mxu0 %v1752
      %1775 = vmatprep.subr.bf16.mxu0 0
      %1776 = vmatpush1.bf16.msra.mxu0 %v1751
      %1777 = vmatprep.subr.bf16.mxu0 0
      %1778 = vmatpush1.bf16.msra.mxu0 %v1750
      %1779 = vmatprep.subr.bf16.mxu0 0
      %1780 = vmatpush1.bf16.msra.mxu0 %v1749
      %1781 = vmatprep.subr.bf16.mxu0 0
      %1782 = vmatpush2.bf16.msra.mxu0 0
      %1783 = vmatprep.subr.bf16.mxu0 0
      %1784 = vmatpush2.bf16.msra.mxu0 0
      %1785 = vmatprep.subr.bf16.mxu0 0
      %1786 = vmatpush2.bf16.msra.mxu0 0
      %1787 = vmatprep.subr.bf16.mxu0 0
      %1788 = vmatpush2.bf16.msra.mxu0 0
      %1789 = vmatprep.subr.bf16.mxu0 0
      %1790 = vmatpush2.bf16.msra.mxu0 0
      %1791 = vmatprep.subr.bf16.mxu0 0
      %1792 = vmatpush2.bf16.msra.mxu0 0
      %1793 = vmatprep.subr.bf16.mxu0 0
      %1794 = vmatpush2.bf16.msra.mxu0 0
      %1795 = vmatprep.subr.bf16.mxu0 0
      %1796 = vmatpush2.bf16.msra.mxu0 0
      %1797 = vmatprep.mubr.bf16.mxu0 0
      %1798 = vmatmul.mubr.bf16.gmra.mxu0 %v1700
      %v1799 = vpop.f32.mrf.mxu0
      %v1800 = vadd.f32 0.0, %v1799
      %v1801 = vpop.f32.mrf.mxu0
      %v1802 = vpop.f32.mrf.mxu0
      %v1803 = vpop.f32.mrf.mxu0
      %1804 = vdwg.mxu0
      %v1805 = vadd.f32 %v1592, %v1800
      %v1806 = vld [vmem:[%s14] sm:$0x1]
      %v1808 = vlaneseq
      %v1809 = vshrl.u32 %v1808, 7
      %v1810 = vsub.s32 0, %v1809
      %v1811 = vrot.slane %v1806, %v1810
      %v1813 = vadd.f32 %v1805, %v1811
      %1814 = vst.msk [vmem:[%s515] sm:$0xff] %vm1595, %v1813
      %p1815 = scmp.lt.s32.totalorder %s31, 1
      %s1816 = scalar_select %p1815, %s31, 1
      %p1817 = scmp.lt.s32.totalorder %s32, 1
      %s1818 = scalar_select %p1817, %s32, 1
      %s1819 = smul.addr %s1816, 2
      %s1820 = sadd.s32 %s1818, %s1819
      %s1821 = smul.addr %s1820, 8
      %s1822 = scalar_lea.vmem %s15, %s1821
      // Predicated region
      $region85: #{syntactic_transformer_forward.2} parent=79 // pred_check
        %p1823 = pneg %p379
      $region86: #{syntactic_transformer_forward.2} parent=79 // pred_check_branch
        %1825 = sbr.rel (%p1823) target = $region88
      $region87: #{syntactic_transformer_forward.2} parent=79 // pred_region
        _
      $region88: #{syntactic_transformer_forward.2} parent=79 // pred_fallthru
        _
    $region80: #{syntactic_transformer_forward.2} parent=5 // pred_fallthru
      _
    %p1826 = scmp.le.s32.totalorder 2, %s22
    // Predicated region
    $region89: #{syntactic_transformer_forward.2} parent=5 // pred_check
      %p1827 = pneg %p1826
    $region90: #{syntactic_transformer_forward.2} parent=5 // pred_check_branch
      %1829 = sbr.rel (%p1827) target = $region92
    $region91: #{syntactic_transformer_forward.2} parent=5 // pred_region
      %s1830 = ssub.s32 %s22, 2
      // Predicated region
      $region93: #{syntactic_transformer_forward.2} parent=91 // pred_check
        %p1831 = pneg %p385
      $region94: #{syntactic_transformer_forward.2} parent=91 // pred_check_branch
        %1833 = sbr.rel (%p1831) target = $region96
      $region95: #{syntactic_transformer_forward.2} parent=91 // pred_region
        %p1834 = scmp.lt.s32.totalorder %s33, 1
        %s1835 = scalar_select %p1834, %s33, 1
        %p1836 = scmp.lt.s32.totalorder %s34, 1
        %s1837 = scalar_select %p1836, %s34, 1
        %s1838 = smul.addr %s1835, 2
        %s1839 = sadd.s32 %s1837, %s1838
        %s1840 = smul.addr %s1839, 8
        %s1841 = scalar_lea.vmem %s15, %s1840
      $region96: #{syntactic_transformer_forward.2} parent=91 // pred_fallthru
        _
    $region92: #{syntactic_transformer_forward.2} parent=5 // pred_fallthru
      _
  $region6: #{syntactic_transformer_forward.2} parent=0 // loop_footer
    %s26 = sadd.s32 1, %s22
  $region7: #{syntactic_transformer_forward.2} parent=0 // loop_footer_branch
    %21 = sbr.rel target = $region3
  $region8: #{syntactic_transformer_forward.2} parent=0 // loop_exit
    _

// kernel: syntactic_transformer_forward.3
$region0: #{syntactic_transformer_forward.3}
  #allocation0 [shape = 'u32[]', space=smem, size = 0x4, offset = 0x4, fixed_abs, tag = 'smem constant byte address 0x4 - core index']
  #allocation1 [shape = 'u32[144,128]{1,0:T(1,128)}', space=vmem, size = 0x12000, scoped, tag = 'internal scratch']
  #allocation2 [shape = 'bf16[4,16,8]{2,1,0:T(8,128)(2,1)}', space=vmem, size = 0x4000, scoped, tag = 'scratch operand']
  #allocation3 [shape = 'bf16[4,16,8]{2,1,0:T(8,128)(2,1)}', space=vmem, size = 0x4000, scoped, tag = 'scratch operand']
  #allocation4 [shape = 'bf16[4,16,8]{2,1,0:T(8,128)(2,1)}', space=vmem, size = 0x4000, scoped, tag = 'scratch operand']
  #allocation5 [shape = 'f32[16,1]{1,0:T(8,128)}', space=vmem, size = 0x2000, scoped, tag = 'scratch operand']
  #allocation6 [shape = 'f32[1,16]{1,0:T(1,128)}', space=vmem, size = 0x200, scoped, tag = 'scratch operand']
  #allocation7 [shape = 'f32[1]{0:T(128)S(6)}', space=smem, size = 0x200, scoped, tag = 'scoped memory for syntactic_transformer_forward.3']
  %s0 = inlined_call_operand.vmem [shape: f32[2,16,32], index: 0, kind: input, shape index: {}]
  %s1 = inlined_call_operand.vmem [shape: f32[3,32], index: 1, kind: input, shape index: {}]
  %s2 = inlined_call_operand.<no memory space> [shape: f32[1], index: 2, kind: input, shape index: {}]
  %s3 = inlined_call_operand.vmem [shape: f32[1,32], index: 3, kind: input, shape index: {}]
  %s4 = inlined_call_operand.vmem [shape: f32[1,32], index: 4, kind: input, shape index: {}]
  %s5 = inlined_call_operand.vmem [shape: bf16[32,96], index: 5, kind: input, shape index: {}]
  %s6 = inlined_call_operand.vmem [shape: f32[1,96], index: 6, kind: input, shape index: {}]
  %s7 = inlined_call_operand.vmem [shape: bf16[4,8,32], index: 7, kind: input, shape index: {}]
  %s8 = inlined_call_operand.vmem [shape: f32[1,32], index: 8, kind: input, shape index: {}]
  %s9 = inlined_call_operand.vmem [shape: f32[1,32], index: 9, kind: input, shape index: {}]
  %s10 = inlined_call_operand.vmem [shape: f32[1,32], index: 10, kind: input, shape index: {}]
  %s11 = inlined_call_operand.vmem [shape: bf16[32,128], index: 11, kind: input, shape index: {}]
  %s12 = inlined_call_operand.vmem [shape: f32[1,128], index: 12, kind: input, shape index: {}]
  %s13 = inlined_call_operand.vmem [shape: bf16[128,32], index: 13, kind: input, shape index: {}]
  %s14 = inlined_call_operand.vmem [shape: f32[1,32], index: 14, kind: input, shape index: {}]
  %s15 = inlined_call_operand.hbm [shape: f32[2,16,32], index: 15, kind: output, shape index: {0}]
  %s16 = inlined_call_operand.hbm [shape: f32[2,16,16], index: 16, kind: output, shape index: {1}]
  %s17 = inlined_call_operand.hbm [shape: f32[2,1,16], index: 17, kind: output, shape index: {2}]
  %18 = xla_tuple %s15, %s16, %s17
  %s19 = sld [smem:[#allocation0]]
  $region117: #{syntactic_transformer_forward.3} parent=0
    _
  %s21 = ssub.s32 1, %s19
  %s22 = scalar_select 0, %s21, %s19
  %23 = sst [smem:[#allocation7]] %s2
  $region1: #{syntactic_transformer_forward.3} parent=0
    #allocation8 [shape = 'u8[8192]{0}', space=vmem, size = 0x2000, scoped, tag = 'output window, operand 0']
    #allocation9 [shape = 's32[2]{0}', space=sflag, size = 0x8, scoped, tag = 'scoped memory for syntactic_transformer_forward.3']
    #allocation10 [shape = 'u8[8192]{0}', space=vmem, size = 0x2000, scoped, tag = 'output window, operand 1']
    #allocation11 [shape = 's32[2]{0}', space=sflag, size = 0x8, scoped, tag = 'scoped memory for syntactic_transformer_forward.3']
    #allocation12 [shape = 'u8[1024]{0}', space=vmem, size = 0x400, scoped, tag = 'output window, operand 2']
    %24 = vsyncpa [#allocation9], 0
    %s25 = scalar_lea.sflag [#allocation9], 1
    %26 = vsyncpa %s25, 0
    %27 = vsyncpa [#allocation11], 0
    %s28 = scalar_lea.sflag [#allocation11], 1
    %29 = vsyncpa %s28, 0
    loop: start=0, step=1, limit=6
    $region2: #{syntactic_transformer_forward.3} parent=1 // loop_pre_header
      _
    $region3: #{syntactic_transformer_forward.3} parent=1 // loop_header
      %s31 = sphi 0, %s35
      %p32 = scmp.ge.s32.totalorder %s31, 6
      %s38 = sphi 0, %s50
      %s39 = sphi 0, %s46
      %s40 = sphi 0, %s38
      %s41 = sphi 0, %s39
      %s42 = sphi 0, %s40
      %s43 = sphi 0, %s41
      %s53 = sphi 0, %s55
      %s56 = sphi 0, %s53
      %s57 = sphi 0, %s56
      %s73 = sphi 0, %s57
      %s77 = sphi 0, %s77
      %s79 = sphi 0, %s77
      %s80 = sphi 0, %s79
      %s94 = sphi 0, %s80
      %s98 = sphi 0, %s98
      %s100 = sphi 0, %s98
      %s101 = sphi 0, %s100
      %s115 = sphi 0, %s101
      %s119 = sphi 0, %s119
      %s121 = sphi 0, %s119
      %s122 = sphi 0, %s121
      %s136 = sphi 0, %s122
      %s140 = sphi 0, %s140
      %s142 = sphi 0, %s140
      %s143 = sphi 0, %s142
      %s157 = sphi 0, %s143
      %s161 = sphi 0, %s161
      %s163 = sphi 0, %s161
      %s164 = sphi 0, %s163
      %s178 = sphi 0, %s164
      %s182 = sphi 0, %s182
      %s184 = sphi 0, %s182
      %s185 = sphi 0, %s184
      %s199 = sphi 0, %s185
      %s203 = sphi 0, %s203
      %s205 = sphi 0, %s203
      %s206 = sphi 0, %s205
      %s220 = sphi 0, %s206
      %s224 = sphi 0, %s224
      %s226 = sphi 0, %s224
      %s227 = sphi 0, %s226
      %s241 = sphi 0, %s227
      %s245 = sphi 0, %s245
      %s247 = sphi 0, %s245
      %s248 = sphi 0, %s247
      %s262 = sphi 0, %s248
      %s266 = sphi 0, %s266
      %s268 = sphi 0, %s266
      %s269 = sphi 0, %s268
      %s283 = sphi 0, %s269
      %s287 = sphi 0, %s287
      %s289 = sphi 0, %s287
      %s290 = sphi 0, %s289
      %s304 = sphi 0, %s290
      %s308 = sphi 0, %s308
      %s310 = sphi 0, %s308
      %s311 = sphi 0, %s310
      %s325 = sphi 0, %s311
      %s329 = sphi 0, %s329
      %s331 = sphi 0, %s329
      %s332 = sphi 0, %s331
      %s346 = sphi 0, %s332
      %s350 = sphi 0, %s350
      %s352 = sphi 0, %s350
      %s353 = sphi 0, %s352
      %s367 = sphi 0, %s353
      %s375 = sphi 0, %s377
      %s378 = sphi 0, %s375
      %s379 = sphi 0, %s378
      %s395 = sphi 0, %s379
      %s403 = sphi 0, %s405
      %s406 = sphi 0, %s403
      %s407 = sphi 0, %s406
      %s423 = sphi 0, %s407
      %s429 = sphi 0, %s431
      %s432 = sphi 0, %s429
      %s433 = sphi 0, %s432
      %s449 = sphi 0, %s433
    $region4: #{syntactic_transformer_forward.3} parent=1 // loop_header_branch
      %34 = sbr.rel (%p32) target = $region8
    $region5: #{syntactic_transformer_forward.3} parent=1 // loop_body
      %s36 = ssub.s32 %s31, 1
      %s37 = ssub.s32 %s31, 2
      %s44 = sadd.s32 1, %s39
      %p45 = scmp.ge.s32.totalorder %s44, 2
      %s46 = scalar_select %p45, 0, %s44
      %s47 = sadd.s32 1, %s38
      %s48 = scalar_select %p45, %s47, %s38
      %p49 = scmp.ge.s32.totalorder %s48, 2
      %s50 = scalar_select %p49, 0, %s48
      %s51 = ssub.s32 %s38, %s50
      %p52 = scmp.eq.s32.totalorder %s51, 0
      %s54 = sadd.s32 %s53, 1
      %s55 = scalar_select %p52, %s53, %s54
      %p58 = pneg %p52
      %p59 = scmp.eq.s32.totalorder %s31, 3
      %p60 = por %p58, %p59
      %p61 = scmp.ne.s32.totalorder %s53, %s56
      %p62 = scmp.eq.s32.totalorder %s31, 0
      %p63 = por %p61, %p62
      %p64 = scmp.ne.s32.totalorder %s53, %s56
      %p65 = scmp.eq.s32.totalorder %s36, 3
      %p66 = por %p64, %p65
      %p67 = scmp.ne.s32.totalorder %s56, %s57
      %p68 = scmp.eq.s32.totalorder %s36, 0
      %p69 = por %p67, %p68
      %p70 = scmp.ne.s32.totalorder %s56, %s57
      %p71 = scmp.eq.s32.totalorder %s37, 3
      %p72 = por %p70, %p71
      %p74 = scmp.ne.s32.totalorder %s57, %s73
      %p75 = scmp.eq.s32.totalorder %s37, 0
      %p76 = por %p74, %p75
      %s78 = sadd.s32 %s77, 1
      %p81 = scmp.eq.s32.totalorder %s31, 3
      %p82 = scmp.ne.s32.totalorder %s77, %s79
      %p83 = scmp.eq.s32.totalorder %s31, 0
      %p84 = por %p82, %p83
      %p85 = scmp.ne.s32.totalorder %s77, %s79
      %p86 = scmp.eq.s32.totalorder %s36, 3
      %p87 = por %p85, %p86
      %p88 = scmp.ne.s32.totalorder %s79, %s80
      %p89 = scmp.eq.s32.totalorder %s36, 0
      %p90 = por %p88, %p89
      %p91 = scmp.ne.s32.totalorder %s79, %s80
      %p92 = scmp.eq.s32.totalorder %s37, 3
      %p93 = por %p91, %p92
      %p95 = scmp.ne.s32.totalorder %s80, %s94
      %p96 = scmp.eq.s32.totalorder %s37, 0
      %p97 = por %p95, %p96
      %s99 = sadd.s32 %s98, 1
      %p102 = scmp.eq.s32.totalorder %s31, 3
      %p103 = scmp.ne.s32.totalorder %s98, %s100
      %p104 = scmp.eq.s32.totalorder %s31, 0
      %p105 = por %p103, %p104
      %p106 = scmp.ne.s32.totalorder %s98, %s100
      %p107 = scmp.eq.s32.totalorder %s36, 3
      %p108 = por %p106, %p107
      %p109 = scmp.ne.s32.totalorder %s100, %s101
      %p110 = scmp.eq.s32.totalorder %s36, 0
      %p111 = por %p109, %p110
      %p112 = scmp.ne.s32.totalorder %s100, %s101
      %p113 = scmp.eq.s32.totalorder %s37, 3
      %p114 = por %p112, %p113
      %p116 = scmp.ne.s32.totalorder %s101, %s115
      %p117 = scmp.eq.s32.totalorder %s37, 0
      %p118 = por %p116, %p117
      %s120 = sadd.s32 %s119, 1
      %p123 = scmp.eq.s32.totalorder %s31, 3
      %p124 = scmp.ne.s32.totalorder %s119, %s121
      %p125 = scmp.eq.s32.totalorder %s31, 0
      %p126 = por %p124, %p125
      %p127 = scmp.ne.s32.totalorder %s119, %s121
      %p128 = scmp.eq.s32.totalorder %s36, 3
      %p129 = por %p127, %p128
      %p130 = scmp.ne.s32.totalorder %s121, %s122
      %p131 = scmp.eq.s32.totalorder %s36, 0
      %p132 = por %p130, %p131
      %p133 = scmp.ne.s32.totalorder %s121, %s122
      %p134 = scmp.eq.s32.totalorder %s37, 3
      %p135 = por %p133, %p134
      %p137 = scmp.ne.s32.totalorder %s122, %s136
      %p138 = scmp.eq.s32.totalorder %s37, 0
      %p139 = por %p137, %p138
      %s141 = sadd.s32 %s140, 1
      %p144 = scmp.eq.s32.totalorder %s31, 3
      %p145 = scmp.ne.s32.totalorder %s140, %s142
      %p146 = scmp.eq.s32.totalorder %s31, 0
      %p147 = por %p145, %p146
      %p148 = scmp.ne.s32.totalorder %s140, %s142
      %p149 = scmp.eq.s32.totalorder %s36, 3
      %p150 = por %p148, %p149
      %p151 = scmp.ne.s32.totalorder %s142, %s143
      %p152 = scmp.eq.s32.totalorder %s36, 0
      %p153 = por %p151, %p152
      %p154 = scmp.ne.s32.totalorder %s142, %s143
      %p155 = scmp.eq.s32.totalorder %s37, 3
      %p156 = por %p154, %p155
      %p158 = scmp.ne.s32.totalorder %s143, %s157
      %p159 = scmp.eq.s32.totalorder %s37, 0
      %p160 = por %p158, %p159
      %s162 = sadd.s32 %s161, 1
      %p165 = scmp.eq.s32.totalorder %s31, 3
      %p166 = scmp.ne.s32.totalorder %s161, %s163
      %p167 = scmp.eq.s32.totalorder %s31, 0
      %p168 = por %p166, %p167
      %p169 = scmp.ne.s32.totalorder %s161, %s163
      %p170 = scmp.eq.s32.totalorder %s36, 3
      %p171 = por %p169, %p170
      %p172 = scmp.ne.s32.totalorder %s163, %s164
      %p173 = scmp.eq.s32.totalorder %s36, 0
      %p174 = por %p172, %p173
      %p175 = scmp.ne.s32.totalorder %s163, %s164
      %p176 = scmp.eq.s32.totalorder %s37, 3
      %p177 = por %p175, %p176
      %p179 = scmp.ne.s32.totalorder %s164, %s178
      %p180 = scmp.eq.s32.totalorder %s37, 0
      %p181 = por %p179, %p180
      %s183 = sadd.s32 %s182, 1
      %p186 = scmp.eq.s32.totalorder %s31, 3
      %p187 = scmp.ne.s32.totalorder %s182, %s184
      %p188 = scmp.eq.s32.totalorder %s31, 0
      %p189 = por %p187, %p188
      %p190 = scmp.ne.s32.totalorder %s182, %s184
      %p191 = scmp.eq.s32.totalorder %s36, 3
      %p192 = por %p190, %p191
      %p193 = scmp.ne.s32.totalorder %s184, %s185
      %p194 = scmp.eq.s32.totalorder %s36, 0
      %p195 = por %p193, %p194
      %p196 = scmp.ne.s32.totalorder %s184, %s185
      %p197 = scmp.eq.s32.totalorder %s37, 3
      %p198 = por %p196, %p197
      %p200 = scmp.ne.s32.totalorder %s185, %s199
      %p201 = scmp.eq.s32.totalorder %s37, 0
      %p202 = por %p200, %p201
      %s204 = sadd.s32 %s203, 1
      %p207 = scmp.eq.s32.totalorder %s31, 3
      %p208 = scmp.ne.s32.totalorder %s203, %s205
      %p209 = scmp.eq.s32.totalorder %s31, 0
      %p210 = por %p208, %p209
      %p211 = scmp.ne.s32.totalorder %s203, %s205
      %p212 = scmp.eq.s32.totalorder %s36, 3
      %p213 = por %p211, %p212
      %p214 = scmp.ne.s32.totalorder %s205, %s206
      %p215 = scmp.eq.s32.totalorder %s36, 0
      %p216 = por %p214, %p215
      %p217 = scmp.ne.s32.totalorder %s205, %s206
      %p218 = scmp.eq.s32.totalorder %s37, 3
      %p219 = por %p217, %p218
      %p221 = scmp.ne.s32.totalorder %s206, %s220
      %p222 = scmp.eq.s32.totalorder %s37, 0
      %p223 = por %p221, %p222
      %s225 = sadd.s32 %s224, 1
      %p228 = scmp.eq.s32.totalorder %s31, 3
      %p229 = scmp.ne.s32.totalorder %s224, %s226
      %p230 = scmp.eq.s32.totalorder %s31, 0
      %p231 = por %p229, %p230
      %p232 = scmp.ne.s32.totalorder %s224, %s226
      %p233 = scmp.eq.s32.totalorder %s36, 3
      %p234 = por %p232, %p233
      %p235 = scmp.ne.s32.totalorder %s226, %s227
      %p236 = scmp.eq.s32.totalorder %s36, 0
      %p237 = por %p235, %p236
      %p238 = scmp.ne.s32.totalorder %s226, %s227
      %p239 = scmp.eq.s32.totalorder %s37, 3
      %p240 = por %p238, %p239
      %p242 = scmp.ne.s32.totalorder %s227, %s241
      %p243 = scmp.eq.s32.totalorder %s37, 0
      %p244 = por %p242, %p243
      %s246 = sadd.s32 %s245, 1
      %p249 = scmp.eq.s32.totalorder %s31, 3
      %p250 = scmp.ne.s32.totalorder %s245, %s247
      %p251 = scmp.eq.s32.totalorder %s31, 0
      %p252 = por %p250, %p251
      %p253 = scmp.ne.s32.totalorder %s245, %s247
      %p254 = scmp.eq.s32.totalorder %s36, 3
      %p255 = por %p253, %p254
      %p256 = scmp.ne.s32.totalorder %s247, %s248
      %p257 = scmp.eq.s32.totalorder %s36, 0
      %p258 = por %p256, %p257
      %p259 = scmp.ne.s32.totalorder %s247, %s248
      %p260 = scmp.eq.s32.totalorder %s37, 3
      %p261 = por %p259, %p260
      %p263 = scmp.ne.s32.totalorder %s248, %s262
      %p264 = scmp.eq.s32.totalorder %s37, 0
      %p265 = por %p263, %p264
      %s267 = sadd.s32 %s266, 1
      %p270 = scmp.eq.s32.totalorder %s31, 3
      %p271 = scmp.ne.s32.totalorder %s266, %s268
      %p272 = scmp.eq.s32.totalorder %s31, 0
      %p273 = por %p271, %p272
      %p274 = scmp.ne.s32.totalorder %s266, %s268
      %p275 = scmp.eq.s32.totalorder %s36, 3
      %p276 = por %p274, %p275
      %p277 = scmp.ne.s32.totalorder %s268, %s269
      %p278 = scmp.eq.s32.totalorder %s36, 0
      %p279 = por %p277, %p278
      %p280 = scmp.ne.s32.totalorder %s268, %s269
      %p281 = scmp.eq.s32.totalorder %s37, 3
      %p282 = por %p280, %p281
      %p284 = scmp.ne.s32.totalorder %s269, %s283
      %p285 = scmp.eq.s32.totalorder %s37, 0
      %p286 = por %p284, %p285
      %s288 = sadd.s32 %s287, 1
      %p291 = scmp.eq.s32.totalorder %s31, 3
      %p292 = scmp.ne.s32.totalorder %s287, %s289
      %p293 = scmp.eq.s32.totalorder %s31, 0
      %p294 = por %p292, %p293
      %p295 = scmp.ne.s32.totalorder %s287, %s289
      %p296 = scmp.eq.s32.totalorder %s36, 3
      %p297 = por %p295, %p296
      %p298 = scmp.ne.s32.totalorder %s289, %s290
      %p299 = scmp.eq.s32.totalorder %s36, 0
      %p300 = por %p298, %p299
      %p301 = scmp.ne.s32.totalorder %s289, %s290
      %p302 = scmp.eq.s32.totalorder %s37, 3
      %p303 = por %p301, %p302
      %p305 = scmp.ne.s32.totalorder %s290, %s304
      %p306 = scmp.eq.s32.totalorder %s37, 0
      %p307 = por %p305, %p306
      %s309 = sadd.s32 %s308, 1
      %p312 = scmp.eq.s32.totalorder %s31, 3
      %p313 = scmp.ne.s32.totalorder %s308, %s310
      %p314 = scmp.eq.s32.totalorder %s31, 0
      %p315 = por %p313, %p314
      %p316 = scmp.ne.s32.totalorder %s308, %s310
      %p317 = scmp.eq.s32.totalorder %s36, 3
      %p318 = por %p316, %p317
      %p319 = scmp.ne.s32.totalorder %s310, %s311
      %p320 = scmp.eq.s32.totalorder %s36, 0
      %p321 = por %p319, %p320
      %p322 = scmp.ne.s32.totalorder %s310, %s311
      %p323 = scmp.eq.s32.totalorder %s37, 3
      %p324 = por %p322, %p323
      %p326 = scmp.ne.s32.totalorder %s311, %s325
      %p327 = scmp.eq.s32.totalorder %s37, 0
      %p328 = por %p326, %p327
      %s330 = sadd.s32 %s329, 1
      %p333 = scmp.eq.s32.totalorder %s31, 3
      %p334 = scmp.ne.s32.totalorder %s329, %s331
      %p335 = scmp.eq.s32.totalorder %s31, 0
      %p336 = por %p334, %p335
      %p337 = scmp.ne.s32.totalorder %s329, %s331
      %p338 = scmp.eq.s32.totalorder %s36, 3
      %p339 = por %p337, %p338
      %p340 = scmp.ne.s32.totalorder %s331, %s332
      %p341 = scmp.eq.s32.totalorder %s36, 0
      %p342 = por %p340, %p341
      %p343 = scmp.ne.s32.totalorder %s331, %s332
      %p344 = scmp.eq.s32.totalorder %s37, 3
      %p345 = por %p343, %p344
      %p347 = scmp.ne.s32.totalorder %s332, %s346
      %p348 = scmp.eq.s32.totalorder %s37, 0
      %p349 = por %p347, %p348
      %s351 = sadd.s32 %s350, 1
      %p354 = scmp.eq.s32.totalorder %s31, 3
      %p355 = scmp.ne.s32.totalorder %s350, %s352
      %p356 = scmp.eq.s32.totalorder %s31, 0
      %p357 = por %p355, %p356
      %p358 = scmp.ne.s32.totalorder %s350, %s352
      %p359 = scmp.eq.s32.totalorder %s36, 3
      %p360 = por %p358, %p359
      %p361 = scmp.ne.s32.totalorder %s352, %s353
      %p362 = scmp.eq.s32.totalorder %s36, 0
      %p363 = por %p361, %p362
      %p364 = scmp.ne.s32.totalorder %s352, %s353
      %p365 = scmp.eq.s32.totalorder %s37, 3
      %p366 = por %p364, %p365
      %p368 = scmp.ne.s32.totalorder %s353, %s367
      %p369 = scmp.eq.s32.totalorder %s37, 0
      %p370 = por %p368, %p369
      %s371 = ssub.s32 %s38, %s50
      %s372 = ssub.s32 %s39, %s46
      %s373 = sor.u32 %s371, %s372
      %p374 = scmp.eq.s32.totalorder %s373, 0
      %s376 = sadd.s32 %s375, 1
      %s377 = scalar_select %p374, %s375, %s376
      %p380 = pneg %p374
      %p381 = scmp.eq.s32.totalorder %s31, 3
      %p382 = por %p380, %p381
      %p383 = scmp.ne.s32.totalorder %s375, %s378
      %p384 = scmp.eq.s32.totalorder %s31, 0
      %p385 = por %p383, %p384
      %p386 = scmp.ne.s32.totalorder %s375, %s378
      %p387 = scmp.eq.s32.totalorder %s36, 3
      %p388 = por %p386, %p387
      %p389 = scmp.ne.s32.totalorder %s378, %s379
      %p390 = scmp.eq.s32.totalorder %s36, 0
      %p391 = por %p389, %p390
      %p392 = scmp.ne.s32.totalorder %s378, %s379
      %p393 = scmp.eq.s32.totalorder %s37, 3
      %p394 = por %p392, %p393
      %p396 = scmp.ne.s32.totalorder %s379, %s395
      %p397 = scmp.eq.s32.totalorder %s37, 0
      %p398 = por %p396, %p397
      %s399 = ssub.s32 %s38, %s50
      %s400 = ssub.s32 %s39, %s46
      %s401 = sor.u32 %s399, %s400
      %p402 = scmp.eq.s32.totalorder %s401, 0
      %s404 = sadd.s32 %s403, 1
      %s405 = scalar_select %p402, %s403, %s404
      %p408 = pneg %p402
      %p409 = scmp.eq.s32.totalorder %s31, 3
      %p410 = por %p408, %p409
      %p411 = scmp.ne.s32.totalorder %s403, %s406
      %p412 = scmp.eq.s32.totalorder %s31, 0
      %p413 = por %p411, %p412
      %p414 = scmp.ne.s32.totalorder %s403, %s406
      %p415 = scmp.eq.s32.totalorder %s36, 3
      %p416 = por %p414, %p415
      %p417 = scmp.ne.s32.totalorder %s406, %s407
      %p418 = scmp.eq.s32.totalorder %s36, 0
      %p419 = por %p417, %p418
      %p420 = scmp.ne.s32.totalorder %s406, %s407
      %p421 = scmp.eq.s32.totalorder %s37, 3
      %p422 = por %p420, %p421
      %p424 = scmp.ne.s32.totalorder %s407, %s423
      %p425 = scmp.eq.s32.totalorder %s37, 0
      %p426 = por %p424, %p425
      %s427 = ssub.s32 %s38, %s50
      %p428 = scmp.eq.s32.totalorder %s427, 0
      %s430 = sadd.s32 %s429, 1
      %s431 = scalar_select %p428, %s429, %s430
      %p434 = pneg %p428
      %p435 = scmp.eq.s32.totalorder %s31, 3
      %p436 = por %p434, %p435
      %p437 = scmp.ne.s32.totalorder %s429, %s432
      %p438 = scmp.eq.s32.totalorder %s31, 0
      %p439 = por %p437, %p438
      %p440 = scmp.ne.s32.totalorder %s429, %s432
      %p441 = scmp.eq.s32.totalorder %s36, 3
      %p442 = por %p440, %p441
      %p443 = scmp.ne.s32.totalorder %s432, %s433
      %p444 = scmp.eq.s32.totalorder %s36, 0
      %p445 = por %p443, %p444
      %p446 = scmp.ne.s32.totalorder %s432, %s433
      %p447 = scmp.eq.s32.totalorder %s37, 3
      %p448 = por %p446, %p447
      %p450 = scmp.ne.s32.totalorder %s433, %s449
      %p451 = scmp.eq.s32.totalorder %s37, 0
      %p452 = por %p450, %p451
      %p453 = scmp.le.s32.totalorder 1, %s31
      %p454 = scmp.lt.s32.totalorder %s31, 5
      %p455 = pnand %p453, %p454
      %p456 = pneg %p455
      // Predicated region
      $region9: #{syntactic_transformer_forward.3} parent=5 // pred_check
        _
      $region10: #{syntactic_transformer_forward.3} parent=5 // pred_check_branch
        %458 = sbr.rel (%p455) target = $region12
      $region11: #{syntactic_transformer_forward.3} parent=5 // pred_region
        %s459 = ssub.s32 %s31, 1
        // Predicated region
        $region13: #{syntactic_transformer_forward.3} parent=11 // pred_check
          %p460 = pneg %p90
        $region14: #{syntactic_transformer_forward.3} parent=11 // pred_check_branch
          %462 = sbr.rel (%p460) target = $region16
        $region15: #{syntactic_transformer_forward.3} parent=11 // pred_region
          _
        $region16: #{syntactic_transformer_forward.3} parent=11 // pred_fallthru
          _
        // Predicated region
        $region17: #{syntactic_transformer_forward.3} parent=11 // pred_check
          %p463 = pneg %p111
        $region18: #{syntactic_transformer_forward.3} parent=11 // pred_check_branch
          %465 = sbr.rel (%p463) target = $region20
        $region19: #{syntactic_transformer_forward.3} parent=11 // pred_region
          _
        $region20: #{syntactic_transformer_forward.3} parent=11 // pred_fallthru
          _
        // Predicated region
        $region21: #{syntactic_transformer_forward.3} parent=11 // pred_check
          %p466 = pneg %p132
        $region22: #{syntactic_transformer_forward.3} parent=11 // pred_check_branch
          %468 = sbr.rel (%p466) target = $region24
        $region23: #{syntactic_transformer_forward.3} parent=11 // pred_region
          _
        $region24: #{syntactic_transformer_forward.3} parent=11 // pred_fallthru
          _
        // Predicated region
        $region25: #{syntactic_transformer_forward.3} parent=11 // pred_check
          %p469 = pneg %p153
        $region26: #{syntactic_transformer_forward.3} parent=11 // pred_check_branch
          %471 = sbr.rel (%p469) target = $region28
        $region27: #{syntactic_transformer_forward.3} parent=11 // pred_region
          _
        $region28: #{syntactic_transformer_forward.3} parent=11 // pred_fallthru
          _
        // Predicated region
        $region29: #{syntactic_transformer_forward.3} parent=11 // pred_check
          %p472 = pneg %p174
        $region30: #{syntactic_transformer_forward.3} parent=11 // pred_check_branch
          %474 = sbr.rel (%p472) target = $region32
        $region31: #{syntactic_transformer_forward.3} parent=11 // pred_region
          _
        $region32: #{syntactic_transformer_forward.3} parent=11 // pred_fallthru
          _
        // Predicated region
        $region33: #{syntactic_transformer_forward.3} parent=11 // pred_check
          %p475 = pneg %p195
        $region34: #{syntactic_transformer_forward.3} parent=11 // pred_check_branch
          %477 = sbr.rel (%p475) target = $region36
        $region35: #{syntactic_transformer_forward.3} parent=11 // pred_region
          _
        $region36: #{syntactic_transformer_forward.3} parent=11 // pred_fallthru
          _
        // Predicated region
        $region37: #{syntactic_transformer_forward.3} parent=11 // pred_check
          %p478 = pneg %p216
        $region38: #{syntactic_transformer_forward.3} parent=11 // pred_check_branch
          %480 = sbr.rel (%p478) target = $region40
        $region39: #{syntactic_transformer_forward.3} parent=11 // pred_region
          _
        $region40: #{syntactic_transformer_forward.3} parent=11 // pred_fallthru
          _
        // Predicated region
        $region41: #{syntactic_transformer_forward.3} parent=11 // pred_check
          %p481 = pneg %p237
        $region42: #{syntactic_transformer_forward.3} parent=11 // pred_check_branch
          %483 = sbr.rel (%p481) target = $region44
        $region43: #{syntactic_transformer_forward.3} parent=11 // pred_region
          _
        $region44: #{syntactic_transformer_forward.3} parent=11 // pred_fallthru
          _
        // Predicated region
        $region45: #{syntactic_transformer_forward.3} parent=11 // pred_check
          %p484 = pneg %p258
        $region46: #{syntactic_transformer_forward.3} parent=11 // pred_check_branch
          %486 = sbr.rel (%p484) target = $region48
        $region47: #{syntactic_transformer_forward.3} parent=11 // pred_region
          _
        $region48: #{syntactic_transformer_forward.3} parent=11 // pred_fallthru
          _
        // Predicated region
        $region49: #{syntactic_transformer_forward.3} parent=11 // pred_check
          %p487 = pneg %p279
        $region50: #{syntactic_transformer_forward.3} parent=11 // pred_check_branch
          %489 = sbr.rel (%p487) target = $region52
        $region51: #{syntactic_transformer_forward.3} parent=11 // pred_region
          _
        $region52: #{syntactic_transformer_forward.3} parent=11 // pred_fallthru
          _
        // Predicated region
        $region53: #{syntactic_transformer_forward.3} parent=11 // pred_check
          %p490 = pneg %p300
        $region54: #{syntactic_transformer_forward.3} parent=11 // pred_check_branch
          %492 = sbr.rel (%p490) target = $region56
        $region55: #{syntactic_transformer_forward.3} parent=11 // pred_region
          _
        $region56: #{syntactic_transformer_forward.3} parent=11 // pred_fallthru
          _
        // Predicated region
        $region57: #{syntactic_transformer_forward.3} parent=11 // pred_check
          %p493 = pneg %p321
        $region58: #{syntactic_transformer_forward.3} parent=11 // pred_check_branch
          %495 = sbr.rel (%p493) target = $region60
        $region59: #{syntactic_transformer_forward.3} parent=11 // pred_region
          _
        $region60: #{syntactic_transformer_forward.3} parent=11 // pred_fallthru
          _
        // Predicated region
        $region61: #{syntactic_transformer_forward.3} parent=11 // pred_check
          %p496 = pneg %p342
        $region62: #{syntactic_transformer_forward.3} parent=11 // pred_check_branch
          %498 = sbr.rel (%p496) target = $region64
        $region63: #{syntactic_transformer_forward.3} parent=11 // pred_region
          _
        $region64: #{syntactic_transformer_forward.3} parent=11 // pred_fallthru
          _
        // Predicated region
        $region65: #{syntactic_transformer_forward.3} parent=11 // pred_check
          %p499 = pneg %p363
        $region66: #{syntactic_transformer_forward.3} parent=11 // pred_check_branch
          %501 = sbr.rel (%p499) target = $region68
        $region67: #{syntactic_transformer_forward.3} parent=11 // pred_region
          _
        $region68: #{syntactic_transformer_forward.3} parent=11 // pred_fallthru
          _
      $region12: #{syntactic_transformer_forward.3} parent=5 // pred_fallthru
        _
      %p502 = scmp.lt.s32.totalorder %s31, 4
      // Predicated region
      $region69: #{syntactic_transformer_forward.3} parent=5 // pred_check
        %p503 = pneg %p502
      $region70: #{syntactic_transformer_forward.3} parent=5 // pred_check_branch
        %505 = sbr.rel (%p503) target = $region72
      $region71: #{syntactic_transformer_forward.3} parent=5 // pred_region
        // Predicated region
        $region73: #{syntactic_transformer_forward.3} parent=71 // pred_check
          %p506 = pneg %p63
        $region74: #{syntactic_transformer_forward.3} parent=71 // pred_check_branch
          %508 = sbr.rel (%p506) target = $region76
        $region75: #{syntactic_transformer_forward.3} parent=71 // pred_region
          %p509 = scmp.lt.s32.totalorder %s38, 1
          %s510 = scalar_select %p509, %s38, 1
          %s511 = smul.addr %s510, 2
          %s512 = smul.addr %s511, 8
          %s513 = scalar_lea.vmem %s0, %s512
        $region76: #{syntactic_transformer_forward.3} parent=71 // pred_fallthru
          _
      $region72: #{syntactic_transformer_forward.3} parent=5 // pred_fallthru
        _
      %p514 = scmp.le.s32.totalorder 1, %s31
      %p515 = scmp.lt.s32.totalorder %s31, 5
      %p516 = pnand %p514, %p515
      %p517 = pneg %p516
      // Predicated region
      $region77: #{syntactic_transformer_forward.3} parent=5 // pred_check
        _
      $region78: #{syntactic_transformer_forward.3} parent=5 // pred_check_branch
        %519 = sbr.rel (%p516) target = $region80
      $region79: #{syntactic_transformer_forward.3} parent=5 // pred_region
        %s520 = ssub.s32 %s31, 1
        %p521 = scmp.lt.s32.totalorder %s40, 1
        %s522 = scalar_select %p521, %s40, 1
        %s523 = smul.addr %s522, 2
        %s524 = smul.addr %s523, 8
        %s525 = scalar_lea.vmem %s0, %s524
        %p526 = pneg %p69
        %p527 = pneg %p66
        %p528 = pneg %p90
        %p529 = pneg %p87
        %p530 = pneg %p111
        %p531 = pneg %p108
        %p532 = pneg %p132
        %p533 = pneg %p129
        %p534 = pneg %p153
        %p535 = pneg %p150
        %p536 = pneg %p174
        %p537 = pneg %p171
        %p538 = pneg %p195
        %p539 = pneg %p192
        %p540 = pneg %p216
        %p541 = pneg %p213
        %p542 = pneg %p237
        %p543 = pneg %p234
        %p544 = pneg %p258
        %p545 = pneg %p255
        %p546 = pneg %p279
        %p547 = pneg %p276
        %p548 = pneg %p300
        %p549 = pneg %p297
        %p550 = pneg %p321
        %p551 = pneg %p318
        %p552 = pneg %p342
        %p553 = pneg %p339
        %p554 = pneg %p363
        %p555 = pneg %p360
        %p556 = pneg %p391
        %p557 = pneg %p388
        %s558 = sand.u32 %s378, 1
        %s559 = scalar_lea.sflag [#allocation9], %s558
        %s560 = sand.u32 %s378, 1
        %s561 = smul.addr %s560, 8
        %s562 = scalar_lea.vmem [#allocation8], %s561
        %p563 = pneg %p419
        %p564 = pneg %p416
        %s565 = sand.u32 %s36, 1
        %s566 = scalar_lea.sflag [#allocation11], %s565
        %s567 = sand.u32 %s406, 1
        %s568 = smul.addr %s567, 8
        %s569 = scalar_lea.vmem [#allocation10], %s568
        %p570 = pneg %p445
        %p571 = pneg %p442
        %s572 = sand.u32 %s36, 1
        %s573 = scalar_lea.sflag [#allocation11], %s572
        %s574 = sand.u32 %s432, 1
        %s575 = scalar_lea.vmem [#allocation12], %s574
        %p576 = scmp.lt.s32.totalorder %s40, 1
        %s577 = scalar_select %p576, %s40, 1
        %s578 = smul.addr %s577, 2
        %s579 = smul.addr %s578, 8
        %s580 = scalar_lea.vmem %s0, %s579
        %s582 = smul.u32 %s41, 8
        %p583 = scmp.eq.s32.totalorder %s41, 0
        // Predicated region
        $region81: #{syntactic_transformer_forward.3} parent=79 // pred_check
          %p584 = pneg %p583
        $region82: #{syntactic_transformer_forward.3} parent=79 // pred_check_branch
          %586 = sbr.rel (%p584) target = $region84
        $region83: #{syntactic_transformer_forward.3} parent=79 // pred_region
          %v587 = vld [vmem:[%s580] sm:$0xff]
          %v588 = vld [vmem:[%s580 + $0x8] sm:$0xff]
          %v589 = vld [vmem:[%s1] sm:$0x7]
          %vm590 = vcmask 261120
          %v592 = vsel %vm590, %v589, 0
          %v595 = vsel %vm590, %v587, 0
          %v598 = vsel %vm590, %v588, 0
          %600 = vmatprep.subr.mxu0 0.0
          %601 = vmatpush1.xpose.msra.mxu0 0.0
          %602 = vmatprep.subr.mxu0 0.0
          %603 = vmatpush1.xpose.msra.mxu0 0.0
          %604 = vmatprep.subr.mxu0 0.0
          %605 = vmatpush1.xpose.msra.mxu0 0.0
          %606 = vmatprep.subr.mxu0 0.0
          %607 = vmatpush1.xpose.msra.mxu0 0.0
          %608 = vmatprep.subr.mxu0 0.0
          %609 = vmatpush1.xpose.msra.mxu0 0.0
          %610 = vmatprep.subr.mxu0 0.0
          %611 = vmatpush1.xpose.msra.mxu0 0.0
          %612 = vmatprep.subr.mxu0 0.0
          %613 = vmatpush1.xpose.msra.mxu0 0.0
          %614 = vmatprep.subr.mxu0 0.0
          %615 = vmatpush1.xpose.msra.mxu0 0.0
          %616 = vmatprep.subr.mxu0 0.0
          %617 = vmatpush1.xpose.msra.mxu0 0.0
          %618 = vmatprep.subr.mxu0 0.0
          %619 = vmatpush1.xpose.msra.mxu0 0.0
          %620 = vmatprep.subr.mxu0 0.0
          %621 = vmatpush1.xpose.msra.mxu0 0.0
          %622 = vmatprep.subr.mxu0 0.0
          %623 = vmatpush1.xpose.msra.mxu0 0.0
          %624 = vmatprep.subr.mxu0 0.0
          %625 = vmatpush1.xpose.msra.mxu0 0.0
          %626 = vmatprep.subr.mxu0 0.0
          %627 = vmatpush1.xpose.msra.mxu0 0.0
          %628 = vmatprep.subr.mxu0 0.0
          %629 = vmatpush1.xpose.msra.mxu0 %v598
          %630 = vmatprep.subr.mxu0 0.0
          %631 = vmatpush1.xpose.msra.mxu0 %v595
          %632 = vmatprep.subr.mxu0 0.0
          %633 = vmatpush2.xpose.msra.mxu0 0.0
          %634 = vmatprep.subr.mxu0 0.0
          %635 = vmatpush2.xpose.msra.mxu0 0.0
          %636 = vmatprep.subr.mxu0 0.0
          %637 = vmatpush2.xpose.msra.mxu0 0.0
          %638 = vmatprep.subr.mxu0 0.0
          %639 = vmatpush2.xpose.msra.mxu0 0.0
          %640 = vmatprep.subr.mxu0 0.0
          %641 = vmatpush2.xpose.msra.mxu0 0.0
          %642 = vmatprep.subr.mxu0 0.0
          %643 = vmatpush2.xpose.msra.mxu0 0.0
          %644 = vmatprep.subr.mxu0 0.0
          %645 = vmatpush2.xpose.msra.mxu0 0.0
          %646 = vmatprep.subr.mxu0 0.0
          %647 = vmatpush2.xpose.msra.mxu0 0.0
          %648 = vmatprep.subr.mxu0 0.0
          %649 = vmatpush2.xpose.msra.mxu0 0.0
          %650 = vmatprep.subr.mxu0 0.0
          %651 = vmatpush2.xpose.msra.mxu0 0.0
          %652 = vmatprep.subr.mxu0 0.0
          %653 = vmatpush2.xpose.msra.mxu0 0.0
          %654 = vmatprep.subr.mxu0 0.0
          %655 = vmatpush2.xpose.msra.mxu0 0.0
          %656 = vmatprep.subr.mxu0 0.0
          %657 = vmatpush2.xpose.msra.mxu0 0.0
          %658 = vmatprep.subr.mxu0 0.0
          %659 = vmatpush2.xpose.msra.mxu0 0.0
          %660 = vmatprep.subr.mxu0 0.0
          %661 = vmatpush2.xpose.msra.mxu0 0.0
          %662 = vmatprep.subr.mxu0 0.0
          %663 = vmatpush2.xpose.msra.mxu0 0.0
          %664 = vmatprep.mubr.f32.mxu0 0.0
          %665 = vmatmul.mubr.f32.gmra.mxu0 %v592
          %v666 = vpop.f32.mrf.mxu0
          %v667 = vadd.f32 0.0, %v666
          %v668 = vpop.f32.mrf.mxu0
          %669 = vdwg.mxu0
          %671 = vrot.lane.b32.xlu0 %v667, 2
          %v672 = vpop.permute.xlu0 %671
          %vm674 = vcmask 15360
          %v675 = vsel %vm674, 0.0, %v672
          %v677 = vrot.slane %v675, 6
          %v679 = vadd.f32 %v667, %v677
          %v680 = vrot.slane %v667, 1
          %681 = vrot.lane.b32.xlu0 %v680, 1
          %v682 = vpop.permute.xlu0 %681
          %vm684 = vcmask 7168
          %v685 = vsel %vm684, 0.0, %v682
          %v687 = vrot.slane %v685, 6
          %v689 = vadd.f32 %v679, %v687
          %s690 = sld [smem:[#allocation7]]
          %v691 = vstv %s690
          %v692 = vadd.f32 %v689, %v691
          %v693 = vtanh.pop %v692
          %vm694 = vcmask 124930
          %695 = vst.msk [vmem:[#allocation6 - $0x2] sm:$0x4] %vm694, %v693
          %v696 = vlaneseq
          %v697 = vshrl.u32 %v696, 7
          %v698 = vadd.s32 %v697, 8
          %v699 = vlaneseq
          %v700 = vand.u32 %v699, 127
          %vm701 = vcmp.eq.s32.totalorder %v697, %v700
          %vm702 = vcmp.eq.s32.totalorder %v698, %v700
          %v703 = vlaneseq
          %v704 = vshrl.u32 %v703, 7
          %v705 = vsub.s32 2, %v704
          %v706 = vrot.slane %v693, %v705
          %v707 = vsel %vm701, %v706, 0.0
          %v708 = vsel %vm702, %v706, 0.0
          %vm709 = vcmask 130048
          %v710 = vsel %vm709, %v707, 0.0
          %711 = vadd.xlane.f32.xlu0 %v710
          %v712 = vpop.xlane.xlu0 %711
          %v713 = vsel %vm709, %v708, 0.0
          %714 = vadd.xlane.f32.xlu0 %v713
          %v715 = vpop.xlane.xlu0 %714
          %716 = vst.msk [vmem:[#allocation5] sm:$0xff] %vm684, %v712
          %717 = vst.msk [vmem:[#allocation5 + $0x8] sm:$0xff] %vm684, %v715
          %v718 = vld [vmem:[%s3] sm:$0x1]
          %v719 = vld [vmem:[%s4] sm:$0x1]
          %v720 = vsel %vm590, %v587, 0.0
          %721 = vadd.xlane.f32.xlu0 %v720
          %v722 = vpop.xlane.xlu0 %721
          %v723 = vsel %vm590, %v588, 0.0
          %724 = vadd.xlane.f32.xlu0 %v723
          %v725 = vpop.xlane.xlu0 %724
          %v726 = vrcp.pop 32.0
          %v727 = vmul.f32 %v722, %v726
          %v728 = vmul.f32 %v725, %v726
          %v729 = vsub.f32 %v587, %v727
          %v730 = vsub.f32 %v588, %v728
          %v731 = vmul.f32 %v729, %v729
          %v732 = vmul.f32 %v730, %v730
          %v733 = vsel %vm590, %v731, 0.0
          %734 = vadd.xlane.f32.xlu0 %v733
          %v735 = vpop.xlane.xlu0 %734
          %v736 = vsel %vm590, %v732, 0.0
          %737 = vadd.xlane.f32.xlu0 %v736
          %v738 = vpop.xlane.xlu0 %737
          %v739 = vmul.f32 %v735, %v726
          %v740 = vmul.f32 %v738, %v726
          %v741 = vadd.f32 %v739, 1e-05
          %v742 = vadd.f32 %v740, 1e-05
          %v743 = vrsqrt.pop %v741
          %v744 = vrsqrt.pop %v742
          %v745 = vmul.f32 %v729, %v743
          %v746 = vmul.f32 %v730, %v744
          %v748 = vlaneseq
          %v749 = vshrl.u32 %v748, 7
          %v750 = vsub.s32 0, %v749
          %v751 = vrot.slane %v718, %v750
          %v753 = vmul.f32 %v745, %v751
          %v754 = vmul.f32 %v746, %v751
          %v756 = vlaneseq
          %v757 = vshrl.u32 %v756, 7
          %v758 = vsub.s32 0, %v757
          %v759 = vrot.slane %v719, %v758
          %v761 = vadd.f32 %v753, %v759
          %v762 = vadd.f32 %v754, %v759
          %v763 = vpack.c.bf16 %v762, %v761
          %v764 = vld [vmem:[%s5] sm:$0xf]
          %v765 = vld [vmem:[%s5 + $0x4] sm:$0xf]
          %v766 = vld [vmem:[%s5 + $0x8] sm:$0xf]
          %v767 = vld [vmem:[%s5 + $0xc] sm:$0xf]
          %v768 = vld [vmem:[%s6] sm:$0x1]
          %v770 = vlaneseq
          %v771 = vshrl.u32 %v770, 7
          %v772 = vsub.s32 0, %v771
          %v773 = vrot.slane %v768, %v772
          %v779 = vunpack.c.l.b16 %v764
          %v780 = vunpack.c.l.b16 %v765
          %v781 = vunpack.c.l.b16 %v766
          %v782 = vunpack.c.l.b16 %v767
          %v783 = vpack.c.b16 %v780, %v779
          %v784 = vpack.c.b16 %v782, %v781
          %v788 = vsel %vm590, %v763, 0
          %790 = vmatprep.subr.bf16.mxu0 0
          %791 = vmatpush1.bf16.msra.mxu0 0
          %792 = vmatprep.subr.bf16.mxu0 0
          %793 = vmatpush1.bf16.msra.mxu0 0
          %794 = vmatprep.subr.bf16.mxu0 0
          %795 = vmatpush1.bf16.msra.mxu0 0
          %796 = vmatprep.subr.bf16.mxu0 0
          %797 = vmatpush1.bf16.msra.mxu0 0
          %798 = vmatprep.subr.bf16.mxu0 0
          %799 = vmatpush1.bf16.msra.mxu0 0
          %800 = vmatprep.subr.bf16.mxu0 0
          %801 = vmatpush1.bf16.msra.mxu0 0
          %802 = vmatprep.subr.bf16.mxu0 0
          %803 = vmatpush1.bf16.msra.mxu0 %v784
          %804 = vmatprep.subr.bf16.mxu0 0
          %805 = vmatpush1.bf16.msra.mxu0 %v783
          %806 = vmatprep.subr.bf16.mxu0 0
          %807 = vmatpush2.bf16.msra.mxu0 0
          %808 = vmatprep.subr.bf16.mxu0 0
          %809 = vmatpush2.bf16.msra.mxu0 0
          %810 = vmatprep.subr.bf16.mxu0 0
          %811 = vmatpush2.bf16.msra.mxu0 0
          %812 = vmatprep.subr.bf16.mxu0 0
          %813 = vmatpush2.bf16.msra.mxu0 0
          %814 = vmatprep.subr.bf16.mxu0 0
          %815 = vmatpush2.bf16.msra.mxu0 0
          %816 = vmatprep.subr.bf16.mxu0 0
          %817 = vmatpush2.bf16.msra.mxu0 0
          %818 = vmatprep.subr.bf16.mxu0 0
          %819 = vmatpush2.bf16.msra.mxu0 0
          %820 = vmatprep.subr.bf16.mxu0 0
          %821 = vmatpush2.bf16.msra.mxu0 0
          %822 = vmatprep.mubr.bf16.mxu0 0
          %823 = vmatmul.mubr.bf16.gmra.mxu0 %v788
          %v824 = vpop.f32.mrf.mxu0
          %v825 = vadd.f32 %v773, %v824
          %v826 = vpop.f32.mrf.mxu0
          %v827 = vpop.f32.mrf.mxu0
          %v828 = vadd.f32 %v773, %v827
          %v829 = vpop.f32.mrf.mxu0
          %830 = vdwg.mxu0
          %v831 = vmul.f32 %v825, 0.35355338
          %v832 = vmul.f32 %v828, 0.35355338
          %v833 = vpack.c.bf16 %v832, %v831
          %v835 = vunpack.c.l.b16 %v833
          %v836 = vunpack.c.h.b16 %v833
          %v837 = vpack.c.b16 %v835, %v835
          %v838 = vpack.c.b16 %v836, %v836
          %vm841 = vcmask 60416
          %842 = vst.msk [vmem:[#allocation2] sm:$0xf] %vm841, %v837
          %843 = vst.msk [vmem:[#allocation2 + $0x4] sm:$0xf] %vm841, %v838
          %v844 = vpack.c.bf16 %v828, %v825
          %v846 = vunpack.c.l.b16 %v844
          %v847 = vunpack.c.h.b16 %v844
          %v848 = vpack.c.b16 %v846, %v846
          %v849 = vpack.c.b16 %v847, %v847
          %850 = vrot.lane.b32.xlu0 %v848, 96
          %v851 = vpop.permute.xlu0 %850
          %852 = vrot.lane.b32.xlu0 %v849, 96
          %v853 = vpop.permute.xlu0 %852
          %856 = vst.msk [vmem:[#allocation3] sm:$0xf] %vm841, %v851
          %857 = vst.msk [vmem:[#allocation3 + $0x4] sm:$0xf] %vm841, %v853
          %858 = vrot.lane.b32.xlu0 %v848, 64
          %v859 = vpop.permute.xlu0 %858
          %860 = vrot.lane.b32.xlu0 %v849, 64
          %v861 = vpop.permute.xlu0 %860
          %864 = vst.msk [vmem:[#allocation4] sm:$0xf] %vm841, %v859
          %865 = vst.msk [vmem:[#allocation4 + $0x4] sm:$0xf] %vm841, %v861
          %866 = vrot.lane.b32.xlu0 %v837, 120
          %v867 = vpop.permute.xlu0 %866
          %868 = vrot.lane.b32.xlu0 %v838, 120
          %v869 = vpop.permute.xlu0 %868
          %s872 = scalar_lea.vmem [#allocation2], 8
          %873 = vst.msk [vmem:[%s872] sm:$0xf] %vm841, %v867
          %874 = vst.msk [vmem:[%s872 + $0x4] sm:$0xf] %vm841, %v869
          %875 = vrot.lane.b32.xlu0 %v848, 88
          %v876 = vpop.permute.xlu0 %875
          %877 = vrot.lane.b32.xlu0 %v849, 88
          %v878 = vpop.permute.xlu0 %877
          %s881 = scalar_lea.vmem [#allocation3], 8
          %882 = vst.msk [vmem:[%s881] sm:$0xf] %vm841, %v876
          %883 = vst.msk [vmem:[%s881 + $0x4] sm:$0xf] %vm841, %v878
          %884 = vrot.lane.b32.xlu0 %v848, 56
          %v885 = vpop.permute.xlu0 %884
          %886 = vrot.lane.b32.xlu0 %v849, 56
          %v887 = vpop.permute.xlu0 %886
          %s890 = scalar_lea.vmem [#allocation4], 8
          %891 = vst.msk [vmem:[%s890] sm:$0xf] %vm841, %v885
          %892 = vst.msk [vmem:[%s890 + $0x4] sm:$0xf] %vm841, %v887
          %893 = vrot.lane.b32.xlu0 %v837, 112
          %v894 = vpop.permute.xlu0 %893
          %895 = vrot.lane.b32.xlu0 %v838, 112
          %v896 = vpop.permute.xlu0 %895
          %s899 = scalar_lea.vmem [#allocation2], 16
          %900 = vst.msk [vmem:[%s899] sm:$0xf] %vm841, %v894
          %901 = vst.msk [vmem:[%s899 + $0x4] sm:$0xf] %vm841, %v896
          %902 = vrot.lane.b32.xlu0 %v848, 80
          %v903 = vpop.permute.xlu0 %902
          %904 = vrot.lane.b32.xlu0 %v849, 80
          %v905 = vpop.permute.xlu0 %904
          %s908 = scalar_lea.vmem [#allocation3], 16
          %909 = vst.msk [vmem:[%s908] sm:$0xf] %vm841, %v903
          %910 = vst.msk [vmem:[%s908 + $0x4] sm:$0xf] %vm841, %v905
          %911 = vrot.lane.b32.xlu0 %v848, 48
          %v912 = vpop.permute.xlu0 %911
          %913 = vrot.lane.b32.xlu0 %v849, 48
          %v914 = vpop.permute.xlu0 %913
          %s917 = scalar_lea.vmem [#allocation4], 16
          %918 = vst.msk [vmem:[%s917] sm:$0xf] %vm841, %v912
          %919 = vst.msk [vmem:[%s917 + $0x4] sm:$0xf] %vm841, %v914
          %920 = vrot.lane.b32.xlu0 %v837, 104
          %v921 = vpop.permute.xlu0 %920
          %922 = vrot.lane.b32.xlu0 %v838, 104
          %v923 = vpop.permute.xlu0 %922
          %s926 = scalar_lea.vmem [#allocation2], 24
          %927 = vst.msk [vmem:[%s926] sm:$0xf] %vm841, %v921
          %928 = vst.msk [vmem:[%s926 + $0x4] sm:$0xf] %vm841, %v923
          %929 = vrot.lane.b32.xlu0 %v848, 72
          %v930 = vpop.permute.xlu0 %929
          %931 = vrot.lane.b32.xlu0 %v849, 72
          %v932 = vpop.permute.xlu0 %931
          %s935 = scalar_lea.vmem [#allocation3], 24
          %936 = vst.msk [vmem:[%s935] sm:$0xf] %vm841, %v930
          %937 = vst.msk [vmem:[%s935 + $0x4] sm:$0xf] %vm841, %v932
          %938 = vrot.lane.b32.xlu0 %v848, 40
          %v939 = vpop.permute.xlu0 %938
          %940 = vrot.lane.b32.xlu0 %v849, 40
          %v941 = vpop.permute.xlu0 %940
          %s944 = scalar_lea.vmem [#allocation4], 24
          %945 = vst.msk [vmem:[%s944] sm:$0xf] %vm841, %v939
          %946 = vst.msk [vmem:[%s944 + $0x4] sm:$0xf] %vm841, %v941
        $region84: #{syntactic_transformer_forward.3} parent=79 // pred_fallthru
          _
        %s947 = scalar_lea.vmem %s580, %s582
        %v948 = vld [vmem:[%s947] sm:$0xff]
        %s949 = scalar_lea.vmem [#allocation5], %s582
        %v950 = vld [vmem:[%s949] sm:$0xff]
        %v951 = vld [vmem:[#allocation6] sm:$0x1]
        %953 = vset.pattern.permute.xlu0 0
        %954 = vperm.xlu0 %953, %v950
        %v955 = vpop.permute.xlu0 %954
        %v958 = vlaneseq
        %v959 = vshrl.u32 %v958, 7
        %v960 = vsub.s32 0, %v959
        %v961 = vrot.slane %v951, %v960
        %v963 = vsub.f32 %v955, %v961
        %v964 = vand.u32 2147483647, %v963
        %v965 = vsub.f32 0.0, %v964
        %v966 = vmul.f32 %v965, 1.442695
        %v967 = vpow.pop %v966
        %vm968 = vcmask 130048
        %v969 = vsel %vm968, %v967, 0.0
        %970 = vadd.xlane.f32.xlu0 %v969
        %v971 = vpop.xlane.xlu0 %970
        %v972 = vrcp.pop %v971
        %v973 = vmul.f32 %v967, %v972
        %s974 = sshra.s32 %s582, 3
        %s975 = sand.u32 %s582, 7
        %s976 = smul.addr %s974, 4
        %s977 = scalar_lea.vmem [#allocation2], %s976
        %v978 = vld [vmem:[%s977] sm:$0xf]
        %v979 = vld [vmem:[%s977 + $0x8] sm:$0xf]
        %v980 = vld [vmem:[%s977 + $0x10] sm:$0xf]
        %v981 = vld [vmem:[%s977 + $0x18] sm:$0xf]
        %v982 = vld [vmem:[#allocation3] sm:$0xf]
        %v983 = vld [vmem:[#allocation3 + $0x4] sm:$0xf]
        %v984 = vld [vmem:[#allocation3 + $0x8] sm:$0xf]
        %v985 = vld [vmem:[#allocation3 + $0xc] sm:$0xf]
        %v986 = vld [vmem:[#allocation3 + $0x10] sm:$0xf]
        %v987 = vld [vmem:[#allocation3 + $0x14] sm:$0xf]
        %v988 = vld [vmem:[#allocation3 + $0x18] sm:$0xf]
        %v989 = vld [vmem:[#allocation3 + $0x1c] sm:$0xf]
        %v992 = vunpack.c.l.b16 %v982
        %v993 = vunpack.c.l.b16 %v983
        %v994 = vpack.c.b16 %v993, %v992
        %vm995 = vcmask 64512
        %v997 = vsel %vm995, %v978, 0
        %v1000 = vsel %vm995, %v994, 0
        %1002 = vmatprep.subr.bf16.mxu0 0
        %1003 = vmatpush1.bf16.xpose.msra.mxu0 0
        %1004 = vmatprep.subr.bf16.mxu0 0
        %1005 = vmatpush1.bf16.xpose.msra.mxu0 0
        %1006 = vmatprep.subr.bf16.mxu0 0
        %1007 = vmatpush1.bf16.xpose.msra.mxu0 0
        %1008 = vmatprep.subr.bf16.mxu0 0
        %1009 = vmatpush1.bf16.xpose.msra.mxu0 0
        %1010 = vmatprep.subr.bf16.mxu0 0
        %1011 = vmatpush1.bf16.xpose.msra.mxu0 0
        %1012 = vmatprep.subr.bf16.mxu0 0
        %1013 = vmatpush1.bf16.xpose.msra.mxu0 0
        %1014 = vmatprep.subr.bf16.mxu0 0
        %1015 = vmatpush1.bf16.xpose.msra.mxu0 0
        %1016 = vmatprep.subr.bf16.mxu0 0
        %1017 = vmatpush1.bf16.xpose.msra.mxu0 %v1000
        %1018 = vmatprep.subr.bf16.mxu0 0
        %1019 = vmatpush2.bf16.xpose.msra.mxu0 0
        %1020 = vmatprep.subr.bf16.mxu0 0
        %1021 = vmatpush2.bf16.xpose.msra.mxu0 0
        %1022 = vmatprep.subr.bf16.mxu0 0
        %1023 = vmatpush2.bf16.xpose.msra.mxu0 0
        %1024 = vmatprep.subr.bf16.mxu0 0
        %1025 = vmatpush2.bf16.xpose.msra.mxu0 0
        %1026 = vmatprep.subr.bf16.mxu0 0
        %1027 = vmatpush2.bf16.xpose.msra.mxu0 0
        %1028 = vmatprep.subr.bf16.mxu0 0
        %1029 = vmatpush2.bf16.xpose.msra.mxu0 0
        %1030 = vmatprep.subr.bf16.mxu0 0
        %1031 = vmatpush2.bf16.xpose.msra.mxu0 0
        %1032 = vmatprep.subr.bf16.mxu0 0
        %1033 = vmatpush2.bf16.xpose.msra.mxu0 0
        %1034 = vmatprep.mubr.bf16.mxu0 0
        %1035 = vmatmul.mubr.bf16.gmra.mxu0 %v997
        %v1036 = vpop.f32.mrf.mxu0
        %v1037 = vadd.f32 0.0, %v1036
        %v1038 = vpop.f32.mrf.mxu0
        %v1039 = vpop.f32.mrf.mxu0
        %v1040 = vpop.f32.mrf.mxu0
        %1041 = vdwg.mxu0
        %v1044 = vunpack.c.l.b16 %v984
        %v1045 = vunpack.c.l.b16 %v985
        %v1046 = vpack.c.b16 %v1045, %v1044
        %v1048 = vsel %vm995, %v979, 0
        %v1051 = vsel %vm995, %v1046, 0
        %1053 = vmatprep.subr.bf16.mxu0 0
        %1054 = vmatpush1.bf16.xpose.msra.mxu0 0
        %1055 = vmatprep.subr.bf16.mxu0 0
        %1056 = vmatpush1.bf16.xpose.msra.mxu0 0
        %1057 = vmatprep.subr.bf16.mxu0 0
        %1058 = vmatpush1.bf16.xpose.msra.mxu0 0
        %1059 = vmatprep.subr.bf16.mxu0 0
        %1060 = vmatpush1.bf16.xpose.msra.mxu0 0
        %1061 = vmatprep.subr.bf16.mxu0 0
        %1062 = vmatpush1.bf16.xpose.msra.mxu0 0
        %1063 = vmatprep.subr.bf16.mxu0 0
        %1064 = vmatpush1.bf16.xpose.msra.mxu0 0
        %1065 = vmatprep.subr.bf16.mxu0 0
        %1066 = vmatpush1.bf16.xpose.msra.mxu0 0
        %1067 = vmatprep.subr.bf16.mxu0 0
        %1068 = vmatpush1.bf16.xpose.msra.mxu0 %v1051
        %1069 = vmatprep.subr.bf16.mxu0 0
        %1070 = vmatpush2.bf16.xpose.msra.mxu0 0
        %1071 = vmatprep.subr.bf16.mxu0 0
        %1072 = vmatpush2.bf16.xpose.msra.mxu0 0
        %1073 = vmatprep.subr.bf16.mxu0 0
        %1074 = vmatpush2.bf16.xpose.msra.mxu0 0
        %1075 = vmatprep.subr.bf16.mxu0 0
        %1076 = vmatpush2.bf16.xpose.msra.mxu0 0
        %1077 = vmatprep.subr.bf16.mxu0 0
        %1078 = vmatpush2.bf16.xpose.msra.mxu0 0
        %1079 = vmatprep.subr.bf16.mxu0 0
        %1080 = vmatpush2.bf16.xpose.msra.mxu0 0
        %1081 = vmatprep.subr.bf16.mxu0 0
        %1082 = vmatpush2.bf16.xpose.msra.mxu0 0
        %1083 = vmatprep.subr.bf16.mxu0 0
        %1084 = vmatpush2.bf16.xpose.msra.mxu0 0
        %1085 = vmatprep.mubr.bf16.mxu0 0
        %1086 = vmatmul.mubr.bf16.gmra.mxu0 %v1048
        %v1087 = vpop.f32.mrf.mxu0
        %v1088 = vadd.f32 0.0, %v1087
        %v1089 = vpop.f32.mrf.mxu0
        %v1090 = vpop.f32.mrf.mxu0
        %v1091 = vpop.f32.mrf.mxu0
        %1092 = vdwg.mxu0
        %v1095 = vunpack.c.l.b16 %v986
        %v1096 = vunpack.c.l.b16 %v987
        %v1097 = vpack.c.b16 %v1096, %v1095
        %v1099 = vsel %vm995, %v980, 0
        %v1102 = vsel %vm995, %v1097, 0
        %1104 = vmatprep.subr.bf16.mxu0 0
        %1105 = vmatpush1.bf16.xpose.msra.mxu0 0
        %1106 = vmatprep.subr.bf16.mxu0 0
        %1107 = vmatpush1.bf16.xpose.msra.mxu0 0
        %1108 = vmatprep.subr.bf16.mxu0 0
        %1109 = vmatpush1.bf16.xpose.msra.mxu0 0
        %1110 = vmatprep.subr.bf16.mxu0 0
        %1111 = vmatpush1.bf16.xpose.msra.mxu0 0
        %1112 = vmatprep.subr.bf16.mxu0 0
        %1113 = vmatpush1.bf16.xpose.msra.mxu0 0
        %1114 = vmatprep.subr.bf16.mxu0 0
        %1115 = vmatpush1.bf16.xpose.msra.mxu0 0
        %1116 = vmatprep.subr.bf16.mxu0 0
        %1117 = vmatpush1.bf16.xpose.msra.mxu0 0
        %1118 = vmatprep.subr.bf16.mxu0 0
        %1119 = vmatpush1.bf16.xpose.msra.mxu0 %v1102
        %1120 = vmatprep.subr.bf16.mxu0 0
        %1121 = vmatpush2.bf16.xpose.msra.mxu0 0
        %1122 = vmatprep.subr.bf16.mxu0 0
        %1123 = vmatpush2.bf16.xpose.msra.mxu0 0
        %1124 = vmatprep.subr.bf16.mxu0 0
        %1125 = vmatpush2.bf16.xpose.msra.mxu0 0
        %1126 = vmatprep.subr.bf16.mxu0 0
        %1127 = vmatpush2.bf16.xpose.msra.mxu0 0
        %1128 = vmatprep.subr.bf16.mxu0 0
        %1129 = vmatpush2.bf16.xpose.msra.mxu0 0
        %1130 = vmatprep.subr.bf16.mxu0 0
        %1131 = vmatpush2.bf16.xpose.msra.mxu0 0
        %1132 = vmatprep.subr.bf16.mxu0 0
        %1133 = vmatpush2.bf16.xpose.msra.mxu0 0
        %1134 = vmatprep.subr.bf16.mxu0 0
        %1135 = vmatpush2.bf16.xpose.msra.mxu0 0
        %1136 = vmatprep.mubr.bf16.mxu0 0
        %1137 = vmatmul.mubr.bf16.gmra.mxu0 %v1099
        %v1138 = vpop.f32.mrf.mxu0
        %v1139 = vadd.f32 0.0, %v1138
        %v1140 = vpop.f32.mrf.mxu0
        %v1141 = vpop.f32.mrf.mxu0
        %v1142 = vpop.f32.mrf.mxu0
        %1143 = vdwg.mxu0
        %v1146 = vunpack.c.l.b16 %v988
        %v1147 = vunpack.c.l.b16 %v989
        %v1148 = vpack.c.b16 %v1147, %v1146
        %v1150 = vsel %vm995, %v981, 0
        %v1153 = vsel %vm995, %v1148, 0
        %1155 = vmatprep.subr.bf16.mxu0 0
        %1156 = vmatpush1.bf16.xpose.msra.mxu0 0
        %1157 = vmatprep.subr.bf16.mxu0 0
        %1158 = vmatpush1.bf16.xpose.msra.mxu0 0
        %1159 = vmatprep.subr.bf16.mxu0 0
        %1160 = vmatpush1.bf16.xpose.msra.mxu0 0
        %1161 = vmatprep.subr.bf16.mxu0 0
        %1162 = vmatpush1.bf16.xpose.msra.mxu0 0
        %1163 = vmatprep.subr.bf16.mxu0 0
        %1164 = vmatpush1.bf16.xpose.msra.mxu0 0
        %1165 = vmatprep.subr.bf16.mxu0 0
        %1166 = vmatpush1.bf16.xpose.msra.mxu0 0
        %1167 = vmatprep.subr.bf16.mxu0 0
        %1168 = vmatpush1.bf16.xpose.msra.mxu0 0
        %1169 = vmatprep.subr.bf16.mxu0 0
        %1170 = vmatpush1.bf16.xpose.msra.mxu0 %v1153
        %1171 = vmatprep.subr.bf16.mxu0 0
        %1172 = vmatpush2.bf16.xpose.msra.mxu0 0
        %1173 = vmatprep.subr.bf16.mxu0 0
        %1174 = vmatpush2.bf16.xpose.msra.mxu0 0
        %1175 = vmatprep.subr.bf16.mxu0 0
        %1176 = vmatpush2.bf16.xpose.msra.mxu0 0
        %1177 = vmatprep.subr.bf16.mxu0 0
        %1178 = vmatpush2.bf16.xpose.msra.mxu0 0
        %1179 = vmatprep.subr.bf16.mxu0 0
        %1180 = vmatpush2.bf16.xpose.msra.mxu0 0
        %1181 = vmatprep.subr.bf16.mxu0 0
        %1182 = vmatpush2.bf16.xpose.msra.mxu0 0
        %1183 = vmatprep.subr.bf16.mxu0 0
        %1184 = vmatpush2.bf16.xpose.msra.mxu0 0
        %1185 = vmatprep.subr.bf16.mxu0 0
        %1186 = vmatpush2.bf16.xpose.msra.mxu0 0
        %1187 = vmatprep.mubr.bf16.mxu0 0
        %1188 = vmatmul.mubr.bf16.gmra.mxu0 %v1150
        %v1189 = vpop.f32.mrf.mxu0
        %v1190 = vadd.f32 0.0, %v1189
        %v1191 = vpop.f32.mrf.mxu0
        %v1192 = vpop.f32.mrf.mxu0
        %v1193 = vpop.f32.mrf.mxu0
        %1194 = vdwg.mxu0
        %v1195 = vsel %vm968, %v1037, -inf
        %1196 = vmax.xlane.f32.xlu0 %v1195
        %v1197 = vpop.xlane.xlu0 %1196
        %v1198 = vsel %vm968, %v1088, -inf
        %1199 = vmax.xlane.f32.xlu0 %v1198
        %v1200 = vpop.xlane.xlu0 %1199
        %v1201 = vsel %vm968, %v1139, -inf
        %1202 = vmax.xlane.f32.xlu0 %v1201
        %v1203 = vpop.xlane.xlu0 %1202
        %v1204 = vsel %vm968, %v1190, -inf
        %1205 = vmax.xlane.f32.xlu0 %v1204
        %v1206 = vpop.xlane.xlu0 %1205
        %v1207 = vsub.f32 %v1037, %v1197
        %v1208 = vsub.f32 %v1088, %v1200
        %v1209 = vsub.f32 %v1139, %v1203
        %v1210 = vsub.f32 %v1190, %v1206
        %v1211 = vmul.f32 %v1207, 1.442695
        %v1212 = vpow.pop %v1211
        %v1213 = vmul.f32 %v1208, 1.442695
        %v1214 = vpow.pop %v1213
        %v1215 = vmul.f32 %v1209, 1.442695
        %v1216 = vpow.pop %v1215
        %v1217 = vmul.f32 %v1210, 1.442695
        %v1218 = vpow.pop %v1217
        %v1219 = vsel %vm968, %v1212, 0.0
        %1220 = vadd.xlane.f32.xlu0 %v1219
        %v1221 = vpop.xlane.xlu0 %1220
        %v1222 = vsel %vm968, %v1214, 0.0
        %1223 = vadd.xlane.f32.xlu0 %v1222
        %v1224 = vpop.xlane.xlu0 %1223
        %v1225 = vsel %vm968, %v1216, 0.0
        %1226 = vadd.xlane.f32.xlu0 %v1225
        %v1227 = vpop.xlane.xlu0 %1226
        %v1228 = vsel %vm968, %v1218, 0.0
        %1229 = vadd.xlane.f32.xlu0 %v1228
        %v1230 = vpop.xlane.xlu0 %1229
        %v1231 = vrcp.pop %v1221
        %v1232 = vrcp.pop %v1224
        %v1233 = vrcp.pop %v1227
        %v1234 = vrcp.pop %v1230
        %v1235 = vmul.f32 %v1212, %v1231
        %v1236 = vmul.f32 %v1214, %v1232
        %v1237 = vmul.f32 %v1216, %v1233
        %v1238 = vmul.f32 %v1218, %v1234
        %v1239 = vmul.f32 %v1235, %v973
        %v1240 = vmul.f32 %v1236, %v973
        %v1241 = vmul.f32 %v1237, %v973
        %v1242 = vmul.f32 %v1238, %v973
        %v1243 = vpack.c.bf16 %v1239, %v1239
        %v1244 = vpack.c.bf16 %v1240, %v1240
        %v1245 = vpack.c.bf16 %v1241, %v1241
        %v1246 = vpack.c.bf16 %v1242, %v1242
        %v1247 = vld [vmem:[#allocation4] sm:$0xf]
        %v1248 = vld [vmem:[#allocation4 + $0x4] sm:$0xf]
        %v1249 = vld [vmem:[#allocation4 + $0x8] sm:$0xf]
        %v1250 = vld [vmem:[#allocation4 + $0xc] sm:$0xf]
        %v1251 = vld [vmem:[#allocation4 + $0x10] sm:$0xf]
        %v1252 = vld [vmem:[#allocation4 + $0x14] sm:$0xf]
        %v1253 = vld [vmem:[#allocation4 + $0x18] sm:$0xf]
        %v1254 = vld [vmem:[#allocation4 + $0x1c] sm:$0xf]
        %v1257 = vunpack.c.l.b16 %v1247
        %v1258 = vunpack.c.l.b16 %v1248
        %v1259 = vpack.c.b16 %v1258, %v1257
        %v1262 = vsel %vm968, %v1243, 0
        %1264 = vmatprep.subr.bf16.mxu0 0
        %1265 = vmatpush1.bf16.msra.mxu0 0
        %1266 = vmatprep.subr.bf16.mxu0 0
        %1267 = vmatpush1.bf16.msra.mxu0 0
        %1268 = vmatprep.subr.bf16.mxu0 0
        %1269 = vmatpush1.bf16.msra.mxu0 0
        %1270 = vmatprep.subr.bf16.mxu0 0
        %1271 = vmatpush1.bf16.msra.mxu0 0
        %1272 = vmatprep.subr.bf16.mxu0 0
        %1273 = vmatpush1.bf16.msra.mxu0 0
        %1274 = vmatprep.subr.bf16.mxu0 0
        %1275 = vmatpush1.bf16.msra.mxu0 0
        %1276 = vmatprep.subr.bf16.mxu0 0
        %1277 = vmatpush1.bf16.msra.mxu0 0
        %1278 = vmatprep.subr.bf16.mxu0 0
        %1279 = vmatpush1.bf16.msra.mxu0 %v1259
        %1280 = vmatprep.subr.bf16.mxu0 0
        %1281 = vmatpush2.bf16.msra.mxu0 0
        %1282 = vmatprep.subr.bf16.mxu0 0
        %1283 = vmatpush2.bf16.msra.mxu0 0
        %1284 = vmatprep.subr.bf16.mxu0 0
        %1285 = vmatpush2.bf16.msra.mxu0 0
        %1286 = vmatprep.subr.bf16.mxu0 0
        %1287 = vmatpush2.bf16.msra.mxu0 0
        %1288 = vmatprep.subr.bf16.mxu0 0
        %1289 = vmatpush2.bf16.msra.mxu0 0
        %1290 = vmatprep.subr.bf16.mxu0 0
        %1291 = vmatpush2.bf16.msra.mxu0 0
        %1292 = vmatprep.subr.bf16.mxu0 0
        %1293 = vmatpush2.bf16.msra.mxu0 0
        %1294 = vmatprep.subr.bf16.mxu0 0
        %1295 = vmatpush2.bf16.msra.mxu0 0
        %1296 = vmatprep.mubr.bf16.mxu0 0
        %1297 = vmatmul.mubr.bf16.gmra.mxu0 %v1262
        %v1298 = vpop.f32.mrf.mxu0
        %v1299 = vadd.f32 0.0, %v1298
        %v1300 = vpop.f32.mrf.mxu0
        %v1301 = vpop.f32.mrf.mxu0
        %v1302 = vpop.f32.mrf.mxu0
        %1303 = vdwg.mxu0
        %v1306 = vunpack.c.l.b16 %v1249
        %v1307 = vunpack.c.l.b16 %v1250
        %v1308 = vpack.c.b16 %v1307, %v1306
        %v1311 = vsel %vm968, %v1244, 0
        %1313 = vmatprep.subr.bf16.mxu0 0
        %1314 = vmatpush1.bf16.msra.mxu0 0
        %1315 = vmatprep.subr.bf16.mxu0 0
        %1316 = vmatpush1.bf16.msra.mxu0 0
        %1317 = vmatprep.subr.bf16.mxu0 0
        %1318 = vmatpush1.bf16.msra.mxu0 0
        %1319 = vmatprep.subr.bf16.mxu0 0
        %1320 = vmatpush1.bf16.msra.mxu0 0
        %1321 = vmatprep.subr.bf16.mxu0 0
        %1322 = vmatpush1.bf16.msra.mxu0 0
        %1323 = vmatprep.subr.bf16.mxu0 0
        %1324 = vmatpush1.bf16.msra.mxu0 0
        %1325 = vmatprep.subr.bf16.mxu0 0
        %1326 = vmatpush1.bf16.msra.mxu0 0
        %1327 = vmatprep.subr.bf16.mxu0 0
        %1328 = vmatpush1.bf16.msra.mxu0 %v1308
        %1329 = vmatprep.subr.bf16.mxu0 0
        %1330 = vmatpush2.bf16.msra.mxu0 0
        %1331 = vmatprep.subr.bf16.mxu0 0
        %1332 = vmatpush2.bf16.msra.mxu0 0
        %1333 = vmatprep.subr.bf16.mxu0 0
        %1334 = vmatpush2.bf16.msra.mxu0 0
        %1335 = vmatprep.subr.bf16.mxu0 0
        %1336 = vmatpush2.bf16.msra.mxu0 0
        %1337 = vmatprep.subr.bf16.mxu0 0
        %1338 = vmatpush2.bf16.msra.mxu0 0
        %1339 = vmatprep.subr.bf16.mxu0 0
        %1340 = vmatpush2.bf16.msra.mxu0 0
        %1341 = vmatprep.subr.bf16.mxu0 0
        %1342 = vmatpush2.bf16.msra.mxu0 0
        %1343 = vmatprep.subr.bf16.mxu0 0
        %1344 = vmatpush2.bf16.msra.mxu0 0
        %1345 = vmatprep.mubr.bf16.mxu0 0
        %1346 = vmatmul.mubr.bf16.gmra.mxu0 %v1311
        %v1347 = vpop.f32.mrf.mxu0
        %v1348 = vadd.f32 0.0, %v1347
        %v1349 = vpop.f32.mrf.mxu0
        %v1350 = vpop.f32.mrf.mxu0
        %v1351 = vpop.f32.mrf.mxu0
        %1352 = vdwg.mxu0
        %v1355 = vunpack.c.l.b16 %v1251
        %v1356 = vunpack.c.l.b16 %v1252
        %v1357 = vpack.c.b16 %v1356, %v1355
        %v1360 = vsel %vm968, %v1245, 0
        %1362 = vmatprep.subr.bf16.mxu0 0
        %1363 = vmatpush1.bf16.msra.mxu0 0
        %1364 = vmatprep.subr.bf16.mxu0 0
        %1365 = vmatpush1.bf16.msra.mxu0 0
        %1366 = vmatprep.subr.bf16.mxu0 0
        %1367 = vmatpush1.bf16.msra.mxu0 0
        %1368 = vmatprep.subr.bf16.mxu0 0
        %1369 = vmatpush1.bf16.msra.mxu0 0
        %1370 = vmatprep.subr.bf16.mxu0 0
        %1371 = vmatpush1.bf16.msra.mxu0 0
        %1372 = vmatprep.subr.bf16.mxu0 0
        %1373 = vmatpush1.bf16.msra.mxu0 0
        %1374 = vmatprep.subr.bf16.mxu0 0
        %1375 = vmatpush1.bf16.msra.mxu0 0
        %1376 = vmatprep.subr.bf16.mxu0 0
        %1377 = vmatpush1.bf16.msra.mxu0 %v1357
        %1378 = vmatprep.subr.bf16.mxu0 0
        %1379 = vmatpush2.bf16.msra.mxu0 0
        %1380 = vmatprep.subr.bf16.mxu0 0
        %1381 = vmatpush2.bf16.msra.mxu0 0
        %1382 = vmatprep.subr.bf16.mxu0 0
        %1383 = vmatpush2.bf16.msra.mxu0 0
        %1384 = vmatprep.subr.bf16.mxu0 0
        %1385 = vmatpush2.bf16.msra.mxu0 0
        %1386 = vmatprep.subr.bf16.mxu0 0
        %1387 = vmatpush2.bf16.msra.mxu0 0
        %1388 = vmatprep.subr.bf16.mxu0 0
        %1389 = vmatpush2.bf16.msra.mxu0 0
        %1390 = vmatprep.subr.bf16.mxu0 0
        %1391 = vmatpush2.bf16.msra.mxu0 0
        %1392 = vmatprep.subr.bf16.mxu0 0
        %1393 = vmatpush2.bf16.msra.mxu0 0
        %1394 = vmatprep.mubr.bf16.mxu0 0
        %1395 = vmatmul.mubr.bf16.gmra.mxu0 %v1360
        %v1396 = vpop.f32.mrf.mxu0
        %v1397 = vadd.f32 0.0, %v1396
        %v1398 = vpop.f32.mrf.mxu0
        %v1399 = vpop.f32.mrf.mxu0
        %v1400 = vpop.f32.mrf.mxu0
        %1401 = vdwg.mxu0
        %v1404 = vunpack.c.l.b16 %v1253
        %v1405 = vunpack.c.l.b16 %v1254
        %v1406 = vpack.c.b16 %v1405, %v1404
        %v1409 = vsel %vm968, %v1246, 0
        %1411 = vmatprep.subr.bf16.mxu0 0
        %1412 = vmatpush1.bf16.msra.mxu0 0
        %1413 = vmatprep.subr.bf16.mxu0 0
        %1414 = vmatpush1.bf16.msra.mxu0 0
        %1415 = vmatprep.subr.bf16.mxu0 0
        %1416 = vmatpush1.bf16.msra.mxu0 0
        %1417 = vmatprep.subr.bf16.mxu0 0
        %1418 = vmatpush1.bf16.msra.mxu0 0
        %1419 = vmatprep.subr.bf16.mxu0 0
        %1420 = vmatpush1.bf16.msra.mxu0 0
        %1421 = vmatprep.subr.bf16.mxu0 0
        %1422 = vmatpush1.bf16.msra.mxu0 0
        %1423 = vmatprep.subr.bf16.mxu0 0
        %1424 = vmatpush1.bf16.msra.mxu0 0
        %1425 = vmatprep.subr.bf16.mxu0 0
        %1426 = vmatpush1.bf16.msra.mxu0 %v1406
        %1427 = vmatprep.subr.bf16.mxu0 0
        %1428 = vmatpush2.bf16.msra.mxu0 0
        %1429 = vmatprep.subr.bf16.mxu0 0
        %1430 = vmatpush2.bf16.msra.mxu0 0
        %1431 = vmatprep.subr.bf16.mxu0 0
        %1432 = vmatpush2.bf16.msra.mxu0 0
        %1433 = vmatprep.subr.bf16.mxu0 0
        %1434 = vmatpush2.bf16.msra.mxu0 0
        %1435 = vmatprep.subr.bf16.mxu0 0
        %1436 = vmatpush2.bf16.msra.mxu0 0
        %1437 = vmatprep.subr.bf16.mxu0 0
        %1438 = vmatpush2.bf16.msra.mxu0 0
        %1439 = vmatprep.subr.bf16.mxu0 0
        %1440 = vmatpush2.bf16.msra.mxu0 0
        %1441 = vmatprep.subr.bf16.mxu0 0
        %1442 = vmatpush2.bf16.msra.mxu0 0
        %1443 = vmatprep.mubr.bf16.mxu0 0
        %1444 = vmatmul.mubr.bf16.gmra.mxu0 %v1409
        %v1445 = vpop.f32.mrf.mxu0
        %v1446 = vadd.f32 0.0, %v1445
        %v1447 = vpop.f32.mrf.mxu0
        %v1448 = vpop.f32.mrf.mxu0
        %v1449 = vpop.f32.mrf.mxu0
        %1450 = vdwg.mxu0
        %v1451 = vpack.c.bf16 %v1299, %v1299
        %v1452 = vld [vmem:[%s7] sm:$0xf]
        %v1453 = vpack.c.bf16 %v1348, %v1348
        %s1454 = scalar_lea.vmem %s7, 4
        %v1455 = vld [vmem:[%s1454] sm:$0xf]
        %v1457 = vsel %vm995, %v1453, 0
        %vm1459 = vcmask 1043456
        %v1461 = vsel %vm1459, %v1455, 0
        %1463 = vmatprep.subr.bf16.mxu0 0
        %1464 = vmatpush1.bf16.msra.mxu0 0
        %1465 = vmatprep.subr.bf16.mxu0 0
        %1466 = vmatpush1.bf16.msra.mxu0 0
        %1467 = vmatprep.subr.bf16.mxu0 0
        %1468 = vmatpush1.bf16.msra.mxu0 0
        %1469 = vmatprep.subr.bf16.mxu0 0
        %1470 = vmatpush1.bf16.msra.mxu0 0
        %1471 = vmatprep.subr.bf16.mxu0 0
        %1472 = vmatpush1.bf16.msra.mxu0 0
        %1473 = vmatprep.subr.bf16.mxu0 0
        %1474 = vmatpush1.bf16.msra.mxu0 0
        %1475 = vmatprep.subr.bf16.mxu0 0
        %1476 = vmatpush1.bf16.msra.mxu0 0
        %1477 = vmatprep.subr.bf16.mxu0 0
        %1478 = vmatpush1.bf16.msra.mxu0 %v1461
        %1479 = vmatprep.subr.bf16.mxu0 0
        %1480 = vmatpush2.bf16.msra.mxu0 0
        %1481 = vmatprep.subr.bf16.mxu0 0
        %1482 = vmatpush2.bf16.msra.mxu0 0
        %1483 = vmatprep.subr.bf16.mxu0 0
        %1484 = vmatpush2.bf16.msra.mxu0 0
        %1485 = vmatprep.subr.bf16.mxu0 0
        %1486 = vmatpush2.bf16.msra.mxu0 0
        %1487 = vmatprep.subr.bf16.mxu0 0
        %1488 = vmatpush2.bf16.msra.mxu0 0
        %1489 = vmatprep.subr.bf16.mxu0 0
        %1490 = vmatpush2.bf16.msra.mxu0 0
        %1491 = vmatprep.subr.bf16.mxu0 0
        %1492 = vmatpush2.bf16.msra.mxu0 0
        %1493 = vmatprep.subr.bf16.mxu0 0
        %1494 = vmatpush2.bf16.msra.mxu0 0
        %1495 = vmatprep.mubr.bf16.mxu0 0
        %1496 = vmatmul.mubr.bf16.gmra.mxu0 %v1457
        %v1497 = vpop.f32.mrf.mxu0
        %v1498 = vadd.f32 0.0, %v1497
        %v1499 = vpop.f32.mrf.mxu0
        %v1500 = vpop.f32.mrf.mxu0
        %v1501 = vpop.f32.mrf.mxu0
        %1502 = vdwg.mxu0
        %v1504 = vsel %vm995, %v1451, 0
        %v1507 = vsel %vm1459, %v1452, 0
        %1509 = vmatprep.subr.bf16.mxu0 0
        %1510 = vmatpush1.bf16.msra.mxu0 0
        %1511 = vmatprep.subr.bf16.mxu0 0
        %1512 = vmatpush1.bf16.msra.mxu0 0
        %1513 = vmatprep.subr.bf16.mxu0 0
        %1514 = vmatpush1.bf16.msra.mxu0 0
        %1515 = vmatprep.subr.bf16.mxu0 0
        %1516 = vmatpush1.bf16.msra.mxu0 0
        %1517 = vmatprep.subr.bf16.mxu0 0
        %1518 = vmatpush1.bf16.msra.mxu0 0
        %1519 = vmatprep.subr.bf16.mxu0 0
        %1520 = vmatpush1.bf16.msra.mxu0 0
        %1521 = vmatprep.subr.bf16.mxu0 0
        %1522 = vmatpush1.bf16.msra.mxu0 0
        %1523 = vmatprep.subr.bf16.mxu0 0
        %1524 = vmatpush1.bf16.msra.mxu0 %v1507
        %1525 = vmatprep.subr.bf16.mxu0 0
        %1526 = vmatpush2.bf16.msra.mxu0 0
        %1527 = vmatprep.subr.bf16.mxu0 0
        %1528 = vmatpush2.bf16.msra.mxu0 0
        %1529 = vmatprep.subr.bf16.mxu0 0
        %1530 = vmatpush2.bf16.msra.mxu0 0
        %1531 = vmatprep.subr.bf16.mxu0 0
        %1532 = vmatpush2.bf16.msra.mxu0 0
        %1533 = vmatprep.subr.bf16.mxu0 0
        %1534 = vmatpush2.bf16.msra.mxu0 0
        %1535 = vmatprep.subr.bf16.mxu0 0
        %1536 = vmatpush2.bf16.msra.mxu0 0
        %1537 = vmatprep.subr.bf16.mxu0 0
        %1538 = vmatpush2.bf16.msra.mxu0 0
        %1539 = vmatprep.subr.bf16.mxu0 0
        %1540 = vmatpush2.bf16.msra.mxu0 0
        %1541 = vmatprep.mubr.bf16.mxu0 0
        %1542 = vmatmul.mubr.bf16.gmra.mxu0 %v1504
        %v1543 = vpop.f32.mrf.mxu0
        %v1544 = vadd.f32 %v1498, %v1543
        %v1545 = vpop.f32.mrf.mxu0
        %v1546 = vpop.f32.mrf.mxu0
        %v1547 = vpop.f32.mrf.mxu0
        %1548 = vdwg.mxu0
        %v1549 = vpack.c.bf16 %v1397, %v1397
        %s1550 = scalar_lea.vmem %s7, 8
        %v1551 = vld [vmem:[%s1550] sm:$0xf]
        %v1553 = vsel %vm995, %v1549, 0
        %v1556 = vsel %vm1459, %v1551, 0
        %1558 = vmatprep.subr.bf16.mxu0 0
        %1559 = vmatpush1.bf16.msra.mxu0 0
        %1560 = vmatprep.subr.bf16.mxu0 0
        %1561 = vmatpush1.bf16.msra.mxu0 0
        %1562 = vmatprep.subr.bf16.mxu0 0
        %1563 = vmatpush1.bf16.msra.mxu0 0
        %1564 = vmatprep.subr.bf16.mxu0 0
        %1565 = vmatpush1.bf16.msra.mxu0 0
        %1566 = vmatprep.subr.bf16.mxu0 0
        %1567 = vmatpush1.bf16.msra.mxu0 0
        %1568 = vmatprep.subr.bf16.mxu0 0
        %1569 = vmatpush1.bf16.msra.mxu0 0
        %1570 = vmatprep.subr.bf16.mxu0 0
        %1571 = vmatpush1.bf16.msra.mxu0 0
        %1572 = vmatprep.subr.bf16.mxu0 0
        %1573 = vmatpush1.bf16.msra.mxu0 %v1556
        %1574 = vmatprep.subr.bf16.mxu0 0
        %1575 = vmatpush2.bf16.msra.mxu0 0
        %1576 = vmatprep.subr.bf16.mxu0 0
        %1577 = vmatpush2.bf16.msra.mxu0 0
        %1578 = vmatprep.subr.bf16.mxu0 0
        %1579 = vmatpush2.bf16.msra.mxu0 0
        %1580 = vmatprep.subr.bf16.mxu0 0
        %1581 = vmatpush2.bf16.msra.mxu0 0
        %1582 = vmatprep.subr.bf16.mxu0 0
        %1583 = vmatpush2.bf16.msra.mxu0 0
        %1584 = vmatprep.subr.bf16.mxu0 0
        %1585 = vmatpush2.bf16.msra.mxu0 0
        %1586 = vmatprep.subr.bf16.mxu0 0
        %1587 = vmatpush2.bf16.msra.mxu0 0
        %1588 = vmatprep.subr.bf16.mxu0 0
        %1589 = vmatpush2.bf16.msra.mxu0 0
        %1590 = vmatprep.mubr.bf16.mxu0 0
        %1591 = vmatmul.mubr.bf16.gmra.mxu0 %v1553
        %v1592 = vpop.f32.mrf.mxu0
        %v1593 = vadd.f32 0.0, %v1592
        %v1594 = vpop.f32.mrf.mxu0
        %v1595 = vpop.f32.mrf.mxu0
        %v1596 = vpop.f32.mrf.mxu0
        %1597 = vdwg.mxu0
        %v1598 = vadd.f32 %v1544, %v1593
        %v1599 = vpack.c.bf16 %v1446, %v1446
        %s1600 = scalar_lea.vmem %s7, 12
        %v1601 = vld [vmem:[%s1600] sm:$0xf]
        %v1603 = vsel %vm995, %v1599, 0
        %v1606 = vsel %vm1459, %v1601, 0
        %1608 = vmatprep.subr.bf16.mxu0 0
        %1609 = vmatpush1.bf16.msra.mxu0 0
        %1610 = vmatprep.subr.bf16.mxu0 0
        %1611 = vmatpush1.bf16.msra.mxu0 0
        %1612 = vmatprep.subr.bf16.mxu0 0
        %1613 = vmatpush1.bf16.msra.mxu0 0
        %1614 = vmatprep.subr.bf16.mxu0 0
        %1615 = vmatpush1.bf16.msra.mxu0 0
        %1616 = vmatprep.subr.bf16.mxu0 0
        %1617 = vmatpush1.bf16.msra.mxu0 0
        %1618 = vmatprep.subr.bf16.mxu0 0
        %1619 = vmatpush1.bf16.msra.mxu0 0
        %1620 = vmatprep.subr.bf16.mxu0 0
        %1621 = vmatpush1.bf16.msra.mxu0 0
        %1622 = vmatprep.subr.bf16.mxu0 0
        %1623 = vmatpush1.bf16.msra.mxu0 %v1606
        %1624 = vmatprep.subr.bf16.mxu0 0
        %1625 = vmatpush2.bf16.msra.mxu0 0
        %1626 = vmatprep.subr.bf16.mxu0 0
        %1627 = vmatpush2.bf16.msra.mxu0 0
        %1628 = vmatprep.subr.bf16.mxu0 0
        %1629 = vmatpush2.bf16.msra.mxu0 0
        %1630 = vmatprep.subr.bf16.mxu0 0
        %1631 = vmatpush2.bf16.msra.mxu0 0
        %1632 = vmatprep.subr.bf16.mxu0 0
        %1633 = vmatpush2.bf16.msra.mxu0 0
        %1634 = vmatprep.subr.bf16.mxu0 0
        %1635 = vmatpush2.bf16.msra.mxu0 0
        %1636 = vmatprep.subr.bf16.mxu0 0
        %1637 = vmatpush2.bf16.msra.mxu0 0
        %1638 = vmatprep.subr.bf16.mxu0 0
        %1639 = vmatpush2.bf16.msra.mxu0 0
        %1640 = vmatprep.mubr.bf16.mxu0 0
        %1641 = vmatmul.mubr.bf16.gmra.mxu0 %v1603
        %v1642 = vpop.f32.mrf.mxu0
        %v1643 = vadd.f32 0.0, %v1642
        %v1644 = vpop.f32.mrf.mxu0
        %v1645 = vpop.f32.mrf.mxu0
        %v1646 = vpop.f32.mrf.mxu0
        %1647 = vdwg.mxu0
        %v1648 = vadd.f32 %v1598, %v1643
        %v1649 = vadd.f32 %v948, %v1648
        %v1650 = vld [vmem:[%s8] sm:$0x1]
        %v1652 = vlaneseq
        %v1653 = vshrl.u32 %v1652, 7
        %v1654 = vsub.s32 0, %v1653
        %v1655 = vrot.slane %v1650, %v1654
        %v1657 = vadd.f32 %v1649, %v1655
        %v1658 = vld [vmem:[%s9] sm:$0x1]
        %v1659 = vld [vmem:[%s10] sm:$0x1]
        %vm1660 = vcmask 261120
        %v1661 = vsel %vm1660, %v1657, 0.0
        %1662 = vadd.xlane.f32.xlu0 %v1661
        %v1663 = vpop.xlane.xlu0 %1662
        %v1664 = vrcp.pop 32.0
        %v1665 = vmul.f32 %v1663, %v1664
        %v1666 = vsub.f32 %v1657, %v1665
        %v1667 = vmul.f32 %v1666, %v1666
        %v1668 = vsel %vm1660, %v1667, 0.0
        %1669 = vadd.xlane.f32.xlu0 %v1668
        %v1670 = vpop.xlane.xlu0 %1669
        %v1671 = vmul.f32 %v1670, %v1664
        %v1672 = vadd.f32 %v1671, 1e-05
        %v1673 = vrsqrt.pop %v1672
        %v1674 = vmul.f32 %v1666, %v1673
        %v1676 = vlaneseq
        %v1677 = vshrl.u32 %v1676, 7
        %v1678 = vsub.s32 0, %v1677
        %v1679 = vrot.slane %v1658, %v1678
        %v1681 = vmul.f32 %v1674, %v1679
        %v1683 = vlaneseq
        %v1684 = vshrl.u32 %v1683, 7
        %v1685 = vsub.s32 0, %v1684
        %v1686 = vrot.slane %v1659, %v1685
        %v1688 = vadd.f32 %v1681, %v1686
        %v1689 = vpack.c.bf16 %v1688, %v1688
        %v1690 = vld [vmem:[%s11] sm:$0xf]
        %v1691 = vld [vmem:[%s11 + $0x4] sm:$0xf]
        %v1692 = vld [vmem:[%s11 + $0x8] sm:$0xf]
        %v1693 = vld [vmem:[%s11 + $0xc] sm:$0xf]
        %v1694 = vld [vmem:[%s12] sm:$0x1]
        %v1696 = vlaneseq
        %v1697 = vshrl.u32 %v1696, 7
        %v1698 = vsub.s32 0, %v1697
        %v1699 = vrot.slane %v1694, %v1698
        %v1705 = vunpack.c.l.b16 %v1690
        %v1706 = vunpack.c.l.b16 %v1691
        %v1707 = vunpack.c.l.b16 %v1692
        %v1708 = vunpack.c.l.b16 %v1693
        %v1709 = vpack.c.b16 %v1706, %v1705
        %v1710 = vpack.c.b16 %v1708, %v1707
        %v1714 = vsel %vm1660, %v1689, 0
        %1716 = vmatprep.subr.bf16.mxu0 0
        %1717 = vmatpush1.bf16.msra.mxu0 0
        %1718 = vmatprep.subr.bf16.mxu0 0
        %1719 = vmatpush1.bf16.msra.mxu0 0
        %1720 = vmatprep.subr.bf16.mxu0 0
        %1721 = vmatpush1.bf16.msra.mxu0 0
        %1722 = vmatprep.subr.bf16.mxu0 0
        %1723 = vmatpush1.bf16.msra.mxu0 0
        %1724 = vmatprep.subr.bf16.mxu0 0
        %1725 = vmatpush1.bf16.msra.mxu0 0
        %1726 = vmatprep.subr.bf16.mxu0 0
        %1727 = vmatpush1.bf16.msra.mxu0 0
        %1728 = vmatprep.subr.bf16.mxu0 0
        %1729 = vmatpush1.bf16.msra.mxu0 %v1710
        %1730 = vmatprep.subr.bf16.mxu0 0
        %1731 = vmatpush1.bf16.msra.mxu0 %v1709
        %1732 = vmatprep.subr.bf16.mxu0 0
        %1733 = vmatpush2.bf16.msra.mxu0 0
        %1734 = vmatprep.subr.bf16.mxu0 0
        %1735 = vmatpush2.bf16.msra.mxu0 0
        %1736 = vmatprep.subr.bf16.mxu0 0
        %1737 = vmatpush2.bf16.msra.mxu0 0
        %1738 = vmatprep.subr.bf16.mxu0 0
        %1739 = vmatpush2.bf16.msra.mxu0 0
        %1740 = vmatprep.subr.bf16.mxu0 0
        %1741 = vmatpush2.bf16.msra.mxu0 0
        %1742 = vmatprep.subr.bf16.mxu0 0
        %1743 = vmatpush2.bf16.msra.mxu0 0
        %1744 = vmatprep.subr.bf16.mxu0 0
        %1745 = vmatpush2.bf16.msra.mxu0 0
        %1746 = vmatprep.subr.bf16.mxu0 0
        %1747 = vmatpush2.bf16.msra.mxu0 0
        %1748 = vmatprep.mubr.bf16.mxu0 0
        %1749 = vmatmul.mubr.bf16.gmra.mxu0 %v1714
        %v1750 = vpop.f32.mrf.mxu0
        %v1751 = vadd.f32 %v1699, %v1750
        %v1752 = vpop.f32.mrf.mxu0
        %v1753 = vpop.f32.mrf.mxu0
        %v1754 = vpop.f32.mrf.mxu0
        %1755 = vdwg.mxu0
        %v1756 = vmul.f32 %v1751, %v1751
        %v1757 = vmul.f32 %v1751, %v1756
        %v1758 = vmul.f32 %v1757, 0.044715
        %v1759 = vadd.f32 %v1751, %v1758
        %v1760 = vmul.f32 %v1759, 0.7978846
        %v1761 = vtanh.pop %v1760
        %v1762 = vadd.f32 %v1761, 1.0
        %v1763 = vmul.f32 %v1762, 0.5
        %v1764 = vmul.f32 %v1751, %v1763
        %v1765 = vpack.c.bf16 %v1764, %v1764
        %v1766 = vld [vmem:[%s13] sm:$0xf]
        %v1767 = vld [vmem:[%s13 + $0x4] sm:$0xf]
        %v1768 = vld [vmem:[%s13 + $0x8] sm:$0xf]
        %v1769 = vld [vmem:[%s13 + $0xc] sm:$0xf]
        %v1770 = vld [vmem:[%s13 + $0x10] sm:$0xf]
        %v1771 = vld [vmem:[%s13 + $0x14] sm:$0xf]
        %v1772 = vld [vmem:[%s13 + $0x18] sm:$0xf]
        %v1773 = vld [vmem:[%s13 + $0x1c] sm:$0xf]
        %v1774 = vld [vmem:[%s13 + $0x20] sm:$0xf]
        %v1775 = vld [vmem:[%s13 + $0x24] sm:$0xf]
        %v1776 = vld [vmem:[%s13 + $0x28] sm:$0xf]
        %v1777 = vld [vmem:[%s13 + $0x2c] sm:$0xf]
        %v1778 = vld [vmem:[%s13 + $0x30] sm:$0xf]
        %v1779 = vld [vmem:[%s13 + $0x34] sm:$0xf]
        %v1780 = vld [vmem:[%s13 + $0x38] sm:$0xf]
        %v1781 = vld [vmem:[%s13 + $0x3c] sm:$0xf]
        %v1798 = vunpack.c.l.b16 %v1766
        %v1799 = vunpack.c.l.b16 %v1767
        %v1800 = vunpack.c.l.b16 %v1768
        %v1801 = vunpack.c.l.b16 %v1769
        %v1802 = vunpack.c.l.b16 %v1770
        %v1803 = vunpack.c.l.b16 %v1771
        %v1804 = vunpack.c.l.b16 %v1772
        %v1805 = vunpack.c.l.b16 %v1773
        %v1806 = vunpack.c.l.b16 %v1774
        %v1807 = vunpack.c.l.b16 %v1775
        %v1808 = vunpack.c.l.b16 %v1776
        %v1809 = vunpack.c.l.b16 %v1777
        %v1810 = vunpack.c.l.b16 %v1778
        %v1811 = vunpack.c.l.b16 %v1779
        %v1812 = vunpack.c.l.b16 %v1780
        %v1813 = vunpack.c.l.b16 %v1781
        %v1814 = vpack.c.b16 %v1799, %v1798
        %v1815 = vpack.c.b16 %v1801, %v1800
        %v1816 = vpack.c.b16 %v1803, %v1802
        %v1817 = vpack.c.b16 %v1805, %v1804
        %v1818 = vpack.c.b16 %v1807, %v1806
        %v1819 = vpack.c.b16 %v1809, %v1808
        %v1820 = vpack.c.b16 %v1811, %v1810
        %v1821 = vpack.c.b16 %v1813, %v1812
        %1830 = vmatprep.subr.bf16.mxu0 0
        %1831 = vmatpush1.bf16.msra.mxu0 %v1821
        %1832 = vmatprep.subr.bf16.mxu0 0
        %1833 = vmatpush1.bf16.msra.mxu0 %v1820
        %1834 = vmatprep.subr.bf16.mxu0 0
        %1835 = vmatpush1.bf16.msra.mxu0 %v1819
        %1836 = vmatprep.subr.bf16.mxu0 0
        %1837 = vmatpush1.bf16.msra.mxu0 %v1818
        %1838 = vmatprep.subr.bf16.mxu0 0
        %1839 = vmatpush1.bf16.msra.mxu0 %v1817
        %1840 = vmatprep.subr.bf16.mxu0 0
        %1841 = vmatpush1.bf16.msra.mxu0 %v1816
        %1842 = vmatprep.subr.bf16.mxu0 0
        %1843 = vmatpush1.bf16.msra.mxu0 %v1815
        %1844 = vmatprep.subr.bf16.mxu0 0
        %1845 = vmatpush1.bf16.msra.mxu0 %v1814
        %1846 = vmatprep.subr.bf16.mxu0 0
        %1847 = vmatpush2.bf16.msra.mxu0 0
        %1848 = vmatprep.subr.bf16.mxu0 0
        %1849 = vmatpush2.bf16.msra.mxu0 0
        %1850 = vmatprep.subr.bf16.mxu0 0
        %1851 = vmatpush2.bf16.msra.mxu0 0
        %1852 = vmatprep.subr.bf16.mxu0 0
        %1853 = vmatpush2.bf16.msra.mxu0 0
        %1854 = vmatprep.subr.bf16.mxu0 0
        %1855 = vmatpush2.bf16.msra.mxu0 0
        %1856 = vmatprep.subr.bf16.mxu0 0
        %1857 = vmatpush2.bf16.msra.mxu0 0
        %1858 = vmatprep.subr.bf16.mxu0 0
        %1859 = vmatpush2.bf16.msra.mxu0 0
        %1860 = vmatprep.subr.bf16.mxu0 0
        %1861 = vmatpush2.bf16.msra.mxu0 0
        %1862 = vmatprep.mubr.bf16.mxu0 0
        %1863 = vmatmul.mubr.bf16.gmra.mxu0 %v1765
        %v1864 = vpop.f32.mrf.mxu0
        %v1865 = vadd.f32 0.0, %v1864
        %v1866 = vpop.f32.mrf.mxu0
        %v1867 = vpop.f32.mrf.mxu0
        %v1868 = vpop.f32.mrf.mxu0
        %1869 = vdwg.mxu0
        %v1870 = vadd.f32 %v1657, %v1865
        %v1871 = vld [vmem:[%s14] sm:$0x1]
        %v1873 = vlaneseq
        %v1874 = vshrl.u32 %v1873, 7
        %v1875 = vsub.s32 0, %v1874
        %v1876 = vrot.slane %v1871, %v1875
        %v1878 = vadd.f32 %v1870, %v1876
        %1879 = vst.msk [vmem:[%s562] sm:$0xff] %vm1660, %v1878
        %v1880 = vsel %vm968, %v1239, 0.0
        %v1881 = vsel %vm968, %v1240, 0.0
        %v1882 = vadd.f32 %v1880, %v1881
        %v1883 = vsel %vm968, %v1241, 0.0
        %v1884 = vadd.f32 %v1882, %v1883
        %v1885 = vsel %vm968, %v1242, 0.0
        %v1886 = vadd.f32 %v1884, %v1885
        %v1887 = vrcp.pop 4.0
        %v1888 = vmul.f32 %v1886, %v1887
        %1889 = vst.msk [vmem:[%s569] sm:$0xff] %vm968, %v1888
        // Predicated region
        $region85: #{syntactic_transformer_forward.3} parent=79 // pred_check
          %p1890 = pneg %p583
        $region86: #{syntactic_transformer_forward.3} parent=79 // pred_check_branch
          %1892 = sbr.rel (%p1890) target = $region88
        $region87: #{syntactic_transformer_forward.3} parent=79 // pred_region
          %v1893 = vld [vmem:[#allocation6] sm:$0x1]
          %vm1894 = vcmask 122880
          %1895 = vst.msk [vmem:[%s575] sm:$0x1] %vm1894, %v1893
        $region88: #{syntactic_transformer_forward.3} parent=79 // pred_fallthru
          _
        %s1896 = sand.u32 %s378, 1
        %s1897 = scalar_lea.sflag [#allocation9], %s1896
        %s1898 = sand.u32 %s378, 1
        %s1899 = smul.addr %s1898, 8
        %s1900 = scalar_lea.vmem [#allocation8], %s1899
        %s1901 = sand.u32 %s36, 1
        %s1902 = scalar_lea.sflag [#allocation11], %s1901
        %s1903 = sand.u32 %s406, 1
        %s1904 = smul.addr %s1903, 8
        %s1905 = scalar_lea.vmem [#allocation10], %s1904
        %s1906 = sand.u32 %s36, 1
        %s1907 = scalar_lea.sflag [#allocation11], %s1906
        %s1908 = sand.u32 %s432, 1
        %s1909 = scalar_lea.vmem [#allocation12], %s1908
        // Predicated region
        $region89: #{syntactic_transformer_forward.3} parent=79 // pred_check
          %p1910 = pneg %p388
        $region90: #{syntactic_transformer_forward.3} parent=79 // pred_check_branch
          %1912 = sbr.rel (%p1910) target = $region92
        $region91: #{syntactic_transformer_forward.3} parent=79 // pred_region
          %s1914 = ssub.s32 128, 128
          %1915 = vsyncadd %s1897, %s1914
          %s1916 = smul.addr %s40, 2
          %s1917 = sadd.s32 %s41, %s1916
          %s1918 = smul.addr %s1917, 128
          %s1919 = scalar_lea.hbm %s15, %s1918
          %s1921 = sshll.u32 %s1900, 4
          %s1922 = int_to_ptr.vmem [resolvable:$true] %s1921
          %1924 = dma.vmem_to_hbm [thread:$0]  %s1922, 128, %s1919, %s1897
        $region92: #{syntactic_transformer_forward.3} parent=79 // pred_fallthru
          _
        // Predicated region
        $region93: #{syntactic_transformer_forward.3} parent=79 // pred_check
          %p1925 = pneg %p416
        $region94: #{syntactic_transformer_forward.3} parent=79 // pred_check_branch
          %1927 = sbr.rel (%p1925) target = $region96
        $region95: #{syntactic_transformer_forward.3} parent=79 // pred_region
          %s1929 = ssub.s32 128, 128
          %1930 = vsyncadd %s1902, %s1929
          %s1931 = smul.addr %s40, 2
          %s1932 = sadd.s32 %s41, %s1931
          %s1933 = smul.addr %s1932, 128
          %s1934 = scalar_lea.hbm %s16, %s1933
          %s1936 = sshll.u32 %s1905, 4
          %s1937 = int_to_ptr.vmem [resolvable:$true] %s1936
          %1939 = dma.vmem_to_hbm [thread:$0]  %s1937, 128, %s1934, %s1902
        $region96: #{syntactic_transformer_forward.3} parent=79 // pred_fallthru
          _
        // Predicated region
        $region97: #{syntactic_transformer_forward.3} parent=79 // pred_check
          %p1940 = pneg %p442
        $region98: #{syntactic_transformer_forward.3} parent=79 // pred_check_branch
          %1942 = sbr.rel (%p1940) target = $region100
        $region99: #{syntactic_transformer_forward.3} parent=79 // pred_region
          %s1944 = ssub.s32 16, 16
          %1945 = vsyncadd %s1907, %s1944
          %s1946 = smul.addr %s40, 16
          %s1947 = scalar_lea.hbm %s17, %s1946
          %s1949 = sshll.u32 %s1909, 4
          %s1950 = int_to_ptr.vmem [resolvable:$true] %s1949
          %1952 = dma.vmem_to_hbm [thread:$0]  %s1950, 16, %s1947, %s1907
        $region100: #{syntactic_transformer_forward.3} parent=79 // pred_fallthru
          _
      $region80: #{syntactic_transformer_forward.3} parent=5 // pred_fallthru
        _
      %p1953 = scmp.le.s32.totalorder 2, %s31
      // Predicated region
      $region101: #{syntactic_transformer_forward.3} parent=5 // pred_check
        %p1954 = pneg %p1953
      $region102: #{syntactic_transformer_forward.3} parent=5 // pred_check_branch
        %1956 = sbr.rel (%p1954) target = $region104
      $region103: #{syntactic_transformer_forward.3} parent=5 // pred_region
        %s1957 = ssub.s32 %s31, 2
        // Predicated region
        $region105: #{syntactic_transformer_forward.3} parent=103 // pred_check
          %p1958 = pneg %p394
        $region106: #{syntactic_transformer_forward.3} parent=103 // pred_check_branch
          %1960 = sbr.rel (%p1958) target = $region108
        $region107: #{syntactic_transformer_forward.3} parent=103 // pred_region
          %s1961 = sand.u32 %s379, 1
          %s1962 = scalar_lea.sflag [#allocation9], %s1961
          %s1963 = sand.u32 %s379, 1
          %s1964 = smul.addr %s1963, 8
          %s1965 = scalar_lea.vmem [#allocation8], %s1964
          %1966 = dma.done %s1962, 128
        $region108: #{syntactic_transformer_forward.3} parent=103 // pred_fallthru
          _
        // Predicated region
        $region109: #{syntactic_transformer_forward.3} parent=103 // pred_check
          %p1967 = pneg %p422
        $region110: #{syntactic_transformer_forward.3} parent=103 // pred_check_branch
          %1969 = sbr.rel (%p1967) target = $region112
        $region111: #{syntactic_transformer_forward.3} parent=103 // pred_region
          %s1970 = sand.u32 %s37, 1
          %s1971 = scalar_lea.sflag [#allocation11], %s1970
          %s1972 = sand.u32 %s407, 1
          %s1973 = smul.addr %s1972, 8
          %s1974 = scalar_lea.vmem [#allocation10], %s1973
          %1975 = dma.done %s1971, 128
        $region112: #{syntactic_transformer_forward.3} parent=103 // pred_fallthru
          _
        // Predicated region
        $region113: #{syntactic_transformer_forward.3} parent=103 // pred_check
          %p1976 = pneg %p448
        $region114: #{syntactic_transformer_forward.3} parent=103 // pred_check_branch
          %1978 = sbr.rel (%p1976) target = $region116
        $region115: #{syntactic_transformer_forward.3} parent=103 // pred_region
          %s1979 = sand.u32 %s37, 1
          %s1980 = scalar_lea.sflag [#allocation11], %s1979
          %s1981 = sand.u32 %s433, 1
          %s1982 = scalar_lea.vmem [#allocation12], %s1981
          %1983 = dma.done %s1980, 16
        $region116: #{syntactic_transformer_forward.3} parent=103 // pred_fallthru
          _
      $region104: #{syntactic_transformer_forward.3} parent=5 // pred_fallthru
        _
    $region6: #{syntactic_transformer_forward.3} parent=1 // loop_footer
      %s35 = sadd.s32 1, %s31
    $region7: #{syntactic_transformer_forward.3} parent=1 // loop_footer_branch
      %30 = sbr.rel target = $region3
    $region8: #{syntactic_transformer_forward.3} parent=1 // loop_exit
      _
    %1984 = vsyncpa [#allocation9], 1
    %s1985 = scalar_lea.sflag [#allocation9], 1
    %1986 = vsyncpa %s1985, 1
    %1987 = vsyncpa [#allocation11], 1
    %s1988 = scalar_lea.sflag [#allocation11], 1
    %1989 = vsyncpa %s1988, 1

</llo_original>
